<compile_context>
chip_gen: v7x
topology: tpu7x:2x2x1
jax: 0.10.0
libtpu: 0.0.40
codegen_flags: <defaults>
</compile_context>

<pallas_src>
import numpy as np

import jax
import jax.numpy as jnp
from jax.experimental import pallas as pl
from jax.experimental.pallas import tpu as pltpu

LATENT_DIM = 100
DEC_HID = 256
DEC_OUT = 180
NUM_GROUPS = 4
H = W = 16
M_FULL = H * W            # 256 flattened spatial positions (lane dense)
M_DOWN = 64               # 8x8 after the stride-2 conv
C1P = 16                  # conv1 output channels padded 12 -> 16 (sublane aligned)
EPS = 1e-5
_INV_SQRT2 = 0.7071067811865476


# -----------------------------------------------------------------------------
# In-kernel helpers
# -----------------------------------------------------------------------------
def _gelu(x):
    # Matches torch.nn.GELU() default (erf-based).
    return 0.5 * x * (1.0 + jax.lax.erf(x * _INV_SQRT2))


def _layernorm_row(x, gamma, beta):
    mu = jnp.mean(x, axis=-1, keepdims=True)
    var = jnp.mean((x - mu) * (x - mu), axis=-1, keepdims=True)
    return (x - mu) * jax.lax.rsqrt(var + EPS) * gamma + beta


def _group_norm_relu(a, pgrp, gamma, beta):
    """GroupNorm (one-pass stats) + ReLU on a (C, M) activation.

    pgrp is a constant (C, C) block-diagonal matrix with entries 1/(C_g * M)
    inside each group, so one matmul against the per-channel [sum x, sum x^2]
    columns yields the per-channel broadcast of the group mean / E[x^2].
    """
    s1 = jnp.sum(a, axis=1, keepdims=True)                      # (C,1) sum x
    s2 = jnp.sum(a * a, axis=1, keepdims=True)                  # (C,1) sum x^2
    stats = jnp.dot(pgrp, jnp.concatenate([s1, s2], axis=1),
                    preferred_element_type=jnp.float32)          # (C,2)
    mean_c = stats[:, 0:1]
    var_c = stats[:, 1:2] - mean_c * mean_c
    y = (a - mean_c) * jax.lax.rsqrt(var_c + EPS) * gamma + beta
    return jnp.maximum(y, 0.0)


def _stack_taps(a, ksize, mask_ref, out_ref, cin):
    """Write the K*K rolled+masked copies of `a` (cin, 256) into `out_ref`
    ((K*K)*cin, 256): row block k holds, for every output position, the input
    pixel needed by kernel tap k (out-of-image contributions zeroed)."""
    pad = (ksize - 1) // 2
    for k in range(ksize * ksize):
        kh, kw = divmod(k, ksize)
        s = (kh - pad) * W + (kw - pad)
        if s == 0:
            tap = a                                   # centre tap: mask is all-ones
        else:
            tap = pltpu.roll(a, (-s) % M_FULL, axis=1) * mask_ref[k]
        out_ref[k * cin:(k + 1) * cin, :] = tap


# -----------------------------------------------------------------------------
# The fused forward kernel (block_b batch elements per grid step)
# -----------------------------------------------------------------------------
def _make_kernel(block_b):
    def kernel(x_ref,
               w1_ref, cp1_ref, pg1_ref, m1_ref,
               w2_ref, cp2_ref, pg2_ref, m2_ref,
               w3_ref, cp3_ref, pg3_ref, dsel_ref,
               fc1w_ref, headv_ref, fc2w_ref, fc3w_ref, decb_ref,
               lat_ref, rec_ref,
               t1_ref, t2_ref, t3_ref):

        pool64 = jnp.full((M_DOWN, 1), 1.0 / M_DOWN, jnp.float32)
        pooled_cols = []

        for e in range(block_b):
            x0 = x_ref[e]                                              # (1, 256)

            # ---- Conv2d(1,12,5,pad=2) + GroupNorm(4,12) + ReLU ---------------
            _stack_taps(x0, 5, m1_ref, t1_ref, 1)                      # (25,256)
            acc1 = jnp.dot(w1_ref[...], t1_ref[...],
                           preferred_element_type=jnp.float32)          # (16,256)
            a1 = _group_norm_relu(acc1 + cp1_ref[:, 0:1], pg1_ref[...],
                                  cp1_ref[:, 1:2], cp1_ref[:, 2:3])

            # ---- Conv2d(12,24,3,pad=1) + GroupNorm(4,24) + ReLU --------------
            _stack_taps(a1, 3, m2_ref, t2_ref, C1P)                     # (144,256)
            acc2 = jnp.dot(w2_ref[...], t2_ref[...],
                           preferred_element_type=jnp.float32)          # (24,256)
            a2 = _group_norm_relu(acc2 + cp2_ref[:, 0:1], pg2_ref[...],
                                  cp2_ref[:, 1:2], cp2_ref[:, 2:3])

            # Dropout(p=0.1): identity in eval/inference mode.
            # TODO(synk): training-mode stochastic dropout mask not implemented.

            # ---- Conv2d(24,100,3,stride=2,pad=1) + GroupNorm(4,100) + ReLU ---
            # Stride-2 selection folded into the tap stack: taps @ dsel first.
            _stack_taps(a2, 3, m2_ref, t3_ref, 24)                      # (216,256)
            t3ds = jnp.dot(t3_ref[...], dsel_ref[...],
                           preferred_element_type=jnp.float32)          # (216,64)
            acc3 = jnp.dot(w3_ref[...], t3ds,
                           preferred_element_type=jnp.float32) + cp3_ref[:, 0:1]
            a3 = _group_norm_relu(acc3, pg3_ref[...],
                                  cp3_ref[:, 1:2], cp3_ref[:, 2:3])     # (100,64)

            # ---- AdaptiveAvgPool2d((1,1)): MXU reduction, no big transpose ---
            pooled_cols.append(jnp.dot(a3, pool64,
                                       preferred_element_type=jnp.float32))  # (100,1)

        if block_b == 1:
            pooled_t = pooled_cols[0]                                   # (100,1)
        else:
            pooled_t = jnp.concatenate(pooled_cols, axis=1)             # (100,Bt)
        pooled = jnp.transpose(pooled_t)                                # (Bt,100)

        # ---- Encoder tail: Linear(100,100) + LayerNorm + GELU (batched) -----
        h = jnp.dot(pooled, fc1w_ref[...],
                    preferred_element_type=jnp.float32) + headv_ref[0:1, :]
        lat = _gelu(_layernorm_row(h, headv_ref[1:2, :], headv_ref[2:3, :]))

        # ---- Decoder: LayerNorm -> Linear(100,256) -> GELU -> Linear(256,180)
        d = _layernorm_row(lat, headv_ref[3:4, :], headv_ref[4:5, :])
        h2 = _gelu(jnp.dot(d, fc2w_ref[...],
                           preferred_element_type=jnp.float32) + decb_ref[0:1, :])
        rec = jnp.dot(h2, fc3w_ref[...],
                      preferred_element_type=jnp.float32) + decb_ref[1:2, :DEC_OUT]

        for e in range(block_b):
            lat_ref[e] = lat[e:e + 1, :]
            rec_ref[e] = rec[e:e + 1, :]

    return kernel


# -----------------------------------------------------------------------------
# Host-side constant builders (run once, outside the per-call hot path)
# -----------------------------------------------------------------------------
def _tap_masks(ksize):
    """(K*K, 1, 256) float masks: 1 where the shifted pixel is inside the image."""
    pad = (ksize - 1) // 2
    ys, xs = np.meshgrid(np.arange(H), np.arange(W), indexing="ij")
    masks = np.zeros((ksize * ksize, 1, M_FULL), np.float32)
    for kh in range(ksize):
        for kw in range(ksize):
            dy, dx = kh - pad, kw - pad
            valid = ((ys + dy >= 0) & (ys + dy < H) &
                     (xs + dx >= 0) & (xs + dx < W))
            masks[kh * ksize + kw, 0, :] = valid.reshape(-1).astype(np.float32)
    return masks


def _group_proj(channels, groups, m_spatial, padded=None):
    """(Cpad, Cpad) block-diagonal matrix with 1/(C_g * M) inside each group."""
    padded = channels if padded is None else padded
    cg = channels // groups
    p = np.zeros((padded, padded), np.float32)
    for g in range(groups):
        p[g * cg:(g + 1) * cg, g * cg:(g + 1) * cg] = 1.0 / (cg * m_spatial)
    return p


def _downsample_matrix():
    """(256, 64) one-hot matrix selecting the stride-2 output positions."""
    d = np.zeros((M_FULL, M_DOWN), np.float32)
    for yo in range(8):
        for xo in range(8):
            d[(2 * yo) * W + 2 * xo, yo * 8 + xo] = 1.0
    return d


# -----------------------------------------------------------------------------
# Parameters (PyTorch-layout shapes) and conversion to kernel layout
# -----------------------------------------------------------------------------
def init_params(key, latent_dim=LATENT_DIM):
    ks = jax.random.split(key, 12)
    p = {}
    p["conv1_w"] = 0.1 * jax.random.normal(ks[0], (12, 1, 5, 5), jnp.float32)
    p["conv1_b"] = 0.05 * jax.random.normal(ks[1], (12,), jnp.float32)
    p["gn1_g"] = jnp.ones((12,), jnp.float32)
    p["gn1_b"] = jnp.zeros((12,), jnp.float32)

    p["conv2_w"] = 0.1 * jax.random.normal(ks[2], (24, 12, 3, 3), jnp.float32)
    p["conv2_b"] = 0.05 * jax.random.normal(ks[3], (24,), jnp.float32)
    p["gn2_g"] = jnp.ones((24,), jnp.float32)
    p["gn2_b"] = jnp.zeros((24,), jnp.float32)

    p["conv3_w"] = 0.1 * jax.random.normal(ks[4], (latent_dim, 24, 3, 3), jnp.float32)
    p["conv3_b"] = 0.05 * jax.random.normal(ks[5], (latent_dim,), jnp.float32)
    p["gn3_g"] = jnp.ones((latent_dim,), jnp.float32)
    p["gn3_b"] = jnp.zeros((latent_dim,), jnp.float32)

    p["fc1_w"] = 0.1 * jax.random.normal(ks[6], (latent_dim, latent_dim), jnp.float32)
    p["fc1_b"] = 0.05 * jax.random.normal(ks[7], (latent_dim,), jnp.float32)
    p["ln1_g"] = jnp.ones((latent_dim,), jnp.float32)
    p["ln1_b"] = jnp.zeros((latent_dim,), jnp.float32)

    p["ln2_g"] = jnp.ones((latent_dim,), jnp.float32)
    p["ln2_b"] = jnp.zeros((latent_dim,), jnp.float32)
    p["fc2_w"] = 0.1 * jax.random.normal(ks[8], (DEC_HID, latent_dim), jnp.float32)
    p["fc2_b"] = 0.05 * jax.random.normal(ks[9], (DEC_HID,), jnp.float32)
    p["fc3_w"] = 0.1 * jax.random.normal(ks[10], (DEC_OUT, DEC_HID), jnp.float32)
    p["fc3_b"] = 0.05 * jax.random.normal(ks[11], (DEC_OUT,), jnp.float32)
    return p


def prepare_params(p):
    """Permute / pack PyTorch-layout params into the kernel layout (done once)."""
    f = lambda a: np.asarray(a, np.float32)

    # conv1: (12,1,5,5) -> (16, 25); column k = kh*5+kw matches tap-stack row k.
    w1 = f(p["conv1_w"]).transpose(0, 2, 3, 1).reshape(12, 25)
    w1r = np.zeros((C1P, 25), np.float32)
    w1r[:12] = w1
    cp1 = np.zeros((C1P, 3), np.float32)
    cp1[:12, 0] = f(p["conv1_b"])
    cp1[:12, 1] = f(p["gn1_g"])
    cp1[:12, 2] = f(p["gn1_b"])

    # conv2: (24,12,3,3) -> (24, 9*16); column k*16+ci matches tap-stack rows.
    w2 = f(p["conv2_w"]).transpose(0, 2, 3, 1)                    # (24,3,3,12)
    w2p = np.zeros((24, 3, 3, C1P), np.float32)
    w2p[..., :12] = w2
    w2r = w2p.reshape(24, 9 * C1P)
    cp2 = np.stack([f(p["conv2_b"]), f(p["gn2_g"]), f(p["gn2_b"])], axis=1)

    # conv3: (100,24,3,3) -> (100, 216); column k*24+ci matches tap-stack rows.
    w3r = f(p["conv3_w"]).transpose(0, 2, 3, 1).reshape(LATENT_DIM, 9 * 24)
    cp3 = np.stack([f(p["conv3_b"]), f(p["gn3_g"]), f(p["gn3_b"])], axis=1)

    # Packed head vectors / decoder biases.
    headv = np.stack([f(p["fc1_b"]), f(p["ln1_g"]), f(p["ln1_b"]),
                      f(p["ln2_g"]), f(p["ln2_b"])], axis=0)      # (5, 100)
    decb = np.zeros((2, DEC_HID), np.float32)
    decb[0] = f(p["fc2_b"])
    decb[1, :DEC_OUT] = f(p["fc3_b"])

    consts = (
        jnp.asarray(w1r), jnp.asarray(cp1),
        jnp.asarray(_group_proj(12, NUM_GROUPS, M_FULL, padded=C1P)),
        jnp.asarray(_tap_masks(5)),
        jnp.asarray(w2r), jnp.asarray(cp2),
        jnp.asarray(_group_proj(24, NUM_GROUPS, M_FULL)),
        jnp.asarray(_tap_masks(3)),
        jnp.asarray(w3r), jnp.asarray(cp3),
        jnp.asarray(_group_proj(LATENT_DIM, NUM_GROUPS, M_DOWN)),
        jnp.asarray(_downsample_matrix()),
        # Linear weights stored as (in, out) = W.T
        jnp.asarray(f(p["fc1_w"]).T), jnp.asarray(headv),
        jnp.asarray(f(p["fc2_w"]).T), jnp.asarray(f(p["fc3_w"]).T),
        jnp.asarray(decb),
    )
    return consts


# -----------------------------------------------------------------------------
# Forward pass wrapper (one pallas_call for the whole model)
# -----------------------------------------------------------------------------
def _const_spec(shape):
    zeros = (0,) * len(shape)
    return pl.BlockSpec(shape, lambda i, _z=zeros: _z)


def _choose_block_b(batch, max_bb=8):
    """Batch elements per grid step: amortize per-step overhead but keep the
    grid length even when possible so both v7x TensorCores stay busy."""
    best = 1
    for bb in range(1, min(batch, max_bb) + 1):
        if batch % bb == 0 and (batch // bb) % 2 == 0:
            best = bb
    if best == 1 and batch % 2 != 0:
        for bb in range(1, min(batch, max_bb) + 1):
            if batch % bb == 0:
                best = bb
    return best


@jax.jit
def forward(x_nchw, consts):
    B = x_nchw.shape[0]
    block_b = _choose_block_b(B)
    n_blocks = B // block_b
    x3d = x_nchw.astype(jnp.float32).reshape(B, 1, M_FULL)        # (B, 1, 256)

    in_specs = [pl.BlockSpec((block_b, 1, M_FULL), lambda i: (i, 0, 0))]
    in_specs += [_const_spec(c.shape) for c in consts]

    lat3, rec3 = pl.pallas_call(
        _make_kernel(block_b),
        out_shape=(jax.ShapeDtypeStruct((B, 1, LATENT_DIM), jnp.float32),
                   jax.ShapeDtypeStruct((B, 1, DEC_OUT), jnp.float32)),
        grid=(n_blocks,),
        in_specs=in_specs,
        out_specs=(pl.BlockSpec((block_b, 1, LATENT_DIM), lambda i: (i, 0, 0)),
                   pl.BlockSpec((block_b, 1, DEC_OUT), lambda i: (i, 0, 0))),
        scratch_shapes=[pltpu.VMEM((25, M_FULL), jnp.float32),        # conv1 taps
                        pltpu.VMEM((9 * C1P, M_FULL), jnp.float32),   # conv2 taps
                        pltpu.VMEM((9 * 24, M_FULL), jnp.float32)],   # conv3 taps
        compiler_params=pltpu.CompilerParams(
            dimension_semantics=("parallel",)),
    )(x3d, *consts)

    return rec3.reshape(B, DEC_OUT), lat3.reshape(B, LATENT_DIM)


# -----------------------------------------------------------------------------
# Pure-JAX reference (PyTorch semantics) for correctness verification
# -----------------------------------------------------------------------------
def _reference_forward(x_nchw, p):
    x = x_nchw.astype(jnp.float32)

    def conv(x, w, b, stride, pad):
        out = jax.lax.conv_general_dilated(
            x, w, window_strides=(stride, stride),
            padding=((pad, pad), (pad, pad)),
            dimension_numbers=("NCHW", "OIHW", "NCHW"))
        return out + b.reshape(1, -1, 1, 1)

    def gn(x, gamma, beta, groups):
        n, c, h, w = x.shape
        xg = x.reshape(n, groups, c // groups, h, w)
        mu = jnp.mean(xg, axis=(2, 3, 4), keepdims=True)
        var = jnp.mean((xg - mu) ** 2, axis=(2, 3, 4), keepdims=True)
        xn = ((xg - mu) / jnp.sqrt(var + EPS)).reshape(n, c, h, w)
        return xn * gamma.reshape(1, -1, 1, 1) + beta.reshape(1, -1, 1, 1)

    def ln(x, g, b):
        mu = jnp.mean(x, axis=-1, keepdims=True)
        var = jnp.mean((x - mu) ** 2, axis=-1, keepdims=True)
        return (x - mu) / jnp.sqrt(var + EPS) * g + b

    h1 = jax.nn.relu(gn(conv(x, p["conv1_w"], p["conv1_b"], 1, 2),
                        p["gn1_g"], p["gn1_b"], NUM_GROUPS))
    h2 = jax.nn.relu(gn(conv(h1, p["conv2_w"], p["conv2_b"], 1, 1),
                        p["gn2_g"], p["gn2_b"], NUM_GROUPS))
    h3 = jax.nn.relu(gn(conv(h2, p["conv3_w"], p["conv3_b"], 2, 1),
                        p["gn3_g"], p["gn3_b"], NUM_GROUPS))
    pooled = jnp.mean(h3, axis=(2, 3))
    z = pooled @ p["fc1_w"].T + p["fc1_b"]
    lat = jax.nn.gelu(ln(z, p["ln1_g"], p["ln1_b"]), approximate=False)
    d = ln(lat, p["ln2_g"], p["ln2_b"])
    hh = jax.nn.gelu(d @ p["fc2_w"].T + p["fc2_b"], approximate=False)
    rec = hh @ p["fc3_w"].T + p["fc3_b"]
    return rec, lat


if __name__ == "__main__":
    key = jax.random.PRNGKey(0)
    k_in, k_par = jax.random.split(key)
    # PyTorch conv input is NCHW with 1 channel: (batch=2, 1, 16, 16)
    x = jax.random.normal(k_in, (2, 1, 16, 16), jnp.float32)
    params = init_params(k_par)
    consts = prepare_params(params)

    recon, latents = forward(x, consts)
    jax.block_until_ready((recon, latents))

    assert recon.shape == (2, DEC_OUT), recon.shape
    assert latents.shape == (2, LATENT_DIM), latents.shape
    assert recon.dtype == jnp.float32 and latents.dtype == jnp.float32

    rec_ref, lat_ref_arr = _reference_forward(x, params)
    err_r = float(jnp.max(jnp.abs(recon - rec_ref)))
    err_l = float(jnp.max(jnp.abs(latents - lat_ref_arr)))
    assert err_r < 2e-3, f"recon mismatch vs reference: {err_r}"
    assert err_l < 2e-3, f"latent mismatch vs reference: {err_l}"

    print("KERNEL_OK")
</pallas_src>

<mosaic_0001>
module attributes {stable_mosaic.version = 11 : i64} {
  func.func @kernel(%arg0: i32, %arg1: memref<1x1x256xf32, #tpu.memory_space<vmem>>, %arg2: memref<16x25xf32, #tpu.memory_space<vmem>>, %arg3: memref<16x3xf32, #tpu.memory_space<vmem>>, %arg4: memref<16x16xf32, #tpu.memory_space<vmem>>, %arg5: memref<25x1x256xf32, #tpu.memory_space<vmem>>, %arg6: memref<24x144xf32, #tpu.memory_space<vmem>>, %arg7: memref<24x3xf32, #tpu.memory_space<vmem>>, %arg8: memref<24x24xf32, #tpu.memory_space<vmem>>, %arg9: memref<9x1x256xf32, #tpu.memory_space<vmem>>, %arg10: memref<100x216xf32, #tpu.memory_space<vmem>>, %arg11: memref<100x3xf32, #tpu.memory_space<vmem>>, %arg12: memref<100x100xf32, #tpu.memory_space<vmem>>, %arg13: memref<256x64xf32, #tpu.memory_space<vmem>>, %arg14: memref<100x100xf32, #tpu.memory_space<vmem>>, %arg15: memref<5x100xf32, #tpu.memory_space<vmem>>, %arg16: memref<100x256xf32, #tpu.memory_space<vmem>>, %arg17: memref<256x180xf32, #tpu.memory_space<vmem>>, %arg18: memref<2x256xf32, #tpu.memory_space<vmem>>, %arg19: memref<1x1x100xf32, #tpu.memory_space<vmem>>, %arg20: memref<1x1x180xf32, #tpu.memory_space<vmem>>, %arg21: memref<25x256xf32, #tpu.memory_space<vmem>>, %arg22: memref<144x256xf32, #tpu.memory_space<vmem>>, %arg23: memref<216x256xf32, #tpu.memory_space<vmem>>) attributes {dimension_semantics = [#tpu.dimension_semantics<parallel>], iteration_bounds = array<i64: 2>, scalar_prefetch = 0 : i64, scratch_operands = 3 : i64, tpu.core_type = #tpu.core_type<tc>, window_params = [{transform_indices = @transform_0, window_bounds = array<i64: 1, 1, 256>}, {pipeline_mode = #tpu.pipeline_mode<synchronous>, transform_indices = @transform_1, window_bounds = array<i64: 16, 25>}, {pipeline_mode = #tpu.pipeline_mode<synchronous>, transform_indices = @transform_2, window_bounds = array<i64: 16, 3>}, {pipeline_mode = #tpu.pipeline_mode<synchronous>, transform_indices = @transform_3, window_bounds = array<i64: 16, 16>}, {pipeline_mode = #tpu.pipeline_mode<synchronous>, transform_indices = @transform_4, window_bounds = array<i64: 25, 1, 256>}, {pipeline_mode = #tpu.pipeline_mode<synchronous>, transform_indices = @transform_5, window_bounds = array<i64: 24, 144>}, {pipeline_mode = #tpu.pipeline_mode<synchronous>, transform_indices = @transform_6, window_bounds = array<i64: 24, 3>}, {pipeline_mode = #tpu.pipeline_mode<synchronous>, transform_indices = @transform_7, window_bounds = array<i64: 24, 24>}, {pipeline_mode = #tpu.pipeline_mode<synchronous>, transform_indices = @transform_8, window_bounds = array<i64: 9, 1, 256>}, {pipeline_mode = #tpu.pipeline_mode<synchronous>, transform_indices = @transform_9, window_bounds = array<i64: 100, 216>}, {pipeline_mode = #tpu.pipeline_mode<synchronous>, transform_indices = @transform_10, window_bounds = array<i64: 100, 3>}, {pipeline_mode = #tpu.pipeline_mode<synchronous>, transform_indices = @transform_11, window_bounds = array<i64: 100, 100>}, {pipeline_mode = #tpu.pipeline_mode<synchronous>, transform_indices = @transform_12, window_bounds = array<i64: 256, 64>}, {pipeline_mode = #tpu.pipeline_mode<synchronous>, transform_indices = @transform_13, window_bounds = array<i64: 100, 100>}, {pipeline_mode = #tpu.pipeline_mode<synchronous>, transform_indices = @transform_14, window_bounds = array<i64: 5, 100>}, {pipeline_mode = #tpu.pipeline_mode<synchronous>, transform_indices = @transform_15, window_bounds = array<i64: 100, 256>}, {pipeline_mode = #tpu.pipeline_mode<synchronous>, transform_indices = @transform_16, window_bounds = array<i64: 256, 180>}, {pipeline_mode = #tpu.pipeline_mode<synchronous>, transform_indices = @transform_17, window_bounds = array<i64: 2, 256>}, {transform_indices = @transform_18, window_bounds = array<i64: 1, 1, 100>}, {transform_indices = @transform_19, window_bounds = array<i64: 1, 1, 180>}]} {
    %cst = arith.constant 1.562500e-02 : f32
    %0 = vector.broadcast %cst : f32 to vector<64x1xf32>
    %c0 = arith.constant 0 : index
    %c0_0 = arith.constant 0 : index
    %c0_1 = arith.constant 0 : index
    %1 = vector.load %arg1[%c0, %c0_0, %c0_1] : memref<1x1x256xf32, #tpu.memory_space<vmem>>, vector<1x1x256xf32>
    %2 = vector.shape_cast %1 : vector<1x1x256xf32> to vector<1x256xf32>
    %c34_i32 = arith.constant 34 : i32
    %3 = tpu.dynamic_rotate %2 by %c34_i32 dim 1 : vector<1x256xf32>, i32 -> vector<1x256xf32>
    %c0_2 = arith.constant 0 : index
    %c0_3 = arith.constant 0 : index
    %c0_4 = arith.constant 0 : index
    %4 = vector.load %arg5[%c0_2, %c0_3, %c0_4] : memref<25x1x256xf32, #tpu.memory_space<vmem>>, vector<1x1x256xf32>
    %5 = vector.shape_cast %4 : vector<1x1x256xf32> to vector<1x256xf32>
    %6 = arith.mulf %3, %5 : vector<1x256xf32>
    %c0_5 = arith.constant 0 : index
    %c0_6 = arith.constant 0 : index
    %7 = vector.load %arg21[%c0_5, %c0_6] : memref<25x256xf32, #tpu.memory_space<vmem>>, vector<1x256xf32>
    tpu.vector_store %arg21[%c0_5, %c0_6], %6 {strides = array<i32>} : memref<25x256xf32, #tpu.memory_space<vmem>>, vector<1x256xf32>,
    %c33_i32 = arith.constant 33 : i32
    %8 = tpu.dynamic_rotate %2 by %c33_i32 dim 1 : vector<1x256xf32>, i32 -> vector<1x256xf32>
    %c1 = arith.constant 1 : index
    %c0_7 = arith.constant 0 : index
    %c0_8 = arith.constant 0 : index
    %9 = vector.load %arg5[%c1, %c0_7, %c0_8] : memref<25x1x256xf32, #tpu.memory_space<vmem>>, vector<1x1x256xf32>
    %10 = vector.shape_cast %9 : vector<1x1x256xf32> to vector<1x256xf32>
    %11 = arith.mulf %8, %10 : vector<1x256xf32>
    %c1_9 = arith.constant 1 : index
    %c0_10 = arith.constant 0 : index
    %12 = vector.load %arg21[%c1_9, %c0_10] : memref<25x256xf32, #tpu.memory_space<vmem>>, vector<1x256xf32>
    tpu.vector_store %arg21[%c1_9, %c0_10], %11 {strides = array<i32>} : memref<25x256xf32, #tpu.memory_space<vmem>>, vector<1x256xf32>,
    %c32_i32 = arith.constant 32 : i32
    %13 = tpu.dynamic_rotate %2 by %c32_i32 dim 1 : vector<1x256xf32>, i32 -> vector<1x256xf32>
    %c2 = arith.constant 2 : index
    %c0_11 = arith.constant 0 : index
    %c0_12 = arith.constant 0 : index
    %14 = vector.load %arg5[%c2, %c0_11, %c0_12] : memref<25x1x256xf32, #tpu.memory_space<vmem>>, vector<1x1x256xf32>
    %15 = vector.shape_cast %14 : vector<1x1x256xf32> to vector<1x256xf32>
    %16 = arith.mulf %13, %15 : vector<1x256xf32>
    %c2_13 = arith.constant 2 : index
    %c0_14 = arith.constant 0 : index
    %17 = vector.load %arg21[%c2_13, %c0_14] : memref<25x256xf32, #tpu.memory_space<vmem>>, vector<1x256xf32>
    tpu.vector_store %arg21[%c2_13, %c0_14], %16 {strides = array<i32>} : memref<25x256xf32, #tpu.memory_space<vmem>>, vector<1x256xf32>,
    %c31_i32 = arith.constant 31 : i32
    %18 = tpu.dynamic_rotate %2 by %c31_i32 dim 1 : vector<1x256xf32>, i32 -> vector<1x256xf32>
    %c3 = arith.constant 3 : index
    %c0_15 = arith.constant 0 : index
    %c0_16 = arith.constant 0 : index
    %19 = vector.load %arg5[%c3, %c0_15, %c0_16] : memref<25x1x256xf32, #tpu.memory_space<vmem>>, vector<1x1x256xf32>
    %20 = vector.shape_cast %19 : vector<1x1x256xf32> to vector<1x256xf32>
    %21 = arith.mulf %18, %20 : vector<1x256xf32>
    %c3_17 = arith.constant 3 : index
    %c0_18 = arith.constant 0 : index
    %22 = vector.load %arg21[%c3_17, %c0_18] : memref<25x256xf32, #tpu.memory_space<vmem>>, vector<1x256xf32>
    tpu.vector_store %arg21[%c3_17, %c0_18], %21 {strides = array<i32>} : memref<25x256xf32, #tpu.memory_space<vmem>>, vector<1x256xf32>,
    %c30_i32 = arith.constant 30 : i32
    %23 = tpu.dynamic_rotate %2 by %c30_i32 dim 1 : vector<1x256xf32>, i32 -> vector<1x256xf32>
    %c4 = arith.constant 4 : index
    %c0_19 = arith.constant 0 : index
    %c0_20 = arith.constant 0 : index
    %24 = vector.load %arg5[%c4, %c0_19, %c0_20] : memref<25x1x256xf32, #tpu.memory_space<vmem>>, vector<1x1x256xf32>
    %25 = vector.shape_cast %24 : vector<1x1x256xf32> to vector<1x256xf32>
    %26 = arith.mulf %23, %25 : vector<1x256xf32>
    %c4_21 = arith.constant 4 : index
    %c0_22 = arith.constant 0 : index
    %27 = vector.load %arg21[%c4_21, %c0_22] : memref<25x256xf32, #tpu.memory_space<vmem>>, vector<1x256xf32>
    tpu.vector_store %arg21[%c4_21, %c0_22], %26 {strides = array<i32>} : memref<25x256xf32, #tpu.memory_space<vmem>>, vector<1x256xf32>,
    %c18_i32 = arith.constant 18 : i32
    %28 = tpu.dynamic_rotate %2 by %c18_i32 dim 1 : vector<1x256xf32>, i32 -> vector<1x256xf32>
    %c5 = arith.constant 5 : index
    %c0_23 = arith.constant 0 : index
    %c0_24 = arith.constant 0 : index
    %29 = vector.load %arg5[%c5, %c0_23, %c0_24] : memref<25x1x256xf32, #tpu.memory_space<vmem>>, vector<1x1x256xf32>
    %30 = vector.shape_cast %29 : vector<1x1x256xf32> to vector<1x256xf32>
    %31 = arith.mulf %28, %30 : vector<1x256xf32>
    %c5_25 = arith.constant 5 : index
    %c0_26 = arith.constant 0 : index
    %32 = vector.load %arg21[%c5_25, %c0_26] : memref<25x256xf32, #tpu.memory_space<vmem>>, vector<1x256xf32>
    tpu.vector_store %arg21[%c5_25, %c0_26], %31 {strides = array<i32>} : memref<25x256xf32, #tpu.memory_space<vmem>>, vector<1x256xf32>,
    %c17_i32 = arith.constant 17 : i32
    %33 = tpu.dynamic_rotate %2 by %c17_i32 dim 1 : vector<1x256xf32>, i32 -> vector<1x256xf32>
    %c6 = arith.constant 6 : index
    %c0_27 = arith.constant 0 : index
    %c0_28 = arith.constant 0 : index
    %34 = vector.load %arg5[%c6, %c0_27, %c0_28] : memref<25x1x256xf32, #tpu.memory_space<vmem>>, vector<1x1x256xf32>
    %35 = vector.shape_cast %34 : vector<1x1x256xf32> to vector<1x256xf32>
    %36 = arith.mulf %33, %35 : vector<1x256xf32>
    %c6_29 = arith.constant 6 : index
    %c0_30 = arith.constant 0 : index
    %37 = vector.load %arg21[%c6_29, %c0_30] : memref<25x256xf32, #tpu.memory_space<vmem>>, vector<1x256xf32>
    tpu.vector_store %arg21[%c6_29, %c0_30], %36 {strides = array<i32>} : memref<25x256xf32, #tpu.memory_space<vmem>>, vector<1x256xf32>,
    %c16_i32 = arith.constant 16 : i32
    %38 = tpu.dynamic_rotate %2 by %c16_i32 dim 1 : vector<1x256xf32>, i32 -> vector<1x256xf32>
    %c7 = arith.constant 7 : index
    %c0_31 = arith.constant 0 : index
    %c0_32 = arith.constant 0 : index
    %39 = vector.load %arg5[%c7, %c0_31, %c0_32] : memref<25x1x256xf32, #tpu.memory_space<vmem>>, vector<1x1x256xf32>
    %40 = vector.shape_cast %39 : vector<1x1x256xf32> to vector<1x256xf32>
    %41 = arith.mulf %38, %40 : vector<1x256xf32>
    %c7_33 = arith.constant 7 : index
    %c0_34 = arith.constant 0 : index
    %42 = vector.load %arg21[%c7_33, %c0_34] : memref<25x256xf32, #tpu.memory_space<vmem>>, vector<1x256xf32>
    tpu.vector_store %arg21[%c7_33, %c0_34], %41 {strides = array<i32>} : memref<25x256xf32, #tpu.memory_space<vmem>>, vector<1x256xf32>,
    %c15_i32 = arith.constant 15 : i32
    %43 = tpu.dynamic_rotate %2 by %c15_i32 dim 1 : vector<1x256xf32>, i32 -> vector<1x256xf32>
    %c8 = arith.constant 8 : index
    %c0_35 = arith.constant 0 : index
    %c0_36 = arith.constant 0 : index
    %44 = vector.load %arg5[%c8, %c0_35, %c0_36] : memref<25x1x256xf32, #tpu.memory_space<vmem>>, vector<1x1x256xf32>
    %45 = vector.shape_cast %44 : vector<1x1x256xf32> to vector<1x256xf32>
    %46 = arith.mulf %43, %45 : vector<1x256xf32>
    %c8_37 = arith.constant 8 : index
    %c0_38 = arith.constant 0 : index
    %47 = vector.load %arg21[%c8_37, %c0_38] : memref<25x256xf32, #tpu.memory_space<vmem>>, vector<1x256xf32>
    tpu.vector_store %arg21[%c8_37, %c0_38], %46 {strides = array<i32>} : memref<25x256xf32, #tpu.memory_space<vmem>>, vector<1x256xf32>,
    %c14_i32 = arith.constant 14 : i32
    %48 = tpu.dynamic_rotate %2 by %c14_i32 dim 1 : vector<1x256xf32>, i32 -> vector<1x256xf32>
    %c9 = arith.constant 9 : index
    %c0_39 = arith.constant 0 : index
    %c0_40 = arith.constant 0 : index
    %49 = vector.load %arg5[%c9, %c0_39, %c0_40] : memref<25x1x256xf32, #tpu.memory_space<vmem>>, vector<1x1x256xf32>
    %50 = vector.shape_cast %49 : vector<1x1x256xf32> to vector<1x256xf32>
    %51 = arith.mulf %48, %50 : vector<1x256xf32>
    %c9_41 = arith.constant 9 : index
    %c0_42 = arith.constant 0 : index
    %52 = vector.load %arg21[%c9_41, %c0_42] : memref<25x256xf32, #tpu.memory_space<vmem>>, vector<1x256xf32>
    tpu.vector_store %arg21[%c9_41, %c0_42], %51 {strides = array<i32>} : memref<25x256xf32, #tpu.memory_space<vmem>>, vector<1x256xf32>,
    %c2_i32 = arith.constant 2 : i32
    %53 = tpu.dynamic_rotate %2 by %c2_i32 dim 1 : vector<1x256xf32>, i32 -> vector<1x256xf32>
    %c10 = arith.constant 10 : index
    %c0_43 = arith.constant 0 : index
    %c0_44 = arith.constant 0 : index
    %54 = vector.load %arg5[%c10, %c0_43, %c0_44] : memref<25x1x256xf32, #tpu.memory_space<vmem>>, vector<1x1x256xf32>
    %55 = vector.shape_cast %54 : vector<1x1x256xf32> to vector<1x256xf32>
    %56 = arith.mulf %53, %55 : vector<1x256xf32>
    %c10_45 = arith.constant 10 : index
    %c0_46 = arith.constant 0 : index
    %57 = vector.load %arg21[%c10_45, %c0_46] : memref<25x256xf32, #tpu.memory_space<vmem>>, vector<1x256xf32>
    tpu.vector_store %arg21[%c10_45, %c0_46], %56 {strides = array<i32>} : memref<25x256xf32, #tpu.memory_space<vmem>>, vector<1x256xf32>,
    %c1_i32 = arith.constant 1 : i32
    %58 = tpu.dynamic_rotate %2 by %c1_i32 dim 1 : vector<1x256xf32>, i32 -> vector<1x256xf32>
    %c11 = arith.constant 11 : index
    %c0_47 = arith.constant 0 : index
    %c0_48 = arith.constant 0 : index
    %59 = vector.load %arg5[%c11, %c0_47, %c0_48] : memref<25x1x256xf32, #tpu.memory_space<vmem>>, vector<1x1x256xf32>
    %60 = vector.shape_cast %59 : vector<1x1x256xf32> to vector<1x256xf32>
    %61 = arith.mulf %58, %60 : vector<1x256xf32>
    %c11_49 = arith.constant 11 : index
    %c0_50 = arith.constant 0 : index
    %62 = vector.load %arg21[%c11_49, %c0_50] : memref<25x256xf32, #tpu.memory_space<vmem>>, vector<1x256xf32>
    tpu.vector_store %arg21[%c11_49, %c0_50], %61 {strides = array<i32>} : memref<25x256xf32, #tpu.memory_space<vmem>>, vector<1x256xf32>,
    %c12 = arith.constant 12 : index
    %c0_51 = arith.constant 0 : index
    %63 = vector.load %arg21[%c12, %c0_51] : memref<25x256xf32, #tpu.memory_space<vmem>>, vector<1x256xf32>
    tpu.vector_store %arg21[%c12, %c0_51], %2 {strides = array<i32>} : memref<25x256xf32, #tpu.memory_space<vmem>>, vector<1x256xf32>,
    %c255_i32 = arith.constant 255 : i32
    %64 = tpu.dynamic_rotate %2 by %c255_i32 dim 1 : vector<1x256xf32>, i32 -> vector<1x256xf32>
    %c13 = arith.constant 13 : index
    %c0_52 = arith.constant 0 : index
    %c0_53 = arith.constant 0 : index
    %65 = vector.load %arg5[%c13, %c0_52, %c0_53] : memref<25x1x256xf32, #tpu.memory_space<vmem>>, vector<1x1x256xf32>
    %66 = vector.shape_cast %65 : vector<1x1x256xf32> to vector<1x256xf32>
    %67 = arith.mulf %64, %66 : vector<1x256xf32>
    %c13_54 = arith.constant 13 : index
    %c0_55 = arith.constant 0 : index
    %68 = vector.load %arg21[%c13_54, %c0_55] : memref<25x256xf32, #tpu.memory_space<vmem>>, vector<1x256xf32>
    tpu.vector_store %arg21[%c13_54, %c0_55], %67 {strides = array<i32>} : memref<25x256xf32, #tpu.memory_space<vmem>>, vector<1x256xf32>,
    %c254_i32 = arith.constant 254 : i32
    %69 = tpu.dynamic_rotate %2 by %c254_i32 dim 1 : vector<1x256xf32>, i32 -> vector<1x256xf32>
    %c14 = arith.constant 14 : index
    %c0_56 = arith.constant 0 : index
    %c0_57 = arith.constant 0 : index
    %70 = vector.load %arg5[%c14, %c0_56, %c0_57] : memref<25x1x256xf32, #tpu.memory_space<vmem>>, vector<1x1x256xf32>
    %71 = vector.shape_cast %70 : vector<1x1x256xf32> to vector<1x256xf32>
    %72 = arith.mulf %69, %71 : vector<1x256xf32>
    %c14_58 = arith.constant 14 : index
    %c0_59 = arith.constant 0 : index
    %73 = vector.load %arg21[%c14_58, %c0_59] : memref<25x256xf32, #tpu.memory_space<vmem>>, vector<1x256xf32>
    tpu.vector_store %arg21[%c14_58, %c0_59], %72 {strides = array<i32>} : memref<25x256xf32, #tpu.memory_space<vmem>>, vector<1x256xf32>,
    %c242_i32 = arith.constant 242 : i32
    %74 = tpu.dynamic_rotate %2 by %c242_i32 dim 1 : vector<1x256xf32>, i32 -> vector<1x256xf32>
    %c15 = arith.constant 15 : index
    %c0_60 = arith.constant 0 : index
    %c0_61 = arith.constant 0 : index
    %75 = vector.load %arg5[%c15, %c0_60, %c0_61] : memref<25x1x256xf32, #tpu.memory_space<vmem>>, vector<1x1x256xf32>
    %76 = vector.shape_cast %75 : vector<1x1x256xf32> to vector<1x256xf32>
    %77 = arith.mulf %74, %76 : vector<1x256xf32>
    %c15_62 = arith.constant 15 : index
    %c0_63 = arith.constant 0 : index
    %78 = vector.load %arg21[%c15_62, %c0_63] : memref<25x256xf32, #tpu.memory_space<vmem>>, vector<1x256xf32>
    tpu.vector_store %arg21[%c15_62, %c0_63], %77 {strides = array<i32>} : memref<25x256xf32, #tpu.memory_space<vmem>>, vector<1x256xf32>,
    %c241_i32 = arith.constant 241 : i32
    %79 = tpu.dynamic_rotate %2 by %c241_i32 dim 1 : vector<1x256xf32>, i32 -> vector<1x256xf32>
    %c16 = arith.constant 16 : index
    %c0_64 = arith.constant 0 : index
    %c0_65 = arith.constant 0 : index
    %80 = vector.load %arg5[%c16, %c0_64, %c0_65] : memref<25x1x256xf32, #tpu.memory_space<vmem>>, vector<1x1x256xf32>
    %81 = vector.shape_cast %80 : vector<1x1x256xf32> to vector<1x256xf32>
    %82 = arith.mulf %79, %81 : vector<1x256xf32>
    %c16_66 = arith.constant 16 : index
    %c0_67 = arith.constant 0 : index
    %83 = vector.load %arg21[%c16_66, %c0_67] : memref<25x256xf32, #tpu.memory_space<vmem>>, vector<1x256xf32>
    tpu.vector_store %arg21[%c16_66, %c0_67], %82 {strides = array<i32>} : memref<25x256xf32, #tpu.memory_space<vmem>>, vector<1x256xf32>,
    %c240_i32 = arith.constant 240 : i32
    %84 = tpu.dynamic_rotate %2 by %c240_i32 dim 1 : vector<1x256xf32>, i32 -> vector<1x256xf32>
    %c17 = arith.constant 17 : index
    %c0_68 = arith.constant 0 : index
    %c0_69 = arith.constant 0 : index
    %85 = vector.load %arg5[%c17, %c0_68, %c0_69] : memref<25x1x256xf32, #tpu.memory_space<vmem>>, vector<1x1x256xf32>
    %86 = vector.shape_cast %85 : vector<1x1x256xf32> to vector<1x256xf32>
    %87 = arith.mulf %84, %86 : vector<1x256xf32>
    %c17_70 = arith.constant 17 : index
    %c0_71 = arith.constant 0 : index
    %88 = vector.load %arg21[%c17_70, %c0_71] : memref<25x256xf32, #tpu.memory_space<vmem>>, vector<1x256xf32>
    tpu.vector_store %arg21[%c17_70, %c0_71], %87 {strides = array<i32>} : memref<25x256xf32, #tpu.memory_space<vmem>>, vector<1x256xf32>,
    %c239_i32 = arith.constant 239 : i32
    %89 = tpu.dynamic_rotate %2 by %c239_i32 dim 1 : vector<1x256xf32>, i32 -> vector<1x256xf32>
    %c18 = arith.constant 18 : index
    %c0_72 = arith.constant 0 : index
    %c0_73 = arith.constant 0 : index
    %90 = vector.load %arg5[%c18, %c0_72, %c0_73] : memref<25x1x256xf32, #tpu.memory_space<vmem>>, vector<1x1x256xf32>
    %91 = vector.shape_cast %90 : vector<1x1x256xf32> to vector<1x256xf32>
    %92 = arith.mulf %89, %91 : vector<1x256xf32>
    %c18_74 = arith.constant 18 : index
    %c0_75 = arith.constant 0 : index
    %93 = vector.load %arg21[%c18_74, %c0_75] : memref<25x256xf32, #tpu.memory_space<vmem>>, vector<1x256xf32>
    tpu.vector_store %arg21[%c18_74, %c0_75], %92 {strides = array<i32>} : memref<25x256xf32, #tpu.memory_space<vmem>>, vector<1x256xf32>,
    %c238_i32 = arith.constant 238 : i32
    %94 = tpu.dynamic_rotate %2 by %c238_i32 dim 1 : vector<1x256xf32>, i32 -> vector<1x256xf32>
    %c19 = arith.constant 19 : index
    %c0_76 = arith.constant 0 : index
    %c0_77 = arith.constant 0 : index
    %95 = vector.load %arg5[%c19, %c0_76, %c0_77] : memref<25x1x256xf32, #tpu.memory_space<vmem>>, vector<1x1x256xf32>
    %96 = vector.shape_cast %95 : vector<1x1x256xf32> to vector<1x256xf32>
    %97 = arith.mulf %94, %96 : vector<1x256xf32>
    %c19_78 = arith.constant 19 : index
    %c0_79 = arith.constant 0 : index
    %98 = vector.load %arg21[%c19_78, %c0_79] : memref<25x256xf32, #tpu.memory_space<vmem>>, vector<1x256xf32>
    tpu.vector_store %arg21[%c19_78, %c0_79], %97 {strides = array<i32>} : memref<25x256xf32, #tpu.memory_space<vmem>>, vector<1x256xf32>,
    %c226_i32 = arith.constant 226 : i32
    %99 = tpu.dynamic_rotate %2 by %c226_i32 dim 1 : vector<1x256xf32>, i32 -> vector<1x256xf32>
    %c20 = arith.constant 20 : index
    %c0_80 = arith.constant 0 : index
    %c0_81 = arith.constant 0 : index
    %100 = vector.load %arg5[%c20, %c0_80, %c0_81] : memref<25x1x256xf32, #tpu.memory_space<vmem>>, vector<1x1x256xf32>
    %101 = vector.shape_cast %100 : vector<1x1x256xf32> to vector<1x256xf32>
    %102 = arith.mulf %99, %101 : vector<1x256xf32>
    %c20_82 = arith.constant 20 : index
    %c0_83 = arith.constant 0 : index
    %103 = vector.load %arg21[%c20_82, %c0_83] : memref<25x256xf32, #tpu.memory_space<vmem>>, vector<1x256xf32>
    tpu.vector_store %arg21[%c20_82, %c0_83], %102 {strides = array<i32>} : memref<25x256xf32, #tpu.memory_space<vmem>>, vector<1x256xf32>,
    %c225_i32 = arith.constant 225 : i32
    %104 = tpu.dynamic_rotate %2 by %c225_i32 dim 1 : vector<1x256xf32>, i32 -> vector<1x256xf32>
    %c21 = arith.constant 21 : index
    %c0_84 = arith.constant 0 : index
    %c0_85 = arith.constant 0 : index
    %105 = vector.load %arg5[%c21, %c0_84, %c0_85] : memref<25x1x256xf32, #tpu.memory_space<vmem>>, vector<1x1x256xf32>
    %106 = vector.shape_cast %105 : vector<1x1x256xf32> to vector<1x256xf32>
    %107 = arith.mulf %104, %106 : vector<1x256xf32>
    %c21_86 = arith.constant 21 : index
    %c0_87 = arith.constant 0 : index
    %108 = vector.load %arg21[%c21_86, %c0_87] : memref<25x256xf32, #tpu.memory_space<vmem>>, vector<1x256xf32>
    tpu.vector_store %arg21[%c21_86, %c0_87], %107 {strides = array<i32>} : memref<25x256xf32, #tpu.memory_space<vmem>>, vector<1x256xf32>,
    %c224_i32 = arith.constant 224 : i32
    %109 = tpu.dynamic_rotate %2 by %c224_i32 dim 1 : vector<1x256xf32>, i32 -> vector<1x256xf32>
    %c22 = arith.constant 22 : index
    %c0_88 = arith.constant 0 : index
    %c0_89 = arith.constant 0 : index
    %110 = vector.load %arg5[%c22, %c0_88, %c0_89] : memref<25x1x256xf32, #tpu.memory_space<vmem>>, vector<1x1x256xf32>
    %111 = vector.shape_cast %110 : vector<1x1x256xf32> to vector<1x256xf32>
    %112 = arith.mulf %109, %111 : vector<1x256xf32>
    %c22_90 = arith.constant 22 : index
    %c0_91 = arith.constant 0 : index
    %113 = vector.load %arg21[%c22_90, %c0_91] : memref<25x256xf32, #tpu.memory_space<vmem>>, vector<1x256xf32>
    tpu.vector_store %arg21[%c22_90, %c0_91], %112 {strides = array<i32>} : memref<25x256xf32, #tpu.memory_space<vmem>>, vector<1x256xf32>,
    %c223_i32 = arith.constant 223 : i32
    %114 = tpu.dynamic_rotate %2 by %c223_i32 dim 1 : vector<1x256xf32>, i32 -> vector<1x256xf32>
    %c23 = arith.constant 23 : index
    %c0_92 = arith.constant 0 : index
    %c0_93 = arith.constant 0 : index
    %115 = vector.load %arg5[%c23, %c0_92, %c0_93] : memref<25x1x256xf32, #tpu.memory_space<vmem>>, vector<1x1x256xf32>
    %116 = vector.shape_cast %115 : vector<1x1x256xf32> to vector<1x256xf32>
    %117 = arith.mulf %114, %116 : vector<1x256xf32>
    %c23_94 = arith.constant 23 : index
    %c0_95 = arith.constant 0 : index
    %118 = vector.load %arg21[%c23_94, %c0_95] : memref<25x256xf32, #tpu.memory_space<vmem>>, vector<1x256xf32>
    tpu.vector_store %arg21[%c23_94, %c0_95], %117 {strides = array<i32>} : memref<25x256xf32, #tpu.memory_space<vmem>>, vector<1x256xf32>,
    %c222_i32 = arith.constant 222 : i32
    %119 = tpu.dynamic_rotate %2 by %c222_i32 dim 1 : vector<1x256xf32>, i32 -> vector<1x256xf32>
    %c24 = arith.constant 24 : index
    %c0_96 = arith.constant 0 : index
    %c0_97 = arith.constant 0 : index
    %120 = vector.load %arg5[%c24, %c0_96, %c0_97] : memref<25x1x256xf32, #tpu.memory_space<vmem>>, vector<1x1x256xf32>
    %121 = vector.shape_cast %120 : vector<1x1x256xf32> to vector<1x256xf32>
    %122 = arith.mulf %119, %121 : vector<1x256xf32>
    %c24_98 = arith.constant 24 : index
    %c0_99 = arith.constant 0 : index
    %123 = vector.load %arg21[%c24_98, %c0_99] : memref<25x256xf32, #tpu.memory_space<vmem>>, vector<1x256xf32>
    tpu.vector_store %arg21[%c24_98, %c0_99], %122 {strides = array<i32>} : memref<25x256xf32, #tpu.memory_space<vmem>>, vector<1x256xf32>,
    %c0_100 = arith.constant 0 : index
    %c0_101 = arith.constant 0 : index
    %124 = vector.load %arg2[%c0_100, %c0_101] : memref<16x25xf32, #tpu.memory_space<vmem>>, vector<16x25xf32>
    %c0_102 = arith.constant 0 : index
    %c0_103 = arith.constant 0 : index
    %125 = vector.load %arg21[%c0_102, %c0_103] : memref<25x256xf32, #tpu.memory_space<vmem>>, vector<25x256xf32>
    %cst_104 = arith.constant dense<0.000000e+00> : vector<16x256xf32>
    %126 = tpu.matmul %124, %125, %cst_104 {dimension_numbers = #tpu.dot_dimension_numbers<[1], [0], [0], [1], [0, 0, 1, 1], [], []>} : vector<16x25xf32>, vector<25x256xf32>, vector<16x256xf32> -> vector<16x256xf32>
    %c0_105 = arith.constant 0 : index
    %c0_106 = arith.constant 0 : index
    %127 = vector.load %arg3[%c0_105, %c0_106] : memref<16x3xf32, #tpu.memory_space<vmem>>, vector<16x1xf32>
    %128 = vector.broadcast %127 : vector<16x1xf32> to vector<16x256xf32>
    %129 = arith.addf %126, %128 : vector<16x256xf32>
    %c0_107 = arith.constant 0 : index
    %c0_108 = arith.constant 0 : index
    %130 = vector.load %arg4[%c0_107, %c0_108] : memref<16x16xf32, #tpu.memory_space<vmem>>, vector<16x16xf32>
    %c0_109 = arith.constant 0 : index
    %c1_110 = arith.constant 1 : index
    %131 = vector.load %arg3[%c0_109, %c1_110] : memref<16x3xf32, #tpu.memory_space<vmem>>, vector<16x1xf32>
    %c0_111 = arith.constant 0 : index
    %c2_112 = arith.constant 2 : index
    %132 = vector.load %arg3[%c0_111, %c2_112] : memref<16x3xf32, #tpu.memory_space<vmem>>, vector<16x1xf32>
    %cst_113 = arith.constant dense<0.000000e+00> : vector<16xf32>
    %133 = vector.multi_reduction <add>, %129, %cst_113 [1] : vector<16x256xf32> to vector<16xf32>
    %134 = vector.shape_cast %133 : vector<16xf32> to vector<16x1xf32>
    %135 = arith.mulf %129, %129 : vector<16x256xf32>
    %cst_114 = arith.constant dense<0.000000e+00> : vector<16xf32>
    %136 = vector.multi_reduction <add>, %135, %cst_114 [1] : vector<16x256xf32> to vector<16xf32>
    %137 = vector.shape_cast %136 : vector<16xf32> to vector<16x1xf32>
    %138 = tpu.concatenate %134, %137 in 1 : vector<16x1xf32>, vector<16x1xf32> -> vector<16x2xf32>
    %cst_115 = arith.constant dense<0.000000e+00> : vector<16x2xf32>
    %139 = tpu.matmul %130, %138, %cst_115 {dimension_numbers = #tpu.dot_dimension_numbers<[1], [0], [0], [1], [0, 0, 1, 1], [], []>} : vector<16x16xf32>, vector<16x2xf32>, vector<16x2xf32> -> vector<16x2xf32>
    %140 = vector.extract_strided_slice %139 {offsets = [0, 0], sizes = [16, 1], strides = [1, 1]} : vector<16x2xf32> to vector<16x1xf32>
    %141 = vector.extract_strided_slice %139 {offsets = [0, 1], sizes = [16, 1], strides = [1, 1]} : vector<16x2xf32> to vector<16x1xf32>
    %142 = arith.mulf %140, %140 : vector<16x1xf32>
    %143 = arith.subf %141, %142 : vector<16x1xf32>
    %144 = vector.broadcast %140 : vector<16x1xf32> to vector<16x256xf32>
    %145 = arith.subf %129, %144 : vector<16x256xf32>
    %cst_116 = arith.constant 9.99999974E-6 : f32
    %146 = vector.broadcast %cst_116 : f32 to vector<16x1xf32>
    %147 = arith.addf %143, %146 : vector<16x1xf32>
    %148 = math.rsqrt %147 : vector<16x1xf32>
    %149 = vector.broadcast %148 : vector<16x1xf32> to vector<16x256xf32>
    %150 = arith.mulf %145, %149 : vector<16x256xf32>
    %151 = vector.broadcast %131 : vector<16x1xf32> to vector<16x256xf32>
    %152 = arith.mulf %150, %151 : vector<16x256xf32>
    %153 = vector.broadcast %132 : vector<16x1xf32> to vector<16x256xf32>
    %154 = arith.addf %152, %153 : vector<16x256xf32>
    %cst_117 = arith.constant 0.000000e+00 : f32
    %155 = vector.broadcast %cst_117 : f32 to vector<16x256xf32>
    %156 = arith.maximumf %154, %155 : vector<16x256xf32>
    %c17_i32_118 = arith.constant 17 : i32
    %157 = tpu.dynamic_rotate %156 by %c17_i32_118 dim 1 : vector<16x256xf32>, i32 -> vector<16x256xf32>
    %c0_119 = arith.constant 0 : index
    %c0_120 = arith.constant 0 : index
    %c0_121 = arith.constant 0 : index
    %158 = vector.load %arg9[%c0_119, %c0_120, %c0_121] : memref<9x1x256xf32, #tpu.memory_space<vmem>>, vector<1x1x256xf32>
    %159 = vector.shape_cast %158 : vector<1x1x256xf32> to vector<1x256xf32>
    %160 = vector.broadcast %159 : vector<1x256xf32> to vector<16x256xf32>
    %161 = arith.mulf %157, %160 : vector<16x256xf32>
    %c0_122 = arith.constant 0 : index
    %c0_123 = arith.constant 0 : index
    %162 = vector.load %arg22[%c0_122, %c0_123] : memref<144x256xf32, #tpu.memory_space<vmem>>, vector<16x256xf32>
    tpu.vector_store %arg22[%c0_122, %c0_123], %161 {strides = array<i32>} : memref<144x256xf32, #tpu.memory_space<vmem>>, vector<16x256xf32>,
    %c16_i32_124 = arith.constant 16 : i32
    %163 = tpu.dynamic_rotate %156 by %c16_i32_124 dim 1 : vector<16x256xf32>, i32 -> vector<16x256xf32>
    %c1_125 = arith.constant 1 : index
    %c0_126 = arith.constant 0 : index
    %c0_127 = arith.constant 0 : index
    %164 = vector.load %arg9[%c1_125, %c0_126, %c0_127] : memref<9x1x256xf32, #tpu.memory_space<vmem>>, vector<1x1x256xf32>
    %165 = vector.shape_cast %164 : vector<1x1x256xf32> to vector<1x256xf32>
    %166 = vector.broadcast %165 : vector<1x256xf32> to vector<16x256xf32>
    %167 = arith.mulf %163, %166 : vector<16x256xf32>
    %c16_128 = arith.constant 16 : index
    %c0_129 = arith.constant 0 : index
    %168 = vector.load %arg22[%c16_128, %c0_129] : memref<144x256xf32, #tpu.memory_space<vmem>>, vector<16x256xf32>
    tpu.vector_store %arg22[%c16_128, %c0_129], %167 {strides = array<i32>} : memref<144x256xf32, #tpu.memory_space<vmem>>, vector<16x256xf32>,
    %c15_i32_130 = arith.constant 15 : i32
    %169 = tpu.dynamic_rotate %156 by %c15_i32_130 dim 1 : vector<16x256xf32>, i32 -> vector<16x256xf32>
    %c2_131 = arith.constant 2 : index
    %c0_132 = arith.constant 0 : index
    %c0_133 = arith.constant 0 : index
    %170 = vector.load %arg9[%c2_131, %c0_132, %c0_133] : memref<9x1x256xf32, #tpu.memory_space<vmem>>, vector<1x1x256xf32>
    %171 = vector.shape_cast %170 : vector<1x1x256xf32> to vector<1x256xf32>
    %172 = vector.broadcast %171 : vector<1x256xf32> to vector<16x256xf32>
    %173 = arith.mulf %169, %172 : vector<16x256xf32>
    %c32 = arith.constant 32 : index
    %c0_134 = arith.constant 0 : index
    %174 = vector.load %arg22[%c32, %c0_134] : memref<144x256xf32, #tpu.memory_space<vmem>>, vector<16x256xf32>
    tpu.vector_store %arg22[%c32, %c0_134], %173 {strides = array<i32>} : memref<144x256xf32, #tpu.memory_space<vmem>>, vector<16x256xf32>,
    %c1_i32_135 = arith.constant 1 : i32
    %175 = tpu.dynamic_rotate %156 by %c1_i32_135 dim 1 : vector<16x256xf32>, i32 -> vector<16x256xf32>
    %c3_136 = arith.constant 3 : index
    %c0_137 = arith.constant 0 : index
    %c0_138 = arith.constant 0 : index
    %176 = vector.load %arg9[%c3_136, %c0_137, %c0_138] : memref<9x1x256xf32, #tpu.memory_space<vmem>>, vector<1x1x256xf32>
    %177 = vector.shape_cast %176 : vector<1x1x256xf32> to vector<1x256xf32>
    %178 = vector.broadcast %177 : vector<1x256xf32> to vector<16x256xf32>
    %179 = arith.mulf %175, %178 : vector<16x256xf32>
    %c48 = arith.constant 48 : index
    %c0_139 = arith.constant 0 : index
    %180 = vector.load %arg22[%c48, %c0_139] : memref<144x256xf32, #tpu.memory_space<vmem>>, vector<16x256xf32>
    tpu.vector_store %arg22[%c48, %c0_139], %179 {strides = array<i32>} : memref<144x256xf32, #tpu.memory_space<vmem>>, vector<16x256xf32>,
    %c64 = arith.constant 64 : index
    %c0_140 = arith.constant 0 : index
    %181 = vector.load %arg22[%c64, %c0_140] : memref<144x256xf32, #tpu.memory_space<vmem>>, vector<16x256xf32>
    tpu.vector_store %arg22[%c64, %c0_140], %156 {strides = array<i32>} : memref<144x256xf32, #tpu.memory_space<vmem>>, vector<16x256xf32>,
    %c255_i32_141 = arith.constant 255 : i32
    %182 = tpu.dynamic_rotate %156 by %c255_i32_141 dim 1 : vector<16x256xf32>, i32 -> vector<16x256xf32>
    %c5_142 = arith.constant 5 : index
    %c0_143 = arith.constant 0 : index
    %c0_144 = arith.constant 0 : index
    %183 = vector.load %arg9[%c5_142, %c0_143, %c0_144] : memref<9x1x256xf32, #tpu.memory_space<vmem>>, vector<1x1x256xf32>
    %184 = vector.shape_cast %183 : vector<1x1x256xf32> to vector<1x256xf32>
    %185 = vector.broadcast %184 : vector<1x256xf32> to vector<16x256xf32>
    %186 = arith.mulf %182, %185 : vector<16x256xf32>
    %c80 = arith.constant 80 : index
    %c0_145 = arith.constant 0 : index
    %187 = vector.load %arg22[%c80, %c0_145] : memref<144x256xf32, #tpu.memory_space<vmem>>, vector<16x256xf32>
    tpu.vector_store %arg22[%c80, %c0_145], %186 {strides = array<i32>} : memref<144x256xf32, #tpu.memory_space<vmem>>, vector<16x256xf32>,
    %c241_i32_146 = arith.constant 241 : i32
    %188 = tpu.dynamic_rotate %156 by %c241_i32_146 dim 1 : vector<16x256xf32>, i32 -> vector<16x256xf32>
    %c6_147 = arith.constant 6 : index
    %c0_148 = arith.constant 0 : index
    %c0_149 = arith.constant 0 : index
    %189 = vector.load %arg9[%c6_147, %c0_148, %c0_149] : memref<9x1x256xf32, #tpu.memory_space<vmem>>, vector<1x1x256xf32>
    %190 = vector.shape_cast %189 : vector<1x1x256xf32> to vector<1x256xf32>
    %191 = vector.broadcast %190 : vector<1x256xf32> to vector<16x256xf32>
    %192 = arith.mulf %188, %191 : vector<16x256xf32>
    %c96 = arith.constant 96 : index
    %c0_150 = arith.constant 0 : index
    %193 = vector.load %arg22[%c96, %c0_150] : memref<144x256xf32, #tpu.memory_space<vmem>>, vector<16x256xf32>
    tpu.vector_store %arg22[%c96, %c0_150], %192 {strides = array<i32>} : memref<144x256xf32, #tpu.memory_space<vmem>>, vector<16x256xf32>,
    %c240_i32_151 = arith.constant 240 : i32
    %194 = tpu.dynamic_rotate %156 by %c240_i32_151 dim 1 : vector<16x256xf32>, i32 -> vector<16x256xf32>
    %c7_152 = arith.constant 7 : index
    %c0_153 = arith.constant 0 : index
    %c0_154 = arith.constant 0 : index
    %195 = vector.load %arg9[%c7_152, %c0_153, %c0_154] : memref<9x1x256xf32, #tpu.memory_space<vmem>>, vector<1x1x256xf32>
    %196 = vector.shape_cast %195 : vector<1x1x256xf32> to vector<1x256xf32>
    %197 = vector.broadcast %196 : vector<1x256xf32> to vector<16x256xf32>
    %198 = arith.mulf %194, %197 : vector<16x256xf32>
    %c112 = arith.constant 112 : index
    %c0_155 = arith.constant 0 : index
    %199 = vector.load %arg22[%c112, %c0_155] : memref<144x256xf32, #tpu.memory_space<vmem>>, vector<16x256xf32>
    tpu.vector_store %arg22[%c112, %c0_155], %198 {strides = array<i32>} : memref<144x256xf32, #tpu.memory_space<vmem>>, vector<16x256xf32>,
    %c239_i32_156 = arith.constant 239 : i32
    %200 = tpu.dynamic_rotate %156 by %c239_i32_156 dim 1 : vector<16x256xf32>, i32 -> vector<16x256xf32>
    %c8_157 = arith.constant 8 : index
    %c0_158 = arith.constant 0 : index
    %c0_159 = arith.constant 0 : index
    %201 = vector.load %arg9[%c8_157, %c0_158, %c0_159] : memref<9x1x256xf32, #tpu.memory_space<vmem>>, vector<1x1x256xf32>
    %202 = vector.shape_cast %201 : vector<1x1x256xf32> to vector<1x256xf32>
    %203 = vector.broadcast %202 : vector<1x256xf32> to vector<16x256xf32>
    %204 = arith.mulf %200, %203 : vector<16x256xf32>
    %c128 = arith.constant 128 : index
    %c0_160 = arith.constant 0 : index
    %205 = vector.load %arg22[%c128, %c0_160] : memref<144x256xf32, #tpu.memory_space<vmem>>, vector<16x256xf32>
    tpu.vector_store %arg22[%c128, %c0_160], %204 {strides = array<i32>} : memref<144x256xf32, #tpu.memory_space<vmem>>, vector<16x256xf32>,
    %c0_161 = arith.constant 0 : index
    %c0_162 = arith.constant 0 : index
    %206 = vector.load %arg6[%c0_161, %c0_162] : memref<24x144xf32, #tpu.memory_space<vmem>>, vector<24x144xf32>
    %c0_163 = arith.constant 0 : index
    %c0_164 = arith.constant 0 : index
    %207 = vector.load %arg22[%c0_163, %c0_164] : memref<144x256xf32, #tpu.memory_space<vmem>>, vector<144x256xf32>
    %cst_165 = arith.constant dense<0.000000e+00> : vector<24x256xf32>
    %208 = tpu.matmul %206, %207, %cst_165 {dimension_numbers = #tpu.dot_dimension_numbers<[1], [0], [0], [1], [0, 0, 1, 1], [], []>} : vector<24x144xf32>, vector<144x256xf32>, vector<24x256xf32> -> vector<24x256xf32>
    %c0_166 = arith.constant 0 : index
    %c0_167 = arith.constant 0 : index
    %209 = vector.load %arg7[%c0_166, %c0_167] : memref<24x3xf32, #tpu.memory_space<vmem>>, vector<24x1xf32>
    %210 = vector.broadcast %209 : vector<24x1xf32> to vector<24x256xf32>
    %211 = arith.addf %208, %210 : vector<24x256xf32>
    %c0_168 = arith.constant 0 : index
    %c0_169 = arith.constant 0 : index
    %212 = vector.load %arg8[%c0_168, %c0_169] : memref<24x24xf32, #tpu.memory_space<vmem>>, vector<24x24xf32>
    %c0_170 = arith.constant 0 : index
    %c1_171 = arith.constant 1 : index
    %213 = vector.load %arg7[%c0_170, %c1_171] : memref<24x3xf32, #tpu.memory_space<vmem>>, vector<24x1xf32>
    %c0_172 = arith.constant 0 : index
    %c2_173 = arith.constant 2 : index
    %214 = vector.load %arg7[%c0_172, %c2_173] : memref<24x3xf32, #tpu.memory_space<vmem>>, vector<24x1xf32>
    %cst_174 = arith.constant dense<0.000000e+00> : vector<24xf32>
    %215 = vector.multi_reduction <add>, %211, %cst_174 [1] : vector<24x256xf32> to vector<24xf32>
    %216 = vector.shape_cast %215 : vector<24xf32> to vector<24x1xf32>
    %217 = arith.mulf %211, %211 : vector<24x256xf32>
    %cst_175 = arith.constant dense<0.000000e+00> : vector<24xf32>
    %218 = vector.multi_reduction <add>, %217, %cst_175 [1] : vector<24x256xf32> to vector<24xf32>
    %219 = vector.shape_cast %218 : vector<24xf32> to vector<24x1xf32>
    %220 = tpu.concatenate %216, %219 in 1 : vector<24x1xf32>, vector<24x1xf32> -> vector<24x2xf32>
    %cst_176 = arith.constant dense<0.000000e+00> : vector<24x2xf32>
    %221 = tpu.matmul %212, %220, %cst_176 {dimension_numbers = #tpu.dot_dimension_numbers<[1], [0], [0], [1], [0, 0, 1, 1], [], []>} : vector<24x24xf32>, vector<24x2xf32>, vector<24x2xf32> -> vector<24x2xf32>
    %222 = vector.extract_strided_slice %221 {offsets = [0, 0], sizes = [24, 1], strides = [1, 1]} : vector<24x2xf32> to vector<24x1xf32>
    %223 = vector.extract_strided_slice %221 {offsets = [0, 1], sizes = [24, 1], strides = [1, 1]} : vector<24x2xf32> to vector<24x1xf32>
    %224 = arith.mulf %222, %222 : vector<24x1xf32>
    %225 = arith.subf %223, %224 : vector<24x1xf32>
    %226 = vector.broadcast %222 : vector<24x1xf32> to vector<24x256xf32>
    %227 = arith.subf %211, %226 : vector<24x256xf32>
    %cst_177 = arith.constant 9.99999974E-6 : f32
    %228 = vector.broadcast %cst_177 : f32 to vector<24x1xf32>
    %229 = arith.addf %225, %228 : vector<24x1xf32>
    %230 = math.rsqrt %229 : vector<24x1xf32>
    %231 = vector.broadcast %230 : vector<24x1xf32> to vector<24x256xf32>
    %232 = arith.mulf %227, %231 : vector<24x256xf32>
    %233 = vector.broadcast %213 : vector<24x1xf32> to vector<24x256xf32>
    %234 = arith.mulf %232, %233 : vector<24x256xf32>
    %235 = vector.broadcast %214 : vector<24x1xf32> to vector<24x256xf32>
    %236 = arith.addf %234, %235 : vector<24x256xf32>
    %cst_178 = arith.constant 0.000000e+00 : f32
    %237 = vector.broadcast %cst_178 : f32 to vector<24x256xf32>
    %238 = arith.maximumf %236, %237 : vector<24x256xf32>
    %c17_i32_179 = arith.constant 17 : i32
    %239 = tpu.dynamic_rotate %238 by %c17_i32_179 dim 1 : vector<24x256xf32>, i32 -> vector<24x256xf32>
    %c0_180 = arith.constant 0 : index
    %c0_181 = arith.constant 0 : index
    %c0_182 = arith.constant 0 : index
    %240 = vector.load %arg9[%c0_180, %c0_181, %c0_182] : memref<9x1x256xf32, #tpu.memory_space<vmem>>, vector<1x1x256xf32>
    %241 = vector.shape_cast %240 : vector<1x1x256xf32> to vector<1x256xf32>
    %242 = vector.broadcast %241 : vector<1x256xf32> to vector<24x256xf32>
    %243 = arith.mulf %239, %242 : vector<24x256xf32>
    %c0_183 = arith.constant 0 : index
    %c0_184 = arith.constant 0 : index
    %244 = vector.load %arg23[%c0_183, %c0_184] : memref<216x256xf32, #tpu.memory_space<vmem>>, vector<24x256xf32>
    tpu.vector_store %arg23[%c0_183, %c0_184], %243 {strides = array<i32>} : memref<216x256xf32, #tpu.memory_space<vmem>>, vector<24x256xf32>,
    %c16_i32_185 = arith.constant 16 : i32
    %245 = tpu.dynamic_rotate %238 by %c16_i32_185 dim 1 : vector<24x256xf32>, i32 -> vector<24x256xf32>
    %c1_186 = arith.constant 1 : index
    %c0_187 = arith.constant 0 : index
    %c0_188 = arith.constant 0 : index
    %246 = vector.load %arg9[%c1_186, %c0_187, %c0_188] : memref<9x1x256xf32, #tpu.memory_space<vmem>>, vector<1x1x256xf32>
    %247 = vector.shape_cast %246 : vector<1x1x256xf32> to vector<1x256xf32>
    %248 = vector.broadcast %247 : vector<1x256xf32> to vector<24x256xf32>
    %249 = arith.mulf %245, %248 : vector<24x256xf32>
    %c24_189 = arith.constant 24 : index
    %c0_190 = arith.constant 0 : index
    %250 = vector.load %arg23[%c24_189, %c0_190] : memref<216x256xf32, #tpu.memory_space<vmem>>, vector<24x256xf32>
    tpu.vector_store %arg23[%c24_189, %c0_190], %249 {strides = array<i32>} : memref<216x256xf32, #tpu.memory_space<vmem>>, vector<24x256xf32>,
    %c15_i32_191 = arith.constant 15 : i32
    %251 = tpu.dynamic_rotate %238 by %c15_i32_191 dim 1 : vector<24x256xf32>, i32 -> vector<24x256xf32>
    %c2_192 = arith.constant 2 : index
    %c0_193 = arith.constant 0 : index
    %c0_194 = arith.constant 0 : index
    %252 = vector.load %arg9[%c2_192, %c0_193, %c0_194] : memref<9x1x256xf32, #tpu.memory_space<vmem>>, vector<1x1x256xf32>
    %253 = vector.shape_cast %252 : vector<1x1x256xf32> to vector<1x256xf32>
    %254 = vector.broadcast %253 : vector<1x256xf32> to vector<24x256xf32>
    %255 = arith.mulf %251, %254 : vector<24x256xf32>
    %c48_195 = arith.constant 48 : index
    %c0_196 = arith.constant 0 : index
    %256 = vector.load %arg23[%c48_195, %c0_196] : memref<216x256xf32, #tpu.memory_space<vmem>>, vector<24x256xf32>
    tpu.vector_store %arg23[%c48_195, %c0_196], %255 {strides = array<i32>} : memref<216x256xf32, #tpu.memory_space<vmem>>, vector<24x256xf32>,
    %c1_i32_197 = arith.constant 1 : i32
    %257 = tpu.dynamic_rotate %238 by %c1_i32_197 dim 1 : vector<24x256xf32>, i32 -> vector<24x256xf32>
    %c3_198 = arith.constant 3 : index
    %c0_199 = arith.constant 0 : index
    %c0_200 = arith.constant 0 : index
    %258 = vector.load %arg9[%c3_198, %c0_199, %c0_200] : memref<9x1x256xf32, #tpu.memory_space<vmem>>, vector<1x1x256xf32>
    %259 = vector.shape_cast %258 : vector<1x1x256xf32> to vector<1x256xf32>
    %260 = vector.broadcast %259 : vector<1x256xf32> to vector<24x256xf32>
    %261 = arith.mulf %257, %260 : vector<24x256xf32>
    %c72 = arith.constant 72 : index
    %c0_201 = arith.constant 0 : index
    %262 = vector.load %arg23[%c72, %c0_201] : memref<216x256xf32, #tpu.memory_space<vmem>>, vector<24x256xf32>
    tpu.vector_store %arg23[%c72, %c0_201], %261 {strides = array<i32>} : memref<216x256xf32, #tpu.memory_space<vmem>>, vector<24x256xf32>,
    %c96_202 = arith.constant 96 : index
    %c0_203 = arith.constant 0 : index
    %263 = vector.load %arg23[%c96_202, %c0_203] : memref<216x256xf32, #tpu.memory_space<vmem>>, vector<24x256xf32>
    tpu.vector_store %arg23[%c96_202, %c0_203], %238 {strides = array<i32>} : memref<216x256xf32, #tpu.memory_space<vmem>>, vector<24x256xf32>,
    %c255_i32_204 = arith.constant 255 : i32
    %264 = tpu.dynamic_rotate %238 by %c255_i32_204 dim 1 : vector<24x256xf32>, i32 -> vector<24x256xf32>
    %c5_205 = arith.constant 5 : index
    %c0_206 = arith.constant 0 : index
    %c0_207 = arith.constant 0 : index
    %265 = vector.load %arg9[%c5_205, %c0_206, %c0_207] : memref<9x1x256xf32, #tpu.memory_space<vmem>>, vector<1x1x256xf32>
    %266 = vector.shape_cast %265 : vector<1x1x256xf32> to vector<1x256xf32>
    %267 = vector.broadcast %266 : vector<1x256xf32> to vector<24x256xf32>
    %268 = arith.mulf %264, %267 : vector<24x256xf32>
    %c120 = arith.constant 120 : index
    %c0_208 = arith.constant 0 : index
    %269 = vector.load %arg23[%c120, %c0_208] : memref<216x256xf32, #tpu.memory_space<vmem>>, vector<24x256xf32>
    tpu.vector_store %arg23[%c120, %c0_208], %268 {strides = array<i32>} : memref<216x256xf32, #tpu.memory_space<vmem>>, vector<24x256xf32>,
    %c241_i32_209 = arith.constant 241 : i32
    %270 = tpu.dynamic_rotate %238 by %c241_i32_209 dim 1 : vector<24x256xf32>, i32 -> vector<24x256xf32>
    %c6_210 = arith.constant 6 : index
    %c0_211 = arith.constant 0 : index
    %c0_212 = arith.constant 0 : index
    %271 = vector.load %arg9[%c6_210, %c0_211, %c0_212] : memref<9x1x256xf32, #tpu.memory_space<vmem>>, vector<1x1x256xf32>
    %272 = vector.shape_cast %271 : vector<1x1x256xf32> to vector<1x256xf32>
    %273 = vector.broadcast %272 : vector<1x256xf32> to vector<24x256xf32>
    %274 = arith.mulf %270, %273 : vector<24x256xf32>
    %c144 = arith.constant 144 : index
    %c0_213 = arith.constant 0 : index
    %275 = vector.load %arg23[%c144, %c0_213] : memref<216x256xf32, #tpu.memory_space<vmem>>, vector<24x256xf32>
    tpu.vector_store %arg23[%c144, %c0_213], %274 {strides = array<i32>} : memref<216x256xf32, #tpu.memory_space<vmem>>, vector<24x256xf32>,
    %c240_i32_214 = arith.constant 240 : i32
    %276 = tpu.dynamic_rotate %238 by %c240_i32_214 dim 1 : vector<24x256xf32>, i32 -> vector<24x256xf32>
    %c7_215 = arith.constant 7 : index
    %c0_216 = arith.constant 0 : index
    %c0_217 = arith.constant 0 : index
    %277 = vector.load %arg9[%c7_215, %c0_216, %c0_217] : memref<9x1x256xf32, #tpu.memory_space<vmem>>, vector<1x1x256xf32>
    %278 = vector.shape_cast %277 : vector<1x1x256xf32> to vector<1x256xf32>
    %279 = vector.broadcast %278 : vector<1x256xf32> to vector<24x256xf32>
    %280 = arith.mulf %276, %279 : vector<24x256xf32>
    %c168 = arith.constant 168 : index
    %c0_218 = arith.constant 0 : index
    %281 = vector.load %arg23[%c168, %c0_218] : memref<216x256xf32, #tpu.memory_space<vmem>>, vector<24x256xf32>
    tpu.vector_store %arg23[%c168, %c0_218], %280 {strides = array<i32>} : memref<216x256xf32, #tpu.memory_space<vmem>>, vector<24x256xf32>,
    %c239_i32_219 = arith.constant 239 : i32
    %282 = tpu.dynamic_rotate %238 by %c239_i32_219 dim 1 : vector<24x256xf32>, i32 -> vector<24x256xf32>
    %c8_220 = arith.constant 8 : index
    %c0_221 = arith.constant 0 : index
    %c0_222 = arith.constant 0 : index
    %283 = vector.load %arg9[%c8_220, %c0_221, %c0_222] : memref<9x1x256xf32, #tpu.memory_space<vmem>>, vector<1x1x256xf32>
    %284 = vector.shape_cast %283 : vector<1x1x256xf32> to vector<1x256xf32>
    %285 = vector.broadcast %284 : vector<1x256xf32> to vector<24x256xf32>
    %286 = arith.mulf %282, %285 : vector<24x256xf32>
    %c192 = arith.constant 192 : index
    %c0_223 = arith.constant 0 : index
    %287 = vector.load %arg23[%c192, %c0_223] : memref<216x256xf32, #tpu.memory_space<vmem>>, vector<24x256xf32>
    tpu.vector_store %arg23[%c192, %c0_223], %286 {strides = array<i32>} : memref<216x256xf32, #tpu.memory_space<vmem>>, vector<24x256xf32>,
    %c0_224 = arith.constant 0 : index
    %c0_225 = arith.constant 0 : index
    %288 = vector.load %arg23[%c0_224, %c0_225] : memref<216x256xf32, #tpu.memory_space<vmem>>, vector<216x256xf32>
    %c0_226 = arith.constant 0 : index
    %c0_227 = arith.constant 0 : index
    %289 = vector.load %arg13[%c0_226, %c0_227] : memref<256x64xf32, #tpu.memory_space<vmem>>, vector<256x64xf32>
    %cst_228 = arith.constant dense<0.000000e+00> : vector<216x64xf32>
    %290 = tpu.matmul %288, %289, %cst_228 {dimension_numbers = #tpu.dot_dimension_numbers<[1], [0], [0], [1], [0, 0, 1, 1], [], []>} : vector<216x256xf32>, vector<256x64xf32>, vector<216x64xf32> -> vector<216x64xf32>
    %c0_229 = arith.constant 0 : index
    %c0_230 = arith.constant 0 : index
    %291 = vector.load %arg10[%c0_229, %c0_230] : memref<100x216xf32, #tpu.memory_space<vmem>>, vector<100x216xf32>
    %cst_231 = arith.constant dense<0.000000e+00> : vector<100x64xf32>
    %292 = tpu.matmul %291, %290, %cst_231 {dimension_numbers = #tpu.dot_dimension_numbers<[1], [0], [0], [1], [0, 0, 1, 1], [], []>} : vector<100x216xf32>, vector<216x64xf32>, vector<100x64xf32> -> vector<100x64xf32>
    %c0_232 = arith.constant 0 : index
    %c0_233 = arith.constant 0 : index
    %293 = vector.load %arg11[%c0_232, %c0_233] : memref<100x3xf32, #tpu.memory_space<vmem>>, vector<100x1xf32>
    %294 = vector.broadcast %293 : vector<100x1xf32> to vector<100x64xf32>
    %295 = arith.addf %292, %294 : vector<100x64xf32>
    %c0_234 = arith.constant 0 : index
    %c0_235 = arith.constant 0 : index
    %296 = vector.load %arg12[%c0_234, %c0_235] : memref<100x100xf32, #tpu.memory_space<vmem>>, vector<100x100xf32>
    %c0_236 = arith.constant 0 : index
    %c1_237 = arith.constant 1 : index
    %297 = vector.load %arg11[%c0_236, %c1_237] : memref<100x3xf32, #tpu.memory_space<vmem>>, vector<100x1xf32>
    %c0_238 = arith.constant 0 : index
    %c2_239 = arith.constant 2 : index
    %298 = vector.load %arg11[%c0_238, %c2_239] : memref<100x3xf32, #tpu.memory_space<vmem>>, vector<100x1xf32>
    %cst_240 = arith.constant dense<0.000000e+00> : vector<100xf32>
    %299 = vector.multi_reduction <add>, %295, %cst_240 [1] : vector<100x64xf32> to vector<100xf32>
    %300 = vector.shape_cast %299 : vector<100xf32> to vector<100x1xf32>
    %301 = arith.mulf %295, %295 : vector<100x64xf32>
    %cst_241 = arith.constant dense<0.000000e+00> : vector<100xf32>
    %302 = vector.multi_reduction <add>, %301, %cst_241 [1] : vector<100x64xf32> to vector<100xf32>
    %303 = vector.shape_cast %302 : vector<100xf32> to vector<100x1xf32>
    %304 = tpu.concatenate %300, %303 in 1 : vector<100x1xf32>, vector<100x1xf32> -> vector<100x2xf32>
    %cst_242 = arith.constant dense<0.000000e+00> : vector<100x2xf32>
    %305 = tpu.matmul %296, %304, %cst_242 {dimension_numbers = #tpu.dot_dimension_numbers<[1], [0], [0], [1], [0, 0, 1, 1], [], []>} : vector<100x100xf32>, vector<100x2xf32>, vector<100x2xf32> -> vector<100x2xf32>
    %306 = vector.extract_strided_slice %305 {offsets = [0, 0], sizes = [100, 1], strides = [1, 1]} : vector<100x2xf32> to vector<100x1xf32>
    %307 = vector.extract_strided_slice %305 {offsets = [0, 1], sizes = [100, 1], strides = [1, 1]} : vector<100x2xf32> to vector<100x1xf32>
    %308 = arith.mulf %306, %306 : vector<100x1xf32>
    %309 = arith.subf %307, %308 : vector<100x1xf32>
    %310 = vector.broadcast %306 : vector<100x1xf32> to vector<100x64xf32>
    %311 = arith.subf %295, %310 : vector<100x64xf32>
    %cst_243 = arith.constant 9.99999974E-6 : f32
    %312 = vector.broadcast %cst_243 : f32 to vector<100x1xf32>
    %313 = arith.addf %309, %312 : vector<100x1xf32>
    %314 = math.rsqrt %313 : vector<100x1xf32>
    %315 = vector.broadcast %314 : vector<100x1xf32> to vector<100x64xf32>
    %316 = arith.mulf %311, %315 : vector<100x64xf32>
    %317 = vector.broadcast %297 : vector<100x1xf32> to vector<100x64xf32>
    %318 = arith.mulf %316, %317 : vector<100x64xf32>
    %319 = vector.broadcast %298 : vector<100x1xf32> to vector<100x64xf32>
    %320 = arith.addf %318, %319 : vector<100x64xf32>
    %cst_244 = arith.constant 0.000000e+00 : f32
    %321 = vector.broadcast %cst_244 : f32 to vector<100x64xf32>
    %322 = arith.maximumf %320, %321 : vector<100x64xf32>
    %cst_245 = arith.constant dense<0.000000e+00> : vector<100x1xf32>
    %323 = tpu.matmul %322, %0, %cst_245 {dimension_numbers = #tpu.dot_dimension_numbers<[1], [0], [0], [1], [0, 0, 1, 1], [], []>} : vector<100x64xf32>, vector<64x1xf32>, vector<100x1xf32> -> vector<100x1xf32>
    %324 = tpu.transpose %323, [1, 0] : vector<100x1xf32> -> vector<1x100xf32>
    %c0_246 = arith.constant 0 : index
    %c0_247 = arith.constant 0 : index
    %325 = vector.load %arg14[%c0_246, %c0_247] : memref<100x100xf32, #tpu.memory_space<vmem>>, vector<100x100xf32>
    %cst_248 = arith.constant dense<0.000000e+00> : vector<1x100xf32>
    %326 = tpu.matmul %324, %325, %cst_248 {dimension_numbers = #tpu.dot_dimension_numbers<[1], [0], [0], [1], [0, 0, 1, 1], [], []>} : vector<1x100xf32>, vector<100x100xf32>, vector<1x100xf32> -> vector<1x100xf32>
    %c0_249 = arith.constant 0 : index
    %c0_250 = arith.constant 0 : index
    %327 = vector.load %arg15[%c0_249, %c0_250] : memref<5x100xf32, #tpu.memory_space<vmem>>, vector<1x100xf32>
    %328 = arith.addf %326, %327 : vector<1x100xf32>
    %c1_251 = arith.constant 1 : index
    %c0_252 = arith.constant 0 : index
    %329 = vector.load %arg15[%c1_251, %c0_252] : memref<5x100xf32, #tpu.memory_space<vmem>>, vector<1x100xf32>
    %c2_253 = arith.constant 2 : index
    %c0_254 = arith.constant 0 : index
    %330 = vector.load %arg15[%c2_253, %c0_254] : memref<5x100xf32, #tpu.memory_space<vmem>>, vector<1x100xf32>
    %cst_255 = arith.constant dense<0.000000e+00> : vector<1xf32>
    %331 = vector.multi_reduction <add>, %328, %cst_255 [1] : vector<1x100xf32> to vector<1xf32>
    %332 = vector.shape_cast %331 : vector<1xf32> to vector<1x1xf32>
    %cst_256 = arith.constant 1.000000e+02 : f32
    %333 = vector.broadcast %cst_256 : f32 to vector<1x1xf32>
    %334 = arith.divf %332, %333 : vector<1x1xf32>
    %335 = vector.broadcast %334 : vector<1x1xf32> to vector<1x100xf32>
    %336 = arith.subf %328, %335 : vector<1x100xf32>
    %337 = vector.broadcast %334 : vector<1x1xf32> to vector<1x100xf32>
    %338 = arith.subf %328, %337 : vector<1x100xf32>
    %339 = arith.mulf %336, %338 : vector<1x100xf32>
    %cst_257 = arith.constant dense<0.000000e+00> : vector<1xf32>
    %340 = vector.multi_reduction <add>, %339, %cst_257 [1] : vector<1x100xf32> to vector<1xf32>
    %341 = vector.shape_cast %340 : vector<1xf32> to vector<1x1xf32>
    %cst_258 = arith.constant 1.000000e+02 : f32
    %342 = vector.broadcast %cst_258 : f32 to vector<1x1xf32>
    %343 = arith.divf %341, %342 : vector<1x1xf32>
    %344 = vector.broadcast %334 : vector<1x1xf32> to vector<1x100xf32>
    %345 = arith.subf %328, %344 : vector<1x100xf32>
    %cst_259 = arith.constant 9.99999974E-6 : f32
    %346 = vector.broadcast %cst_259 : f32 to vector<1x1xf32>
    %347 = arith.addf %343, %346 : vector<1x1xf32>
    %348 = math.rsqrt %347 : vector<1x1xf32>
    %349 = vector.broadcast %348 : vector<1x1xf32> to vector<1x100xf32>
    %350 = arith.mulf %345, %349 : vector<1x100xf32>
    %351 = arith.mulf %350, %329 : vector<1x100xf32>
    %352 = arith.addf %351, %330 : vector<1x100xf32>
    %cst_260 = arith.constant 5.000000e-01 : f32
    %353 = vector.broadcast %cst_260 : f32 to vector<1x100xf32>
    %354 = arith.mulf %353, %352 : vector<1x100xf32>
    %cst_261 = arith.constant 0.707106769 : f32
    %355 = vector.broadcast %cst_261 : f32 to vector<1x100xf32>
    %356 = arith.mulf %352, %355 : vector<1x100xf32>
    %357 = math.erf %356 : vector<1x100xf32>
    %cst_262 = arith.constant 1.000000e+00 : f32
    %358 = vector.broadcast %cst_262 : f32 to vector<1x100xf32>
    %359 = arith.addf %358, %357 : vector<1x100xf32>
    %360 = arith.mulf %354, %359 : vector<1x100xf32>
    %c3_263 = arith.constant 3 : index
    %c0_264 = arith.constant 0 : index
    %361 = vector.load %arg15[%c3_263, %c0_264] : memref<5x100xf32, #tpu.memory_space<vmem>>, vector<1x100xf32>
    %c4_265 = arith.constant 4 : index
    %c0_266 = arith.constant 0 : index
    %362 = vector.load %arg15[%c4_265, %c0_266] : memref<5x100xf32, #tpu.memory_space<vmem>>, vector<1x100xf32>
    %cst_267 = arith.constant dense<0.000000e+00> : vector<1xf32>
    %363 = vector.multi_reduction <add>, %360, %cst_267 [1] : vector<1x100xf32> to vector<1xf32>
    %364 = vector.shape_cast %363 : vector<1xf32> to vector<1x1xf32>
    %cst_268 = arith.constant 1.000000e+02 : f32
    %365 = vector.broadcast %cst_268 : f32 to vector<1x1xf32>
    %366 = arith.divf %364, %365 : vector<1x1xf32>
    %367 = vector.broadcast %366 : vector<1x1xf32> to vector<1x100xf32>
    %368 = arith.subf %360, %367 : vector<1x100xf32>
    %369 = vector.broadcast %366 : vector<1x1xf32> to vector<1x100xf32>
    %370 = arith.subf %360, %369 : vector<1x100xf32>
    %371 = arith.mulf %368, %370 : vector<1x100xf32>
    %cst_269 = arith.constant dense<0.000000e+00> : vector<1xf32>
    %372 = vector.multi_reduction <add>, %371, %cst_269 [1] : vector<1x100xf32> to vector<1xf32>
    %373 = vector.shape_cast %372 : vector<1xf32> to vector<1x1xf32>
    %cst_270 = arith.constant 1.000000e+02 : f32
    %374 = vector.broadcast %cst_270 : f32 to vector<1x1xf32>
    %375 = arith.divf %373, %374 : vector<1x1xf32>
    %376 = vector.broadcast %366 : vector<1x1xf32> to vector<1x100xf32>
    %377 = arith.subf %360, %376 : vector<1x100xf32>
    %cst_271 = arith.constant 9.99999974E-6 : f32
    %378 = vector.broadcast %cst_271 : f32 to vector<1x1xf32>
    %379 = arith.addf %375, %378 : vector<1x1xf32>
    %380 = math.rsqrt %379 : vector<1x1xf32>
    %381 = vector.broadcast %380 : vector<1x1xf32> to vector<1x100xf32>
    %382 = arith.mulf %377, %381 : vector<1x100xf32>
    %383 = arith.mulf %382, %361 : vector<1x100xf32>
    %384 = arith.addf %383, %362 : vector<1x100xf32>
    %c0_272 = arith.constant 0 : index
    %c0_273 = arith.constant 0 : index
    %385 = vector.load %arg16[%c0_272, %c0_273] : memref<100x256xf32, #tpu.memory_space<vmem>>, vector<100x256xf32>
    %cst_274 = arith.constant dense<0.000000e+00> : vector<1x256xf32>
    %386 = tpu.matmul %384, %385, %cst_274 {dimension_numbers = #tpu.dot_dimension_numbers<[1], [0], [0], [1], [0, 0, 1, 1], [], []>} : vector<1x100xf32>, vector<100x256xf32>, vector<1x256xf32> -> vector<1x256xf32>
    %c0_275 = arith.constant 0 : index
    %c0_276 = arith.constant 0 : index
    %387 = vector.load %arg18[%c0_275, %c0_276] : memref<2x256xf32, #tpu.memory_space<vmem>>, vector<1x256xf32>
    %388 = arith.addf %386, %387 : vector<1x256xf32>
    %cst_277 = arith.constant 5.000000e-01 : f32
    %389 = vector.broadcast %cst_277 : f32 to vector<1x256xf32>
    %390 = arith.mulf %389, %388 : vector<1x256xf32>
    %cst_278 = arith.constant 0.707106769 : f32
    %391 = vector.broadcast %cst_278 : f32 to vector<1x256xf32>
    %392 = arith.mulf %388, %391 : vector<1x256xf32>
    %393 = math.erf %392 : vector<1x256xf32>
    %cst_279 = arith.constant 1.000000e+00 : f32
    %394 = vector.broadcast %cst_279 : f32 to vector<1x256xf32>
    %395 = arith.addf %394, %393 : vector<1x256xf32>
    %396 = arith.mulf %390, %395 : vector<1x256xf32>
    %c0_280 = arith.constant 0 : index
    %c0_281 = arith.constant 0 : index
    %397 = vector.load %arg17[%c0_280, %c0_281] : memref<256x180xf32, #tpu.memory_space<vmem>>, vector<256x180xf32>
    %cst_282 = arith.constant dense<0.000000e+00> : vector<1x180xf32>
    %398 = tpu.matmul %396, %397, %cst_282 {dimension_numbers = #tpu.dot_dimension_numbers<[1], [0], [0], [1], [0, 0, 1, 1], [], []>} : vector<1x256xf32>, vector<256x180xf32>, vector<1x180xf32> -> vector<1x180xf32>
    %c1_283 = arith.constant 1 : index
    %c0_284 = arith.constant 0 : index
    %399 = vector.load %arg18[%c1_283, %c0_284] : memref<2x256xf32, #tpu.memory_space<vmem>>, vector<1x180xf32>
    %400 = arith.addf %398, %399 : vector<1x180xf32>
    %c0_285 = arith.constant 0 : index
    %c0_286 = arith.constant 0 : index
    %c0_287 = arith.constant 0 : index
    %401 = vector.load %arg19[%c0_285, %c0_286, %c0_287] : memref<1x1x100xf32, #tpu.memory_space<vmem>>, vector<1x1x100xf32>
    %402 = vector.shape_cast %401 : vector<1x1x100xf32> to vector<1x100xf32>
    %403 = vector.shape_cast %360 : vector<1x100xf32> to vector<1x1x100xf32>
    tpu.vector_store %arg19[%c0_285, %c0_286, %c0_287], %403 {strides = array<i32>} : memref<1x1x100xf32, #tpu.memory_space<vmem>>, vector<1x1x100xf32>,
    %c0_288 = arith.constant 0 : index
    %c0_289 = arith.constant 0 : index
    %c0_290 = arith.constant 0 : index
    %404 = vector.load %arg20[%c0_288, %c0_289, %c0_290] : memref<1x1x180xf32, #tpu.memory_space<vmem>>, vector<1x1x180xf32>
    %405 = vector.shape_cast %404 : vector<1x1x180xf32> to vector<1x180xf32>
    %406 = vector.shape_cast %400 : vector<1x180xf32> to vector<1x1x180xf32>
    tpu.vector_store %arg20[%c0_288, %c0_289, %c0_290], %406 {strides = array<i32>} : memref<1x1x180xf32, #tpu.memory_space<vmem>>, vector<1x1x180xf32>,
    return
  }
  func.func @transform_0(%arg0: i32) -> (i32, i32, i32) {
    %c0_i32 = arith.constant 0 : i32
    %c0_i32_0 = arith.constant 0 : i32
    %c0_i32_1 = arith.constant 0 : i32
    return %arg0, %c0_i32, %c0_i32_0 : i32, i32, i32
  }
  func.func @transform_1(%arg0: i32) -> (i32, i32) {
    %c0_i32 = arith.constant 0 : i32
    %c0_i32_0 = arith.constant 0 : i32
    %c0_i32_1 = arith.constant 0 : i32
    return %c0_i32, %c0_i32_0 : i32, i32
  }
  func.func @transform_2(%arg0: i32) -> (i32, i32) {
    %c0_i32 = arith.constant 0 : i32
    %c0_i32_0 = arith.constant 0 : i32
    %c0_i32_1 = arith.constant 0 : i32
    return %c0_i32, %c0_i32_0 : i32, i32
  }
  func.func @transform_3(%arg0: i32) -> (i32, i32) {
    %c0_i32 = arith.constant 0 : i32
    %c0_i32_0 = arith.constant 0 : i32
    %c0_i32_1 = arith.constant 0 : i32
    return %c0_i32, %c0_i32_0 : i32, i32
  }
  func.func @transform_4(%arg0: i32) -> (i32, i32, i32) {
    %c0_i32 = arith.constant 0 : i32
    %c0_i32_0 = arith.constant 0 : i32
    %c0_i32_1 = arith.constant 0 : i32
    %c0_i32_2 = arith.constant 0 : i32
    return %c0_i32, %c0_i32_0, %c0_i32_1 : i32, i32, i32
  }
  func.func @transform_5(%arg0: i32) -> (i32, i32) {
    %c0_i32 = arith.constant 0 : i32
    %c0_i32_0 = arith.constant 0 : i32
    %c0_i32_1 = arith.constant 0 : i32
    return %c0_i32, %c0_i32_0 : i32, i32
  }
  func.func @transform_6(%arg0: i32) -> (i32, i32) {
    %c0_i32 = arith.constant 0 : i32
    %c0_i32_0 = arith.constant 0 : i32
    %c0_i32_1 = arith.constant 0 : i32
    return %c0_i32, %c0_i32_0 : i32, i32
  }
  func.func @transform_7(%arg0: i32) -> (i32, i32) {
    %c0_i32 = arith.constant 0 : i32
    %c0_i32_0 = arith.constant 0 : i32
    %c0_i32_1 = arith.constant 0 : i32
    return %c0_i32, %c0_i32_0 : i32, i32
  }
  func.func @transform_8(%arg0: i32) -> (i32, i32, i32) {
    %c0_i32 = arith.constant 0 : i32
    %c0_i32_0 = arith.constant 0 : i32
    %c0_i32_1 = arith.constant 0 : i32
    %c0_i32_2 = arith.constant 0 : i32
    return %c0_i32, %c0_i32_0, %c0_i32_1 : i32, i32, i32
  }
  func.func @transform_9(%arg0: i32) -> (i32, i32) {
    %c0_i32 = arith.constant 0 : i32
    %c0_i32_0 = arith.constant 0 : i32
    %c0_i32_1 = arith.constant 0 : i32
    return %c0_i32, %c0_i32_0 : i32, i32
  }
  func.func @transform_10(%arg0: i32) -> (i32, i32) {
    %c0_i32 = arith.constant 0 : i32
    %c0_i32_0 = arith.constant 0 : i32
    %c0_i32_1 = arith.constant 0 : i32
    return %c0_i32, %c0_i32_0 : i32, i32
  }
  func.func @transform_11(%arg0: i32) -> (i32, i32) {
    %c0_i32 = arith.constant 0 : i32
    %c0_i32_0 = arith.constant 0 : i32
    %c0_i32_1 = arith.constant 0 : i32
    return %c0_i32, %c0_i32_0 : i32, i32
  }
  func.func @transform_12(%arg0: i32) -> (i32, i32) {
    %c0_i32 = arith.constant 0 : i32
    %c0_i32_0 = arith.constant 0 : i32
    %c0_i32_1 = arith.constant 0 : i32
    return %c0_i32, %c0_i32_0 : i32, i32
  }
  func.func @transform_13(%arg0: i32) -> (i32, i32) {
    %c0_i32 = arith.constant 0 : i32
    %c0_i32_0 = arith.constant 0 : i32
    %c0_i32_1 = arith.constant 0 : i32
    return %c0_i32, %c0_i32_0 : i32, i32
  }
  func.func @transform_14(%arg0: i32) -> (i32, i32) {
    %c0_i32 = arith.constant 0 : i32
    %c0_i32_0 = arith.constant 0 : i32
    %c0_i32_1 = arith.constant 0 : i32
    return %c0_i32, %c0_i32_0 : i32, i32
  }
  func.func @transform_15(%arg0: i32) -> (i32, i32) {
    %c0_i32 = arith.constant 0 : i32
    %c0_i32_0 = arith.constant 0 : i32
    %c0_i32_1 = arith.constant 0 : i32
    return %c0_i32, %c0_i32_0 : i32, i32
  }
  func.func @transform_16(%arg0: i32) -> (i32, i32) {
    %c0_i32 = arith.constant 0 : i32
    %c0_i32_0 = arith.constant 0 : i32
    %c0_i32_1 = arith.constant 0 : i32
    return %c0_i32, %c0_i32_0 : i32, i32
  }
  func.func @transform_17(%arg0: i32) -> (i32, i32) {
    %c0_i32 = arith.constant 0 : i32
    %c0_i32_0 = arith.constant 0 : i32
    %c0_i32_1 = arith.constant 0 : i32
    return %c0_i32, %c0_i32_0 : i32, i32
  }
  func.func @transform_18(%arg0: i32) -> (i32, i32, i32) {
    %c0_i32 = arith.constant 0 : i32
    %c0_i32_0 = arith.constant 0 : i32
    %c0_i32_1 = arith.constant 0 : i32
    return %arg0, %c0_i32, %c0_i32_0 : i32, i32, i32
  }
  func.func @transform_19(%arg0: i32) -> (i32, i32, i32) {
    %c0_i32 = arith.constant 0 : i32
    %c0_i32_0 = arith.constant 0 : i32
    %c0_i32_1 = arith.constant 0 : i32
    return %arg0, %c0_i32, %c0_i32_0 : i32, i32, i32
  }
}

</mosaic_0001>

<llo_original>
// kernel: forward.1
$region0: #{forward.1}
  #allocation0 [shape = 'u32[]', space=smem, size = 0x4, offset = 0x4, fixed_abs, tag = 'smem constant byte address 0x4 - core index']
  #allocation1 [shape = 'u32[144,128]{1,0:T(1,128)}', space=vmem, size = 0x12000, scoped, tag = 'internal scratch']
  #allocation2 [shape = 'f32[25,256]{1,0:T(8,128)}', space=vmem, size = 0x8000, scoped, tag = 'scratch operand']
  #allocation3 [shape = 'f32[144,256]{1,0:T(8,128)}', space=vmem, size = 0x24000, scoped, tag = 'scratch operand']
  #allocation4 [shape = 'f32[216,256]{1,0:T(8,128)}', space=vmem, size = 0x36000, scoped, tag = 'scratch operand']
  %s0 = inlined_call_operand.vmem [shape: f32[2,1,256], index: 0, kind: input, shape index: {}]
  %s1 = inlined_call_operand.vmem [shape: f32[16,25], index: 1, kind: input, shape index: {}]
  %s2 = inlined_call_operand.vmem [shape: f32[16,3], index: 2, kind: input, shape index: {}]
  %s3 = inlined_call_operand.vmem [shape: f32[16,16], index: 3, kind: input, shape index: {}]
  %s4 = inlined_call_operand.vmem [shape: f32[25,1,256], index: 4, kind: input, shape index: {}]
  %s5 = inlined_call_operand.vmem [shape: f32[24,144], index: 5, kind: input, shape index: {}]
  %s6 = inlined_call_operand.vmem [shape: f32[24,3], index: 6, kind: input, shape index: {}]
  %s7 = inlined_call_operand.vmem [shape: f32[24,24], index: 7, kind: input, shape index: {}]
  %s8 = inlined_call_operand.vmem [shape: f32[9,1,256], index: 8, kind: input, shape index: {}]
  %s9 = inlined_call_operand.vmem [shape: f32[100,216], index: 9, kind: input, shape index: {}]
  %s10 = inlined_call_operand.vmem [shape: f32[100,3], index: 10, kind: input, shape index: {}]
  %s11 = inlined_call_operand.vmem [shape: f32[100,100], index: 11, kind: input, shape index: {}]
  %s12 = inlined_call_operand.vmem [shape: f32[256,64], index: 12, kind: input, shape index: {}]
  %s13 = inlined_call_operand.vmem [shape: f32[100,100], index: 13, kind: input, shape index: {}]
  %s14 = inlined_call_operand.vmem [shape: f32[5,100], index: 14, kind: input, shape index: {}]
  %s15 = inlined_call_operand.vmem [shape: f32[100,256], index: 15, kind: input, shape index: {}]
  %s16 = inlined_call_operand.vmem [shape: f32[256,180], index: 16, kind: input, shape index: {}]
  %s17 = inlined_call_operand.vmem [shape: f32[2,256], index: 17, kind: input, shape index: {}]
  %s18 = inlined_call_operand.hbm [shape: f32[2,1,100], index: 18, kind: output, shape index: {0}]
  %s19 = inlined_call_operand.vmem [shape: f32[2,1,180], index: 19, kind: output, shape index: {1}]
  %20 = xla_tuple %s18, %s19
  %s21 = sld [smem:[#allocation0]]
  $region113: #{forward.1} parent=0
    _
  %s23 = ssub.s32 1, %s21
  %s24 = scalar_select 0, %s23, %s21
  $region1: #{forward.1} parent=0
    #allocation5 [shape = 'u8[1024]{0}', space=vmem, size = 0x400, scoped, tag = 'output window, operand 0']
    #allocation6 [shape = 's32[2]{0}', space=sflag, size = 0x8, scoped, tag = 'scoped memory for forward.1']
    %25 = vsyncpa [#allocation6], 0
    %s26 = scalar_lea.sflag [#allocation6], 1
    %27 = vsyncpa %s26, 0
    loop: start=0, step=1, limit=4
    $region2: #{forward.1} parent=1 // loop_pre_header
      _
    $region3: #{forward.1} parent=1 // loop_header
      %s29 = sphi 0, %s33
      %p30 = scmp.ge.s32.totalorder %s29, 4
      %s39 = sphi 0, %s41
      %s42 = sphi 0, %s39
      %s43 = sphi 0, %s42
      %s59 = sphi 0, %s43
      %s63 = sphi 0, %s63
      %s65 = sphi 0, %s63
      %s66 = sphi 0, %s65
      %s80 = sphi 0, %s66
      %s84 = sphi 0, %s84
      %s86 = sphi 0, %s84
      %s87 = sphi 0, %s86
      %s101 = sphi 0, %s87
      %s105 = sphi 0, %s105
      %s107 = sphi 0, %s105
      %s108 = sphi 0, %s107
      %s122 = sphi 0, %s108
      %s126 = sphi 0, %s126
      %s128 = sphi 0, %s126
      %s129 = sphi 0, %s128
      %s143 = sphi 0, %s129
      %s147 = sphi 0, %s147
      %s149 = sphi 0, %s147
      %s150 = sphi 0, %s149
      %s164 = sphi 0, %s150
      %s168 = sphi 0, %s168
      %s170 = sphi 0, %s168
      %s171 = sphi 0, %s170
      %s185 = sphi 0, %s171
      %s189 = sphi 0, %s189
      %s191 = sphi 0, %s189
      %s192 = sphi 0, %s191
      %s206 = sphi 0, %s192
      %s210 = sphi 0, %s210
      %s212 = sphi 0, %s210
      %s213 = sphi 0, %s212
      %s227 = sphi 0, %s213
      %s231 = sphi 0, %s231
      %s233 = sphi 0, %s231
      %s234 = sphi 0, %s233
      %s248 = sphi 0, %s234
      %s252 = sphi 0, %s252
      %s254 = sphi 0, %s252
      %s255 = sphi 0, %s254
      %s269 = sphi 0, %s255
      %s273 = sphi 0, %s273
      %s275 = sphi 0, %s273
      %s276 = sphi 0, %s275
      %s290 = sphi 0, %s276
      %s294 = sphi 0, %s294
      %s296 = sphi 0, %s294
      %s297 = sphi 0, %s296
      %s311 = sphi 0, %s297
      %s315 = sphi 0, %s315
      %s317 = sphi 0, %s315
      %s318 = sphi 0, %s317
      %s332 = sphi 0, %s318
      %s336 = sphi 0, %s336
      %s338 = sphi 0, %s336
      %s339 = sphi 0, %s338
      %s353 = sphi 0, %s339
      %s357 = sphi 0, %s357
      %s359 = sphi 0, %s357
      %s360 = sphi 0, %s359
      %s374 = sphi 0, %s360
      %s378 = sphi 0, %s378
      %s380 = sphi 0, %s378
      %s381 = sphi 0, %s380
      %s395 = sphi 0, %s381
      %s399 = sphi 0, %s399
      %s401 = sphi 0, %s399
      %s402 = sphi 0, %s401
      %s416 = sphi 0, %s402
      %s422 = sphi 0, %s424
      %s425 = sphi 0, %s422
      %s426 = sphi 0, %s425
      %s442 = sphi 0, %s426
      %s448 = sphi 0, %s450
      %s451 = sphi 0, %s448
      %s452 = sphi 0, %s451
      %s468 = sphi 0, %s452
    $region4: #{forward.1} parent=1 // loop_header_branch
      %32 = sbr.rel (%p30) target = $region8
    $region5: #{forward.1} parent=1 // loop_body
      %s34 = ssub.s32 %s29, 1
      %s35 = ssub.s32 %s29, 2
      %s36 = sadd.s32 %s29, 1
      %s37 = ssub.s32 %s29, %s36
      %p38 = scmp.eq.s32.totalorder %s37, 0
      %s40 = sadd.s32 %s39, 1
      %s41 = scalar_select %p38, %s39, %s40
      %p44 = pneg %p38
      %p45 = scmp.eq.s32.totalorder %s29, 1
      %p46 = por %p44, %p45
      %p47 = scmp.ne.s32.totalorder %s39, %s42
      %p48 = scmp.eq.s32.totalorder %s29, 0
      %p49 = por %p47, %p48
      %p50 = scmp.ne.s32.totalorder %s39, %s42
      %p51 = scmp.eq.s32.totalorder %s34, 1
      %p52 = por %p50, %p51
      %p53 = scmp.ne.s32.totalorder %s42, %s43
      %p54 = scmp.eq.s32.totalorder %s34, 0
      %p55 = por %p53, %p54
      %p56 = scmp.ne.s32.totalorder %s42, %s43
      %p57 = scmp.eq.s32.totalorder %s35, 1
      %p58 = por %p56, %p57
      %p60 = scmp.ne.s32.totalorder %s43, %s59
      %p61 = scmp.eq.s32.totalorder %s35, 0
      %p62 = por %p60, %p61
      %s64 = sadd.s32 %s63, 1
      %p67 = scmp.eq.s32.totalorder %s29, 1
      %p68 = scmp.ne.s32.totalorder %s63, %s65
      %p69 = scmp.eq.s32.totalorder %s29, 0
      %p70 = por %p68, %p69
      %p71 = scmp.ne.s32.totalorder %s63, %s65
      %p72 = scmp.eq.s32.totalorder %s34, 1
      %p73 = por %p71, %p72
      %p74 = scmp.ne.s32.totalorder %s65, %s66
      %p75 = scmp.eq.s32.totalorder %s34, 0
      %p76 = por %p74, %p75
      %p77 = scmp.ne.s32.totalorder %s65, %s66
      %p78 = scmp.eq.s32.totalorder %s35, 1
      %p79 = por %p77, %p78
      %p81 = scmp.ne.s32.totalorder %s66, %s80
      %p82 = scmp.eq.s32.totalorder %s35, 0
      %p83 = por %p81, %p82
      %s85 = sadd.s32 %s84, 1
      %p88 = scmp.eq.s32.totalorder %s29, 1
      %p89 = scmp.ne.s32.totalorder %s84, %s86
      %p90 = scmp.eq.s32.totalorder %s29, 0
      %p91 = por %p89, %p90
      %p92 = scmp.ne.s32.totalorder %s84, %s86
      %p93 = scmp.eq.s32.totalorder %s34, 1
      %p94 = por %p92, %p93
      %p95 = scmp.ne.s32.totalorder %s86, %s87
      %p96 = scmp.eq.s32.totalorder %s34, 0
      %p97 = por %p95, %p96
      %p98 = scmp.ne.s32.totalorder %s86, %s87
      %p99 = scmp.eq.s32.totalorder %s35, 1
      %p100 = por %p98, %p99
      %p102 = scmp.ne.s32.totalorder %s87, %s101
      %p103 = scmp.eq.s32.totalorder %s35, 0
      %p104 = por %p102, %p103
      %s106 = sadd.s32 %s105, 1
      %p109 = scmp.eq.s32.totalorder %s29, 1
      %p110 = scmp.ne.s32.totalorder %s105, %s107
      %p111 = scmp.eq.s32.totalorder %s29, 0
      %p112 = por %p110, %p111
      %p113 = scmp.ne.s32.totalorder %s105, %s107
      %p114 = scmp.eq.s32.totalorder %s34, 1
      %p115 = por %p113, %p114
      %p116 = scmp.ne.s32.totalorder %s107, %s108
      %p117 = scmp.eq.s32.totalorder %s34, 0
      %p118 = por %p116, %p117
      %p119 = scmp.ne.s32.totalorder %s107, %s108
      %p120 = scmp.eq.s32.totalorder %s35, 1
      %p121 = por %p119, %p120
      %p123 = scmp.ne.s32.totalorder %s108, %s122
      %p124 = scmp.eq.s32.totalorder %s35, 0
      %p125 = por %p123, %p124
      %s127 = sadd.s32 %s126, 1
      %p130 = scmp.eq.s32.totalorder %s29, 1
      %p131 = scmp.ne.s32.totalorder %s126, %s128
      %p132 = scmp.eq.s32.totalorder %s29, 0
      %p133 = por %p131, %p132
      %p134 = scmp.ne.s32.totalorder %s126, %s128
      %p135 = scmp.eq.s32.totalorder %s34, 1
      %p136 = por %p134, %p135
      %p137 = scmp.ne.s32.totalorder %s128, %s129
      %p138 = scmp.eq.s32.totalorder %s34, 0
      %p139 = por %p137, %p138
      %p140 = scmp.ne.s32.totalorder %s128, %s129
      %p141 = scmp.eq.s32.totalorder %s35, 1
      %p142 = por %p140, %p141
      %p144 = scmp.ne.s32.totalorder %s129, %s143
      %p145 = scmp.eq.s32.totalorder %s35, 0
      %p146 = por %p144, %p145
      %s148 = sadd.s32 %s147, 1
      %p151 = scmp.eq.s32.totalorder %s29, 1
      %p152 = scmp.ne.s32.totalorder %s147, %s149
      %p153 = scmp.eq.s32.totalorder %s29, 0
      %p154 = por %p152, %p153
      %p155 = scmp.ne.s32.totalorder %s147, %s149
      %p156 = scmp.eq.s32.totalorder %s34, 1
      %p157 = por %p155, %p156
      %p158 = scmp.ne.s32.totalorder %s149, %s150
      %p159 = scmp.eq.s32.totalorder %s34, 0
      %p160 = por %p158, %p159
      %p161 = scmp.ne.s32.totalorder %s149, %s150
      %p162 = scmp.eq.s32.totalorder %s35, 1
      %p163 = por %p161, %p162
      %p165 = scmp.ne.s32.totalorder %s150, %s164
      %p166 = scmp.eq.s32.totalorder %s35, 0
      %p167 = por %p165, %p166
      %s169 = sadd.s32 %s168, 1
      %p172 = scmp.eq.s32.totalorder %s29, 1
      %p173 = scmp.ne.s32.totalorder %s168, %s170
      %p174 = scmp.eq.s32.totalorder %s29, 0
      %p175 = por %p173, %p174
      %p176 = scmp.ne.s32.totalorder %s168, %s170
      %p177 = scmp.eq.s32.totalorder %s34, 1
      %p178 = por %p176, %p177
      %p179 = scmp.ne.s32.totalorder %s170, %s171
      %p180 = scmp.eq.s32.totalorder %s34, 0
      %p181 = por %p179, %p180
      %p182 = scmp.ne.s32.totalorder %s170, %s171
      %p183 = scmp.eq.s32.totalorder %s35, 1
      %p184 = por %p182, %p183
      %p186 = scmp.ne.s32.totalorder %s171, %s185
      %p187 = scmp.eq.s32.totalorder %s35, 0
      %p188 = por %p186, %p187
      %s190 = sadd.s32 %s189, 1
      %p193 = scmp.eq.s32.totalorder %s29, 1
      %p194 = scmp.ne.s32.totalorder %s189, %s191
      %p195 = scmp.eq.s32.totalorder %s29, 0
      %p196 = por %p194, %p195
      %p197 = scmp.ne.s32.totalorder %s189, %s191
      %p198 = scmp.eq.s32.totalorder %s34, 1
      %p199 = por %p197, %p198
      %p200 = scmp.ne.s32.totalorder %s191, %s192
      %p201 = scmp.eq.s32.totalorder %s34, 0
      %p202 = por %p200, %p201
      %p203 = scmp.ne.s32.totalorder %s191, %s192
      %p204 = scmp.eq.s32.totalorder %s35, 1
      %p205 = por %p203, %p204
      %p207 = scmp.ne.s32.totalorder %s192, %s206
      %p208 = scmp.eq.s32.totalorder %s35, 0
      %p209 = por %p207, %p208
      %s211 = sadd.s32 %s210, 1
      %p214 = scmp.eq.s32.totalorder %s29, 1
      %p215 = scmp.ne.s32.totalorder %s210, %s212
      %p216 = scmp.eq.s32.totalorder %s29, 0
      %p217 = por %p215, %p216
      %p218 = scmp.ne.s32.totalorder %s210, %s212
      %p219 = scmp.eq.s32.totalorder %s34, 1
      %p220 = por %p218, %p219
      %p221 = scmp.ne.s32.totalorder %s212, %s213
      %p222 = scmp.eq.s32.totalorder %s34, 0
      %p223 = por %p221, %p222
      %p224 = scmp.ne.s32.totalorder %s212, %s213
      %p225 = scmp.eq.s32.totalorder %s35, 1
      %p226 = por %p224, %p225
      %p228 = scmp.ne.s32.totalorder %s213, %s227
      %p229 = scmp.eq.s32.totalorder %s35, 0
      %p230 = por %p228, %p229
      %s232 = sadd.s32 %s231, 1
      %p235 = scmp.eq.s32.totalorder %s29, 1
      %p236 = scmp.ne.s32.totalorder %s231, %s233
      %p237 = scmp.eq.s32.totalorder %s29, 0
      %p238 = por %p236, %p237
      %p239 = scmp.ne.s32.totalorder %s231, %s233
      %p240 = scmp.eq.s32.totalorder %s34, 1
      %p241 = por %p239, %p240
      %p242 = scmp.ne.s32.totalorder %s233, %s234
      %p243 = scmp.eq.s32.totalorder %s34, 0
      %p244 = por %p242, %p243
      %p245 = scmp.ne.s32.totalorder %s233, %s234
      %p246 = scmp.eq.s32.totalorder %s35, 1
      %p247 = por %p245, %p246
      %p249 = scmp.ne.s32.totalorder %s234, %s248
      %p250 = scmp.eq.s32.totalorder %s35, 0
      %p251 = por %p249, %p250
      %s253 = sadd.s32 %s252, 1
      %p256 = scmp.eq.s32.totalorder %s29, 1
      %p257 = scmp.ne.s32.totalorder %s252, %s254
      %p258 = scmp.eq.s32.totalorder %s29, 0
      %p259 = por %p257, %p258
      %p260 = scmp.ne.s32.totalorder %s252, %s254
      %p261 = scmp.eq.s32.totalorder %s34, 1
      %p262 = por %p260, %p261
      %p263 = scmp.ne.s32.totalorder %s254, %s255
      %p264 = scmp.eq.s32.totalorder %s34, 0
      %p265 = por %p263, %p264
      %p266 = scmp.ne.s32.totalorder %s254, %s255
      %p267 = scmp.eq.s32.totalorder %s35, 1
      %p268 = por %p266, %p267
      %p270 = scmp.ne.s32.totalorder %s255, %s269
      %p271 = scmp.eq.s32.totalorder %s35, 0
      %p272 = por %p270, %p271
      %s274 = sadd.s32 %s273, 1
      %p277 = scmp.eq.s32.totalorder %s29, 1
      %p278 = scmp.ne.s32.totalorder %s273, %s275
      %p279 = scmp.eq.s32.totalorder %s29, 0
      %p280 = por %p278, %p279
      %p281 = scmp.ne.s32.totalorder %s273, %s275
      %p282 = scmp.eq.s32.totalorder %s34, 1
      %p283 = por %p281, %p282
      %p284 = scmp.ne.s32.totalorder %s275, %s276
      %p285 = scmp.eq.s32.totalorder %s34, 0
      %p286 = por %p284, %p285
      %p287 = scmp.ne.s32.totalorder %s275, %s276
      %p288 = scmp.eq.s32.totalorder %s35, 1
      %p289 = por %p287, %p288
      %p291 = scmp.ne.s32.totalorder %s276, %s290
      %p292 = scmp.eq.s32.totalorder %s35, 0
      %p293 = por %p291, %p292
      %s295 = sadd.s32 %s294, 1
      %p298 = scmp.eq.s32.totalorder %s29, 1
      %p299 = scmp.ne.s32.totalorder %s294, %s296
      %p300 = scmp.eq.s32.totalorder %s29, 0
      %p301 = por %p299, %p300
      %p302 = scmp.ne.s32.totalorder %s294, %s296
      %p303 = scmp.eq.s32.totalorder %s34, 1
      %p304 = por %p302, %p303
      %p305 = scmp.ne.s32.totalorder %s296, %s297
      %p306 = scmp.eq.s32.totalorder %s34, 0
      %p307 = por %p305, %p306
      %p308 = scmp.ne.s32.totalorder %s296, %s297
      %p309 = scmp.eq.s32.totalorder %s35, 1
      %p310 = por %p308, %p309
      %p312 = scmp.ne.s32.totalorder %s297, %s311
      %p313 = scmp.eq.s32.totalorder %s35, 0
      %p314 = por %p312, %p313
      %s316 = sadd.s32 %s315, 1
      %p319 = scmp.eq.s32.totalorder %s29, 1
      %p320 = scmp.ne.s32.totalorder %s315, %s317
      %p321 = scmp.eq.s32.totalorder %s29, 0
      %p322 = por %p320, %p321
      %p323 = scmp.ne.s32.totalorder %s315, %s317
      %p324 = scmp.eq.s32.totalorder %s34, 1
      %p325 = por %p323, %p324
      %p326 = scmp.ne.s32.totalorder %s317, %s318
      %p327 = scmp.eq.s32.totalorder %s34, 0
      %p328 = por %p326, %p327
      %p329 = scmp.ne.s32.totalorder %s317, %s318
      %p330 = scmp.eq.s32.totalorder %s35, 1
      %p331 = por %p329, %p330
      %p333 = scmp.ne.s32.totalorder %s318, %s332
      %p334 = scmp.eq.s32.totalorder %s35, 0
      %p335 = por %p333, %p334
      %s337 = sadd.s32 %s336, 1
      %p340 = scmp.eq.s32.totalorder %s29, 1
      %p341 = scmp.ne.s32.totalorder %s336, %s338
      %p342 = scmp.eq.s32.totalorder %s29, 0
      %p343 = por %p341, %p342
      %p344 = scmp.ne.s32.totalorder %s336, %s338
      %p345 = scmp.eq.s32.totalorder %s34, 1
      %p346 = por %p344, %p345
      %p347 = scmp.ne.s32.totalorder %s338, %s339
      %p348 = scmp.eq.s32.totalorder %s34, 0
      %p349 = por %p347, %p348
      %p350 = scmp.ne.s32.totalorder %s338, %s339
      %p351 = scmp.eq.s32.totalorder %s35, 1
      %p352 = por %p350, %p351
      %p354 = scmp.ne.s32.totalorder %s339, %s353
      %p355 = scmp.eq.s32.totalorder %s35, 0
      %p356 = por %p354, %p355
      %s358 = sadd.s32 %s357, 1
      %p361 = scmp.eq.s32.totalorder %s29, 1
      %p362 = scmp.ne.s32.totalorder %s357, %s359
      %p363 = scmp.eq.s32.totalorder %s29, 0
      %p364 = por %p362, %p363
      %p365 = scmp.ne.s32.totalorder %s357, %s359
      %p366 = scmp.eq.s32.totalorder %s34, 1
      %p367 = por %p365, %p366
      %p368 = scmp.ne.s32.totalorder %s359, %s360
      %p369 = scmp.eq.s32.totalorder %s34, 0
      %p370 = por %p368, %p369
      %p371 = scmp.ne.s32.totalorder %s359, %s360
      %p372 = scmp.eq.s32.totalorder %s35, 1
      %p373 = por %p371, %p372
      %p375 = scmp.ne.s32.totalorder %s360, %s374
      %p376 = scmp.eq.s32.totalorder %s35, 0
      %p377 = por %p375, %p376
      %s379 = sadd.s32 %s378, 1
      %p382 = scmp.eq.s32.totalorder %s29, 1
      %p383 = scmp.ne.s32.totalorder %s378, %s380
      %p384 = scmp.eq.s32.totalorder %s29, 0
      %p385 = por %p383, %p384
      %p386 = scmp.ne.s32.totalorder %s378, %s380
      %p387 = scmp.eq.s32.totalorder %s34, 1
      %p388 = por %p386, %p387
      %p389 = scmp.ne.s32.totalorder %s380, %s381
      %p390 = scmp.eq.s32.totalorder %s34, 0
      %p391 = por %p389, %p390
      %p392 = scmp.ne.s32.totalorder %s380, %s381
      %p393 = scmp.eq.s32.totalorder %s35, 1
      %p394 = por %p392, %p393
      %p396 = scmp.ne.s32.totalorder %s381, %s395
      %p397 = scmp.eq.s32.totalorder %s35, 0
      %p398 = por %p396, %p397
      %s400 = sadd.s32 %s399, 1
      %p403 = scmp.eq.s32.totalorder %s29, 1
      %p404 = scmp.ne.s32.totalorder %s399, %s401
      %p405 = scmp.eq.s32.totalorder %s29, 0
      %p406 = por %p404, %p405
      %p407 = scmp.ne.s32.totalorder %s399, %s401
      %p408 = scmp.eq.s32.totalorder %s34, 1
      %p409 = por %p407, %p408
      %p410 = scmp.ne.s32.totalorder %s401, %s402
      %p411 = scmp.eq.s32.totalorder %s34, 0
      %p412 = por %p410, %p411
      %p413 = scmp.ne.s32.totalorder %s401, %s402
      %p414 = scmp.eq.s32.totalorder %s35, 1
      %p415 = por %p413, %p414
      %p417 = scmp.ne.s32.totalorder %s402, %s416
      %p418 = scmp.eq.s32.totalorder %s35, 0
      %p419 = por %p417, %p418
      %s420 = ssub.s32 %s29, %s36
      %p421 = scmp.eq.s32.totalorder %s420, 0
      %s423 = sadd.s32 %s422, 1
      %s424 = scalar_select %p421, %s422, %s423
      %p427 = pneg %p421
      %p428 = scmp.eq.s32.totalorder %s29, 1
      %p429 = por %p427, %p428
      %p430 = scmp.ne.s32.totalorder %s422, %s425
      %p431 = scmp.eq.s32.totalorder %s29, 0
      %p432 = por %p430, %p431
      %p433 = scmp.ne.s32.totalorder %s422, %s425
      %p434 = scmp.eq.s32.totalorder %s34, 1
      %p435 = por %p433, %p434
      %p436 = scmp.ne.s32.totalorder %s425, %s426
      %p437 = scmp.eq.s32.totalorder %s34, 0
      %p438 = por %p436, %p437
      %p439 = scmp.ne.s32.totalorder %s425, %s426
      %p440 = scmp.eq.s32.totalorder %s35, 1
      %p441 = por %p439, %p440
      %p443 = scmp.ne.s32.totalorder %s426, %s442
      %p444 = scmp.eq.s32.totalorder %s35, 0
      %p445 = por %p443, %p444
      %s446 = ssub.s32 %s29, %s36
      %p447 = scmp.eq.s32.totalorder %s446, 0
      %s449 = sadd.s32 %s448, 1
      %s450 = scalar_select %p447, %s448, %s449
      %p453 = pneg %p447
      %p454 = scmp.eq.s32.totalorder %s29, 1
      %p455 = por %p453, %p454
      %p456 = scmp.ne.s32.totalorder %s448, %s451
      %p457 = scmp.eq.s32.totalorder %s29, 0
      %p458 = por %p456, %p457
      %p459 = scmp.ne.s32.totalorder %s448, %s451
      %p460 = scmp.eq.s32.totalorder %s34, 1
      %p461 = por %p459, %p460
      %p462 = scmp.ne.s32.totalorder %s451, %s452
      %p463 = scmp.eq.s32.totalorder %s34, 0
      %p464 = por %p462, %p463
      %p465 = scmp.ne.s32.totalorder %s451, %s452
      %p466 = scmp.eq.s32.totalorder %s35, 1
      %p467 = por %p465, %p466
      %p469 = scmp.ne.s32.totalorder %s452, %s468
      %p470 = scmp.eq.s32.totalorder %s35, 0
      %p471 = por %p469, %p470
      %p472 = scmp.le.s32.totalorder 1, %s29
      %p473 = scmp.lt.s32.totalorder %s29, 3
      %p474 = pnand %p472, %p473
      %p475 = pneg %p474
      // Predicated region
      $region9: #{forward.1} parent=5 // pred_check
        _
      $region10: #{forward.1} parent=5 // pred_check_branch
        %477 = sbr.rel (%p474) target = $region12
      $region11: #{forward.1} parent=5 // pred_region
        %s478 = ssub.s32 %s29, 1
        // Predicated region
        $region13: #{forward.1} parent=11 // pred_check
          %p479 = pneg %p76
        $region14: #{forward.1} parent=11 // pred_check_branch
          %481 = sbr.rel (%p479) target = $region16
        $region15: #{forward.1} parent=11 // pred_region
          _
        $region16: #{forward.1} parent=11 // pred_fallthru
          _
        // Predicated region
        $region17: #{forward.1} parent=11 // pred_check
          %p482 = pneg %p97
        $region18: #{forward.1} parent=11 // pred_check_branch
          %484 = sbr.rel (%p482) target = $region20
        $region19: #{forward.1} parent=11 // pred_region
          _
        $region20: #{forward.1} parent=11 // pred_fallthru
          _
        // Predicated region
        $region21: #{forward.1} parent=11 // pred_check
          %p485 = pneg %p118
        $region22: #{forward.1} parent=11 // pred_check_branch
          %487 = sbr.rel (%p485) target = $region24
        $region23: #{forward.1} parent=11 // pred_region
          _
        $region24: #{forward.1} parent=11 // pred_fallthru
          _
        // Predicated region
        $region25: #{forward.1} parent=11 // pred_check
          %p488 = pneg %p139
        $region26: #{forward.1} parent=11 // pred_check_branch
          %490 = sbr.rel (%p488) target = $region28
        $region27: #{forward.1} parent=11 // pred_region
          _
        $region28: #{forward.1} parent=11 // pred_fallthru
          _
        // Predicated region
        $region29: #{forward.1} parent=11 // pred_check
          %p491 = pneg %p160
        $region30: #{forward.1} parent=11 // pred_check_branch
          %493 = sbr.rel (%p491) target = $region32
        $region31: #{forward.1} parent=11 // pred_region
          _
        $region32: #{forward.1} parent=11 // pred_fallthru
          _
        // Predicated region
        $region33: #{forward.1} parent=11 // pred_check
          %p494 = pneg %p181
        $region34: #{forward.1} parent=11 // pred_check_branch
          %496 = sbr.rel (%p494) target = $region36
        $region35: #{forward.1} parent=11 // pred_region
          _
        $region36: #{forward.1} parent=11 // pred_fallthru
          _
        // Predicated region
        $region37: #{forward.1} parent=11 // pred_check
          %p497 = pneg %p202
        $region38: #{forward.1} parent=11 // pred_check_branch
          %499 = sbr.rel (%p497) target = $region40
        $region39: #{forward.1} parent=11 // pred_region
          _
        $region40: #{forward.1} parent=11 // pred_fallthru
          _
        // Predicated region
        $region41: #{forward.1} parent=11 // pred_check
          %p500 = pneg %p223
        $region42: #{forward.1} parent=11 // pred_check_branch
          %502 = sbr.rel (%p500) target = $region44
        $region43: #{forward.1} parent=11 // pred_region
          _
        $region44: #{forward.1} parent=11 // pred_fallthru
          _
        // Predicated region
        $region45: #{forward.1} parent=11 // pred_check
          %p503 = pneg %p244
        $region46: #{forward.1} parent=11 // pred_check_branch
          %505 = sbr.rel (%p503) target = $region48
        $region47: #{forward.1} parent=11 // pred_region
          _
        $region48: #{forward.1} parent=11 // pred_fallthru
          _
        // Predicated region
        $region49: #{forward.1} parent=11 // pred_check
          %p506 = pneg %p265
        $region50: #{forward.1} parent=11 // pred_check_branch
          %508 = sbr.rel (%p506) target = $region52
        $region51: #{forward.1} parent=11 // pred_region
          _
        $region52: #{forward.1} parent=11 // pred_fallthru
          _
        // Predicated region
        $region53: #{forward.1} parent=11 // pred_check
          %p509 = pneg %p286
        $region54: #{forward.1} parent=11 // pred_check_branch
          %511 = sbr.rel (%p509) target = $region56
        $region55: #{forward.1} parent=11 // pred_region
          _
        $region56: #{forward.1} parent=11 // pred_fallthru
          _
        // Predicated region
        $region57: #{forward.1} parent=11 // pred_check
          %p512 = pneg %p307
        $region58: #{forward.1} parent=11 // pred_check_branch
          %514 = sbr.rel (%p512) target = $region60
        $region59: #{forward.1} parent=11 // pred_region
          _
        $region60: #{forward.1} parent=11 // pred_fallthru
          _
        // Predicated region
        $region61: #{forward.1} parent=11 // pred_check
          %p515 = pneg %p328
        $region62: #{forward.1} parent=11 // pred_check_branch
          %517 = sbr.rel (%p515) target = $region64
        $region63: #{forward.1} parent=11 // pred_region
          _
        $region64: #{forward.1} parent=11 // pred_fallthru
          _
        // Predicated region
        $region65: #{forward.1} parent=11 // pred_check
          %p518 = pneg %p349
        $region66: #{forward.1} parent=11 // pred_check_branch
          %520 = sbr.rel (%p518) target = $region68
        $region67: #{forward.1} parent=11 // pred_region
          _
        $region68: #{forward.1} parent=11 // pred_fallthru
          _
        // Predicated region
        $region69: #{forward.1} parent=11 // pred_check
          %p521 = pneg %p370
        $region70: #{forward.1} parent=11 // pred_check_branch
          %523 = sbr.rel (%p521) target = $region72
        $region71: #{forward.1} parent=11 // pred_region
          _
        $region72: #{forward.1} parent=11 // pred_fallthru
          _
        // Predicated region
        $region73: #{forward.1} parent=11 // pred_check
          %p524 = pneg %p391
        $region74: #{forward.1} parent=11 // pred_check_branch
          %526 = sbr.rel (%p524) target = $region76
        $region75: #{forward.1} parent=11 // pred_region
          _
        $region76: #{forward.1} parent=11 // pred_fallthru
          _
        // Predicated region
        $region77: #{forward.1} parent=11 // pred_check
          %p527 = pneg %p412
        $region78: #{forward.1} parent=11 // pred_check_branch
          %529 = sbr.rel (%p527) target = $region80
        $region79: #{forward.1} parent=11 // pred_region
          _
        $region80: #{forward.1} parent=11 // pred_fallthru
          _
      $region12: #{forward.1} parent=5 // pred_fallthru
        _
      %p530 = scmp.lt.s32.totalorder %s29, 2
      // Predicated region
      $region81: #{forward.1} parent=5 // pred_check
        %p531 = pneg %p530
      $region82: #{forward.1} parent=5 // pred_check_branch
        %533 = sbr.rel (%p531) target = $region84
      $region83: #{forward.1} parent=5 // pred_region
        // Predicated region
        $region85: #{forward.1} parent=83 // pred_check
          %p534 = pneg %p49
        $region86: #{forward.1} parent=83 // pred_check_branch
          %536 = sbr.rel (%p534) target = $region88
        $region87: #{forward.1} parent=83 // pred_region
          %p537 = scmp.lt.s32.totalorder %s29, 1
          %s538 = scalar_select %p537, %s29, 1
          %s539 = smul.addr %s538, 2
          %s540 = scalar_lea.vmem %s0, %s539
        $region88: #{forward.1} parent=83 // pred_fallthru
          _
      $region84: #{forward.1} parent=5 // pred_fallthru
        _
      %p541 = scmp.le.s32.totalorder 1, %s29
      %p542 = scmp.lt.s32.totalorder %s29, 3
      %p543 = pnand %p541, %p542
      %p544 = pneg %p543
      // Predicated region
      $region89: #{forward.1} parent=5 // pred_check
        _
      $region90: #{forward.1} parent=5 // pred_check_branch
        %546 = sbr.rel (%p543) target = $region92
      $region91: #{forward.1} parent=5 // pred_region
        %s547 = ssub.s32 %s29, 1
        %p548 = scmp.lt.s32.totalorder %s34, 1
        %s549 = scalar_select %p548, %s34, 1
        %s550 = smul.addr %s549, 2
        %s551 = scalar_lea.vmem %s0, %s550
        %p552 = pneg %p55
        %p553 = pneg %p52
        %p554 = pneg %p76
        %p555 = pneg %p73
        %p556 = pneg %p97
        %p557 = pneg %p94
        %p558 = pneg %p118
        %p559 = pneg %p115
        %p560 = pneg %p139
        %p561 = pneg %p136
        %p562 = pneg %p160
        %p563 = pneg %p157
        %p564 = pneg %p181
        %p565 = pneg %p178
        %p566 = pneg %p202
        %p567 = pneg %p199
        %p568 = pneg %p223
        %p569 = pneg %p220
        %p570 = pneg %p244
        %p571 = pneg %p241
        %p572 = pneg %p265
        %p573 = pneg %p262
        %p574 = pneg %p286
        %p575 = pneg %p283
        %p576 = pneg %p307
        %p577 = pneg %p304
        %p578 = pneg %p328
        %p579 = pneg %p325
        %p580 = pneg %p349
        %p581 = pneg %p346
        %p582 = pneg %p370
        %p583 = pneg %p367
        %p584 = pneg %p391
        %p585 = pneg %p388
        %p586 = pneg %p412
        %p587 = pneg %p409
        %p588 = pneg %p438
        %p589 = pneg %p435
        %s590 = sand.u32 %s425, 1
        %s591 = scalar_lea.sflag [#allocation6], %s590
        %s592 = sand.u32 %s425, 1
        %s593 = scalar_lea.vmem [#allocation5], %s592
        %p594 = pneg %p464
        %p595 = pneg %p461
        %p596 = scmp.lt.s32.totalorder %s34, 1
        %s597 = scalar_select %p596, %s34, 1
        %s598 = smul.addr %s597, 2
        %s599 = scalar_lea.vmem %s19, %s598
        %p600 = scmp.lt.s32.totalorder %s34, 1
        %s601 = scalar_select %p600, %s34, 1
        %s602 = smul.addr %s601, 2
        %s603 = scalar_lea.vmem %s0, %s602
        %p604 = scmp.lt.s32.totalorder %s34, 1
        %s605 = scalar_select %p604, %s34, 1
        %s606 = smul.addr %s605, 2
        %s607 = scalar_lea.vmem %s19, %s606
        %v608 = vld [vmem:[%s603] sm:$0x3]
        %v610 = vlaneseq
        %v611 = vshrl.u32 %v610, 7
        %v612 = vsub.s32 0, %v611
        %v613 = vrot.slane %v608, %v612
        %v614 = vlaneseq
        %v615 = vshrl.u32 %v614, 7
        %v616 = vsub.s32 1, %v615
        %v617 = vrot.slane %v608, %v616
        %620 = vrot.lane.b32.xlu0 %v613, 34
        %v621 = vpop.permute.xlu0 %620
        %622 = vrot.lane.b32.xlu0 %v617, 34
        %v623 = vpop.permute.xlu0 %622
        %v624 = vlaneseq
        %v625 = vand.u32 %v624, 127
        %vm626 = vcmp.lt.s32.totalorder %v625, 34
        %v627 = vsel %vm626, %v621, %v623
        %v628 = vsel %vm626, %v623, %v621
        %v629 = vld [vmem:[%s4] sm:$0x3]
        %v631 = vlaneseq
        %v632 = vshrl.u32 %v631, 7
        %v633 = vsub.s32 0, %v632
        %v634 = vrot.slane %v629, %v633
        %v635 = vlaneseq
        %v636 = vshrl.u32 %v635, 7
        %v637 = vsub.s32 1, %v636
        %v638 = vrot.slane %v629, %v637
        %v641 = vmul.f32 %v628, %v634
        %v642 = vmul.f32 %v627, %v638
        %v645 = vcombine.low %v641, %v642
        %v647 = vunpack.c.l.s4 1966171168
        %v648 = vunpack.c.0.s8 %v647
        %v649 = vlaneseq
        %v650 = vshrl.u32 %v649, 7
        %v651 = vsub.s32 %v648, %v650
        %v652 = vrot.slane %v645, %v651
        %v654 = vunpack.c.l.s4 1966171168
        %v655 = vunpack.c.0.s8 %v654
        %v656 = vlaneseq
        %v657 = vshrl.u32 %v656, 7
        %v658 = vsub.s32 %v655, %v657
        %v659 = vrot.slane %v652, %v658
        %v661 = vlaneseq
        %vm662 = vcmp.ge.s32.totalorder %v661, 0
        %vm663 = vcmp.lt.s32.totalorder %v661, 256
        %vm664 = vmand %vm662, %vm663
        %665 = vst.msk [vmem:[#allocation2] ss:$8 sm:$0x3] %vm664, %v659
        %666 = vst.msk [vmem:[#allocation2] ss:$8 sm:$0x0] %vm664, %v659
        %667 = vrot.lane.b32.xlu0 %v613, 33
        %v668 = vpop.permute.xlu0 %667
        %669 = vrot.lane.b32.xlu0 %v617, 33
        %v670 = vpop.permute.xlu0 %669
        %vm671 = vcmp.lt.s32.totalorder %v625, 33
        %v672 = vsel %vm671, %v668, %v670
        %v673 = vsel %vm671, %v670, %v668
        %s674 = scalar_lea.vmem %s4, 2
        %v675 = vld [vmem:[%s674] sm:$0x3]
        %v677 = vlaneseq
        %v678 = vshrl.u32 %v677, 7
        %v679 = vsub.s32 0, %v678
        %v680 = vrot.slane %v675, %v679
        %v681 = vlaneseq
        %v682 = vshrl.u32 %v681, 7
        %v683 = vsub.s32 1, %v682
        %v684 = vrot.slane %v675, %v683
        %v687 = vmul.f32 %v673, %v680
        %v688 = vmul.f32 %v672, %v684
        %v691 = vcombine.low %v687, %v688
        %v693 = vunpack.c.l.s4 1966171168
        %v694 = vunpack.c.0.s8 %v693
        %v695 = vlaneseq
        %v696 = vshrl.u32 %v695, 7
        %v697 = vsub.s32 %v694, %v696
        %v698 = vrot.slane %v691, %v697
        %v700 = vunpack.c.l.s4 1966171168
        %v701 = vunpack.c.0.s8 %v700
        %v702 = vlaneseq
        %v703 = vshrl.u32 %v702, 7
        %v704 = vsub.s32 %v701, %v703
        %v705 = vrot.slane %v698, %v704
        %s707 = scalar_lea.vmem [#allocation2], 1
        %708 = vst.msk [vmem:[%s707] ss:$8 sm:$0x3] %vm664, %v705
        %709 = vst.msk [vmem:[%s707] ss:$8 sm:$0x0] %vm664, %v705
        %710 = vrot.lane.b32.xlu0 %v613, 32
        %v711 = vpop.permute.xlu0 %710
        %712 = vrot.lane.b32.xlu0 %v617, 32
        %v713 = vpop.permute.xlu0 %712
        %vm714 = vcmp.lt.s32.totalorder %v625, 32
        %v715 = vsel %vm714, %v711, %v713
        %v716 = vsel %vm714, %v713, %v711
        %s717 = scalar_lea.vmem %s4, 4
        %v718 = vld [vmem:[%s717] sm:$0x3]
        %v720 = vlaneseq
        %v721 = vshrl.u32 %v720, 7
        %v722 = vsub.s32 0, %v721
        %v723 = vrot.slane %v718, %v722
        %v724 = vlaneseq
        %v725 = vshrl.u32 %v724, 7
        %v726 = vsub.s32 1, %v725
        %v727 = vrot.slane %v718, %v726
        %v730 = vmul.f32 %v716, %v723
        %v731 = vmul.f32 %v715, %v727
        %v734 = vcombine.low %v730, %v731
        %v736 = vunpack.c.l.s4 1966171168
        %v737 = vunpack.c.0.s8 %v736
        %v738 = vlaneseq
        %v739 = vshrl.u32 %v738, 7
        %v740 = vsub.s32 %v737, %v739
        %v741 = vrot.slane %v734, %v740
        %v743 = vunpack.c.l.s4 1966171168
        %v744 = vunpack.c.0.s8 %v743
        %v745 = vlaneseq
        %v746 = vshrl.u32 %v745, 7
        %v747 = vsub.s32 %v744, %v746
        %v748 = vrot.slane %v741, %v747
        %s750 = scalar_lea.vmem [#allocation2], 2
        %751 = vst.msk [vmem:[%s750] ss:$8 sm:$0x3] %vm664, %v748
        %752 = vst.msk [vmem:[%s750] ss:$8 sm:$0x0] %vm664, %v748
        %753 = vrot.lane.b32.xlu0 %v613, 31
        %v754 = vpop.permute.xlu0 %753
        %755 = vrot.lane.b32.xlu0 %v617, 31
        %v756 = vpop.permute.xlu0 %755
        %vm757 = vcmp.lt.s32.totalorder %v625, 31
        %v758 = vsel %vm757, %v754, %v756
        %v759 = vsel %vm757, %v756, %v754
        %s760 = scalar_lea.vmem %s4, 6
        %v761 = vld [vmem:[%s760] sm:$0x3]
        %v763 = vlaneseq
        %v764 = vshrl.u32 %v763, 7
        %v765 = vsub.s32 0, %v764
        %v766 = vrot.slane %v761, %v765
        %v767 = vlaneseq
        %v768 = vshrl.u32 %v767, 7
        %v769 = vsub.s32 1, %v768
        %v770 = vrot.slane %v761, %v769
        %v773 = vmul.f32 %v759, %v766
        %v774 = vmul.f32 %v758, %v770
        %v777 = vcombine.low %v773, %v774
        %v779 = vunpack.c.l.s4 1966171168
        %v780 = vunpack.c.0.s8 %v779
        %v781 = vlaneseq
        %v782 = vshrl.u32 %v781, 7
        %v783 = vsub.s32 %v780, %v782
        %v784 = vrot.slane %v777, %v783
        %v786 = vunpack.c.l.s4 1966171168
        %v787 = vunpack.c.0.s8 %v786
        %v788 = vlaneseq
        %v789 = vshrl.u32 %v788, 7
        %v790 = vsub.s32 %v787, %v789
        %v791 = vrot.slane %v784, %v790
        %s793 = scalar_lea.vmem [#allocation2], 3
        %794 = vst.msk [vmem:[%s793] ss:$8 sm:$0x3] %vm664, %v791
        %795 = vst.msk [vmem:[%s793] ss:$8 sm:$0x0] %vm664, %v791
        %796 = vrot.lane.b32.xlu0 %v613, 30
        %v797 = vpop.permute.xlu0 %796
        %798 = vrot.lane.b32.xlu0 %v617, 30
        %v799 = vpop.permute.xlu0 %798
        %vm800 = vcmp.lt.s32.totalorder %v625, 30
        %v801 = vsel %vm800, %v797, %v799
        %v802 = vsel %vm800, %v799, %v797
        %s803 = scalar_lea.vmem %s4, 8
        %v804 = vld [vmem:[%s803] sm:$0x3]
        %v806 = vlaneseq
        %v807 = vshrl.u32 %v806, 7
        %v808 = vsub.s32 0, %v807
        %v809 = vrot.slane %v804, %v808
        %v810 = vlaneseq
        %v811 = vshrl.u32 %v810, 7
        %v812 = vsub.s32 1, %v811
        %v813 = vrot.slane %v804, %v812
        %v816 = vmul.f32 %v802, %v809
        %v817 = vmul.f32 %v801, %v813
        %v820 = vcombine.low %v816, %v817
        %v822 = vunpack.c.l.s4 1966171168
        %v823 = vunpack.c.0.s8 %v822
        %v824 = vlaneseq
        %v825 = vshrl.u32 %v824, 7
        %v826 = vsub.s32 %v823, %v825
        %v827 = vrot.slane %v820, %v826
        %v829 = vunpack.c.l.s4 1966171168
        %v830 = vunpack.c.0.s8 %v829
        %v831 = vlaneseq
        %v832 = vshrl.u32 %v831, 7
        %v833 = vsub.s32 %v830, %v832
        %v834 = vrot.slane %v827, %v833
        %s836 = scalar_lea.vmem [#allocation2], 4
        %837 = vst.msk [vmem:[%s836] ss:$8 sm:$0x3] %vm664, %v834
        %838 = vst.msk [vmem:[%s836] ss:$8 sm:$0x0] %vm664, %v834
        %839 = vrot.lane.b32.xlu0 %v613, 18
        %v840 = vpop.permute.xlu0 %839
        %841 = vrot.lane.b32.xlu0 %v617, 18
        %v842 = vpop.permute.xlu0 %841
        %vm843 = vcmp.lt.s32.totalorder %v625, 18
        %v844 = vsel %vm843, %v840, %v842
        %v845 = vsel %vm843, %v842, %v840
        %s846 = scalar_lea.vmem %s4, 10
        %v847 = vld [vmem:[%s846] sm:$0x3]
        %v849 = vlaneseq
        %v850 = vshrl.u32 %v849, 7
        %v851 = vsub.s32 0, %v850
        %v852 = vrot.slane %v847, %v851
        %v853 = vlaneseq
        %v854 = vshrl.u32 %v853, 7
        %v855 = vsub.s32 1, %v854
        %v856 = vrot.slane %v847, %v855
        %v859 = vmul.f32 %v845, %v852
        %v860 = vmul.f32 %v844, %v856
        %v863 = vcombine.low %v859, %v860
        %v865 = vunpack.c.l.s4 1966171168
        %v866 = vunpack.c.0.s8 %v865
        %v867 = vlaneseq
        %v868 = vshrl.u32 %v867, 7
        %v869 = vsub.s32 %v866, %v868
        %v870 = vrot.slane %v863, %v869
        %v872 = vunpack.c.l.s4 1966171168
        %v873 = vunpack.c.0.s8 %v872
        %v874 = vlaneseq
        %v875 = vshrl.u32 %v874, 7
        %v876 = vsub.s32 %v873, %v875
        %v877 = vrot.slane %v870, %v876
        %s879 = scalar_lea.vmem [#allocation2], 5
        %880 = vst.msk [vmem:[%s879] ss:$8 sm:$0x3] %vm664, %v877
        %881 = vst.msk [vmem:[%s879] ss:$8 sm:$0x0] %vm664, %v877
        %882 = vrot.lane.b32.xlu0 %v613, 17
        %v883 = vpop.permute.xlu0 %882
        %884 = vrot.lane.b32.xlu0 %v617, 17
        %v885 = vpop.permute.xlu0 %884
        %vm886 = vcmp.lt.s32.totalorder %v625, 17
        %v887 = vsel %vm886, %v883, %v885
        %v888 = vsel %vm886, %v885, %v883
        %s889 = scalar_lea.vmem %s4, 12
        %v890 = vld [vmem:[%s889] sm:$0x3]
        %v892 = vlaneseq
        %v893 = vshrl.u32 %v892, 7
        %v894 = vsub.s32 0, %v893
        %v895 = vrot.slane %v890, %v894
        %v896 = vlaneseq
        %v897 = vshrl.u32 %v896, 7
        %v898 = vsub.s32 1, %v897
        %v899 = vrot.slane %v890, %v898
        %v902 = vmul.f32 %v888, %v895
        %v903 = vmul.f32 %v887, %v899
        %v906 = vcombine.low %v902, %v903
        %v908 = vunpack.c.l.s4 1966171168
        %v909 = vunpack.c.0.s8 %v908
        %v910 = vlaneseq
        %v911 = vshrl.u32 %v910, 7
        %v912 = vsub.s32 %v909, %v911
        %v913 = vrot.slane %v906, %v912
        %v915 = vunpack.c.l.s4 1966171168
        %v916 = vunpack.c.0.s8 %v915
        %v917 = vlaneseq
        %v918 = vshrl.u32 %v917, 7
        %v919 = vsub.s32 %v916, %v918
        %v920 = vrot.slane %v913, %v919
        %s922 = scalar_lea.vmem [#allocation2], 6
        %923 = vst.msk [vmem:[%s922] ss:$8 sm:$0x3] %vm664, %v920
        %924 = vst.msk [vmem:[%s922] ss:$8 sm:$0x0] %vm664, %v920
        %925 = vrot.lane.b32.xlu0 %v613, 16
        %v926 = vpop.permute.xlu0 %925
        %927 = vrot.lane.b32.xlu0 %v617, 16
        %v928 = vpop.permute.xlu0 %927
        %vm929 = vcmp.lt.s32.totalorder %v625, 16
        %v930 = vsel %vm929, %v926, %v928
        %v931 = vsel %vm929, %v928, %v926
        %s932 = scalar_lea.vmem %s4, 14
        %v933 = vld [vmem:[%s932] sm:$0x3]
        %v935 = vlaneseq
        %v936 = vshrl.u32 %v935, 7
        %v937 = vsub.s32 0, %v936
        %v938 = vrot.slane %v933, %v937
        %v939 = vlaneseq
        %v940 = vshrl.u32 %v939, 7
        %v941 = vsub.s32 1, %v940
        %v942 = vrot.slane %v933, %v941
        %v945 = vmul.f32 %v931, %v938
        %v946 = vmul.f32 %v930, %v942
        %v949 = vcombine.low %v945, %v946
        %v951 = vunpack.c.l.s4 1966171168
        %v952 = vunpack.c.0.s8 %v951
        %v953 = vlaneseq
        %v954 = vshrl.u32 %v953, 7
        %v955 = vsub.s32 %v952, %v954
        %v956 = vrot.slane %v949, %v955
        %v958 = vunpack.c.l.s4 1966171168
        %v959 = vunpack.c.0.s8 %v958
        %v960 = vlaneseq
        %v961 = vshrl.u32 %v960, 7
        %v962 = vsub.s32 %v959, %v961
        %v963 = vrot.slane %v956, %v962
        %s965 = scalar_lea.vmem [#allocation2], 7
        %966 = vst.msk [vmem:[%s965] ss:$8 sm:$0x3] %vm664, %v963
        %967 = vst.msk [vmem:[%s965] ss:$8 sm:$0x0] %vm664, %v963
        %968 = vrot.lane.b32.xlu0 %v613, 15
        %v969 = vpop.permute.xlu0 %968
        %970 = vrot.lane.b32.xlu0 %v617, 15
        %v971 = vpop.permute.xlu0 %970
        %vm972 = vcmp.lt.s32.totalorder %v625, 15
        %v973 = vsel %vm972, %v969, %v971
        %v974 = vsel %vm972, %v971, %v969
        %s975 = scalar_lea.vmem %s4, 16
        %v976 = vld [vmem:[%s975] sm:$0x3]
        %v978 = vlaneseq
        %v979 = vshrl.u32 %v978, 7
        %v980 = vsub.s32 0, %v979
        %v981 = vrot.slane %v976, %v980
        %v982 = vlaneseq
        %v983 = vshrl.u32 %v982, 7
        %v984 = vsub.s32 1, %v983
        %v985 = vrot.slane %v976, %v984
        %v988 = vmul.f32 %v974, %v981
        %v989 = vmul.f32 %v973, %v985
        %v992 = vcombine.low %v988, %v989
        %v994 = vunpack.c.l.s4 1966171168
        %v995 = vunpack.c.0.s8 %v994
        %v996 = vlaneseq
        %v997 = vshrl.u32 %v996, 7
        %v998 = vsub.s32 %v995, %v997
        %v999 = vrot.slane %v992, %v998
        %v1001 = vunpack.c.l.s4 1966171168
        %v1002 = vunpack.c.0.s8 %v1001
        %v1003 = vlaneseq
        %v1004 = vshrl.u32 %v1003, 7
        %v1005 = vsub.s32 %v1002, %v1004
        %v1006 = vrot.slane %v999, %v1005
        %s1008 = scalar_lea.vmem [#allocation2], 16
        %1009 = vst.msk [vmem:[%s1008] ss:$8 sm:$0x3] %vm664, %v1006
        %1010 = vst.msk [vmem:[%s1008] ss:$8 sm:$0x0] %vm664, %v1006
        %1011 = vrot.lane.b32.xlu0 %v613, 14
        %v1012 = vpop.permute.xlu0 %1011
        %1013 = vrot.lane.b32.xlu0 %v617, 14
        %v1014 = vpop.permute.xlu0 %1013
        %vm1015 = vcmp.lt.s32.totalorder %v625, 14
        %v1016 = vsel %vm1015, %v1012, %v1014
        %v1017 = vsel %vm1015, %v1014, %v1012
        %s1018 = scalar_lea.vmem %s4, 18
        %v1019 = vld [vmem:[%s1018] sm:$0x3]
        %v1021 = vlaneseq
        %v1022 = vshrl.u32 %v1021, 7
        %v1023 = vsub.s32 0, %v1022
        %v1024 = vrot.slane %v1019, %v1023
        %v1025 = vlaneseq
        %v1026 = vshrl.u32 %v1025, 7
        %v1027 = vsub.s32 1, %v1026
        %v1028 = vrot.slane %v1019, %v1027
        %v1031 = vmul.f32 %v1017, %v1024
        %v1032 = vmul.f32 %v1016, %v1028
        %v1035 = vcombine.low %v1031, %v1032
        %v1037 = vunpack.c.l.s4 1966171168
        %v1038 = vunpack.c.0.s8 %v1037
        %v1039 = vlaneseq
        %v1040 = vshrl.u32 %v1039, 7
        %v1041 = vsub.s32 %v1038, %v1040
        %v1042 = vrot.slane %v1035, %v1041
        %v1044 = vunpack.c.l.s4 1966171168
        %v1045 = vunpack.c.0.s8 %v1044
        %v1046 = vlaneseq
        %v1047 = vshrl.u32 %v1046, 7
        %v1048 = vsub.s32 %v1045, %v1047
        %v1049 = vrot.slane %v1042, %v1048
        %s1051 = scalar_lea.vmem [#allocation2], 17
        %1052 = vst.msk [vmem:[%s1051] ss:$8 sm:$0x3] %vm664, %v1049
        %1053 = vst.msk [vmem:[%s1051] ss:$8 sm:$0x0] %vm664, %v1049
        %1054 = vrot.lane.b32.xlu0 %v613, 2
        %v1055 = vpop.permute.xlu0 %1054
        %1056 = vrot.lane.b32.xlu0 %v617, 2
        %v1057 = vpop.permute.xlu0 %1056
        %vm1058 = vcmp.lt.s32.totalorder %v625, 2
        %v1059 = vsel %vm1058, %v1055, %v1057
        %v1060 = vsel %vm1058, %v1057, %v1055
        %s1061 = scalar_lea.vmem %s4, 20
        %v1062 = vld [vmem:[%s1061] sm:$0x3]
        %v1064 = vlaneseq
        %v1065 = vshrl.u32 %v1064, 7
        %v1066 = vsub.s32 0, %v1065
        %v1067 = vrot.slane %v1062, %v1066
        %v1068 = vlaneseq
        %v1069 = vshrl.u32 %v1068, 7
        %v1070 = vsub.s32 1, %v1069
        %v1071 = vrot.slane %v1062, %v1070
        %v1074 = vmul.f32 %v1060, %v1067
        %v1075 = vmul.f32 %v1059, %v1071
        %v1078 = vcombine.low %v1074, %v1075
        %v1080 = vunpack.c.l.s4 1966171168
        %v1081 = vunpack.c.0.s8 %v1080
        %v1082 = vlaneseq
        %v1083 = vshrl.u32 %v1082, 7
        %v1084 = vsub.s32 %v1081, %v1083
        %v1085 = vrot.slane %v1078, %v1084
        %v1087 = vunpack.c.l.s4 1966171168
        %v1088 = vunpack.c.0.s8 %v1087
        %v1089 = vlaneseq
        %v1090 = vshrl.u32 %v1089, 7
        %v1091 = vsub.s32 %v1088, %v1090
        %v1092 = vrot.slane %v1085, %v1091
        %s1094 = scalar_lea.vmem [#allocation2], 18
        %1095 = vst.msk [vmem:[%s1094] ss:$8 sm:$0x3] %vm664, %v1092
        %1096 = vst.msk [vmem:[%s1094] ss:$8 sm:$0x0] %vm664, %v1092
        %1097 = vrot.lane.b32.xlu0 %v613, 1
        %v1098 = vpop.permute.xlu0 %1097
        %1099 = vrot.lane.b32.xlu0 %v617, 1
        %v1100 = vpop.permute.xlu0 %1099
        %vm1101 = vcmp.lt.s32.totalorder %v625, 1
        %v1102 = vsel %vm1101, %v1098, %v1100
        %v1103 = vsel %vm1101, %v1100, %v1098
        %s1104 = scalar_lea.vmem %s4, 22
        %v1105 = vld [vmem:[%s1104] sm:$0x3]
        %v1107 = vlaneseq
        %v1108 = vshrl.u32 %v1107, 7
        %v1109 = vsub.s32 0, %v1108
        %v1110 = vrot.slane %v1105, %v1109
        %v1111 = vlaneseq
        %v1112 = vshrl.u32 %v1111, 7
        %v1113 = vsub.s32 1, %v1112
        %v1114 = vrot.slane %v1105, %v1113
        %v1117 = vmul.f32 %v1103, %v1110
        %v1118 = vmul.f32 %v1102, %v1114
        %v1121 = vcombine.low %v1117, %v1118
        %v1123 = vunpack.c.l.s4 1966171168
        %v1124 = vunpack.c.0.s8 %v1123
        %v1125 = vlaneseq
        %v1126 = vshrl.u32 %v1125, 7
        %v1127 = vsub.s32 %v1124, %v1126
        %v1128 = vrot.slane %v1121, %v1127
        %v1130 = vunpack.c.l.s4 1966171168
        %v1131 = vunpack.c.0.s8 %v1130
        %v1132 = vlaneseq
        %v1133 = vshrl.u32 %v1132, 7
        %v1134 = vsub.s32 %v1131, %v1133
        %v1135 = vrot.slane %v1128, %v1134
        %s1137 = scalar_lea.vmem [#allocation2], 19
        %1138 = vst.msk [vmem:[%s1137] ss:$8 sm:$0x3] %vm664, %v1135
        %1139 = vst.msk [vmem:[%s1137] ss:$8 sm:$0x0] %vm664, %v1135
        %s1140 = scalar_lea.vmem [#allocation2], 20
        %1141 = vst.msk [vmem:[%s1140] ss:$8 sm:$0x3] %vm664, %v608
        %1142 = vst.msk [vmem:[%s1140] ss:$8 sm:$0x0] %vm664, %v608
        %1143 = vrot.lane.b32.xlu0 %v613, 127
        %v1144 = vpop.permute.xlu0 %1143
        %1145 = vrot.lane.b32.xlu0 %v617, 127
        %v1146 = vpop.permute.xlu0 %1145
        %vm1147 = vcmp.lt.s32.totalorder %v625, 127
        %v1148 = vsel %vm1147, %v1144, %v1146
        %v1149 = vsel %vm1147, %v1146, %v1144
        %s1150 = scalar_lea.vmem %s4, 26
        %v1151 = vld [vmem:[%s1150] sm:$0x3]
        %v1153 = vlaneseq
        %v1154 = vshrl.u32 %v1153, 7
        %v1155 = vsub.s32 0, %v1154
        %v1156 = vrot.slane %v1151, %v1155
        %v1157 = vlaneseq
        %v1158 = vshrl.u32 %v1157, 7
        %v1159 = vsub.s32 1, %v1158
        %v1160 = vrot.slane %v1151, %v1159
        %v1163 = vmul.f32 %v1148, %v1156
        %v1164 = vmul.f32 %v1149, %v1160
        %v1167 = vcombine.low %v1163, %v1164
        %v1169 = vunpack.c.l.s4 1966171168
        %v1170 = vunpack.c.0.s8 %v1169
        %v1171 = vlaneseq
        %v1172 = vshrl.u32 %v1171, 7
        %v1173 = vsub.s32 %v1170, %v1172
        %v1174 = vrot.slane %v1167, %v1173
        %v1176 = vunpack.c.l.s4 1966171168
        %v1177 = vunpack.c.0.s8 %v1176
        %v1178 = vlaneseq
        %v1179 = vshrl.u32 %v1178, 7
        %v1180 = vsub.s32 %v1177, %v1179
        %v1181 = vrot.slane %v1174, %v1180
        %s1183 = scalar_lea.vmem [#allocation2], 21
        %1184 = vst.msk [vmem:[%s1183] ss:$8 sm:$0x3] %vm664, %v1181
        %1185 = vst.msk [vmem:[%s1183] ss:$8 sm:$0x0] %vm664, %v1181
        %1186 = vrot.lane.b32.xlu0 %v613, 126
        %v1187 = vpop.permute.xlu0 %1186
        %1188 = vrot.lane.b32.xlu0 %v617, 126
        %v1189 = vpop.permute.xlu0 %1188
        %vm1190 = vcmp.lt.s32.totalorder %v625, 126
        %v1191 = vsel %vm1190, %v1187, %v1189
        %v1192 = vsel %vm1190, %v1189, %v1187
        %s1193 = scalar_lea.vmem %s4, 28
        %v1194 = vld [vmem:[%s1193] sm:$0x3]
        %v1196 = vlaneseq
        %v1197 = vshrl.u32 %v1196, 7
        %v1198 = vsub.s32 0, %v1197
        %v1199 = vrot.slane %v1194, %v1198
        %v1200 = vlaneseq
        %v1201 = vshrl.u32 %v1200, 7
        %v1202 = vsub.s32 1, %v1201
        %v1203 = vrot.slane %v1194, %v1202
        %v1206 = vmul.f32 %v1191, %v1199
        %v1207 = vmul.f32 %v1192, %v1203
        %v1210 = vcombine.low %v1206, %v1207
        %v1212 = vunpack.c.l.s4 1966171168
        %v1213 = vunpack.c.0.s8 %v1212
        %v1214 = vlaneseq
        %v1215 = vshrl.u32 %v1214, 7
        %v1216 = vsub.s32 %v1213, %v1215
        %v1217 = vrot.slane %v1210, %v1216
        %v1219 = vunpack.c.l.s4 1966171168
        %v1220 = vunpack.c.0.s8 %v1219
        %v1221 = vlaneseq
        %v1222 = vshrl.u32 %v1221, 7
        %v1223 = vsub.s32 %v1220, %v1222
        %v1224 = vrot.slane %v1217, %v1223
        %s1226 = scalar_lea.vmem [#allocation2], 22
        %1227 = vst.msk [vmem:[%s1226] ss:$8 sm:$0x3] %vm664, %v1224
        %1228 = vst.msk [vmem:[%s1226] ss:$8 sm:$0x0] %vm664, %v1224
        %1229 = vrot.lane.b32.xlu0 %v613, 114
        %v1230 = vpop.permute.xlu0 %1229
        %1231 = vrot.lane.b32.xlu0 %v617, 114
        %v1232 = vpop.permute.xlu0 %1231
        %vm1233 = vcmp.lt.s32.totalorder %v625, 114
        %v1234 = vsel %vm1233, %v1230, %v1232
        %v1235 = vsel %vm1233, %v1232, %v1230
        %s1236 = scalar_lea.vmem %s4, 30
        %v1237 = vld [vmem:[%s1236] sm:$0x3]
        %v1239 = vlaneseq
        %v1240 = vshrl.u32 %v1239, 7
        %v1241 = vsub.s32 0, %v1240
        %v1242 = vrot.slane %v1237, %v1241
        %v1243 = vlaneseq
        %v1244 = vshrl.u32 %v1243, 7
        %v1245 = vsub.s32 1, %v1244
        %v1246 = vrot.slane %v1237, %v1245
        %v1249 = vmul.f32 %v1234, %v1242
        %v1250 = vmul.f32 %v1235, %v1246
        %v1253 = vcombine.low %v1249, %v1250
        %v1255 = vunpack.c.l.s4 1966171168
        %v1256 = vunpack.c.0.s8 %v1255
        %v1257 = vlaneseq
        %v1258 = vshrl.u32 %v1257, 7
        %v1259 = vsub.s32 %v1256, %v1258
        %v1260 = vrot.slane %v1253, %v1259
        %v1262 = vunpack.c.l.s4 1966171168
        %v1263 = vunpack.c.0.s8 %v1262
        %v1264 = vlaneseq
        %v1265 = vshrl.u32 %v1264, 7
        %v1266 = vsub.s32 %v1263, %v1265
        %v1267 = vrot.slane %v1260, %v1266
        %s1269 = scalar_lea.vmem [#allocation2], 23
        %1270 = vst.msk [vmem:[%s1269] ss:$8 sm:$0x3] %vm664, %v1267
        %1271 = vst.msk [vmem:[%s1269] ss:$8 sm:$0x0] %vm664, %v1267
        %1272 = vrot.lane.b32.xlu0 %v613, 113
        %v1273 = vpop.permute.xlu0 %1272
        %1274 = vrot.lane.b32.xlu0 %v617, 113
        %v1275 = vpop.permute.xlu0 %1274
        %vm1276 = vcmp.lt.s32.totalorder %v625, 113
        %v1277 = vsel %vm1276, %v1273, %v1275
        %v1278 = vsel %vm1276, %v1275, %v1273
        %s1279 = scalar_lea.vmem %s4, 32
        %v1280 = vld [vmem:[%s1279] sm:$0x3]
        %v1282 = vlaneseq
        %v1283 = vshrl.u32 %v1282, 7
        %v1284 = vsub.s32 0, %v1283
        %v1285 = vrot.slane %v1280, %v1284
        %v1286 = vlaneseq
        %v1287 = vshrl.u32 %v1286, 7
        %v1288 = vsub.s32 1, %v1287
        %v1289 = vrot.slane %v1280, %v1288
        %v1292 = vmul.f32 %v1277, %v1285
        %v1293 = vmul.f32 %v1278, %v1289
        %v1296 = vcombine.low %v1292, %v1293
        %v1298 = vunpack.c.l.s4 1966171168
        %v1299 = vunpack.c.0.s8 %v1298
        %v1300 = vlaneseq
        %v1301 = vshrl.u32 %v1300, 7
        %v1302 = vsub.s32 %v1299, %v1301
        %v1303 = vrot.slane %v1296, %v1302
        %v1305 = vunpack.c.l.s4 1966171168
        %v1306 = vunpack.c.0.s8 %v1305
        %v1307 = vlaneseq
        %v1308 = vshrl.u32 %v1307, 7
        %v1309 = vsub.s32 %v1306, %v1308
        %v1310 = vrot.slane %v1303, %v1309
        %s1312 = scalar_lea.vmem [#allocation2], 32
        %1313 = vst.msk [vmem:[%s1312] ss:$8 sm:$0x3] %vm664, %v1310
        %1314 = vst.msk [vmem:[%s1312] ss:$8 sm:$0x0] %vm664, %v1310
        %1315 = vrot.lane.b32.xlu0 %v613, 112
        %v1316 = vpop.permute.xlu0 %1315
        %1317 = vrot.lane.b32.xlu0 %v617, 112
        %v1318 = vpop.permute.xlu0 %1317
        %vm1319 = vcmp.lt.s32.totalorder %v625, 112
        %v1320 = vsel %vm1319, %v1316, %v1318
        %v1321 = vsel %vm1319, %v1318, %v1316
        %s1322 = scalar_lea.vmem %s4, 34
        %v1323 = vld [vmem:[%s1322] sm:$0x3]
        %v1325 = vlaneseq
        %v1326 = vshrl.u32 %v1325, 7
        %v1327 = vsub.s32 0, %v1326
        %v1328 = vrot.slane %v1323, %v1327
        %v1329 = vlaneseq
        %v1330 = vshrl.u32 %v1329, 7
        %v1331 = vsub.s32 1, %v1330
        %v1332 = vrot.slane %v1323, %v1331
        %v1335 = vmul.f32 %v1320, %v1328
        %v1336 = vmul.f32 %v1321, %v1332
        %v1339 = vcombine.low %v1335, %v1336
        %v1341 = vunpack.c.l.s4 1966171168
        %v1342 = vunpack.c.0.s8 %v1341
        %v1343 = vlaneseq
        %v1344 = vshrl.u32 %v1343, 7
        %v1345 = vsub.s32 %v1342, %v1344
        %v1346 = vrot.slane %v1339, %v1345
        %v1348 = vunpack.c.l.s4 1966171168
        %v1349 = vunpack.c.0.s8 %v1348
        %v1350 = vlaneseq
        %v1351 = vshrl.u32 %v1350, 7
        %v1352 = vsub.s32 %v1349, %v1351
        %v1353 = vrot.slane %v1346, %v1352
        %s1355 = scalar_lea.vmem [#allocation2], 33
        %1356 = vst.msk [vmem:[%s1355] ss:$8 sm:$0x3] %vm664, %v1353
        %1357 = vst.msk [vmem:[%s1355] ss:$8 sm:$0x0] %vm664, %v1353
        %1358 = vrot.lane.b32.xlu0 %v613, 111
        %v1359 = vpop.permute.xlu0 %1358
        %1360 = vrot.lane.b32.xlu0 %v617, 111
        %v1361 = vpop.permute.xlu0 %1360
        %vm1362 = vcmp.lt.s32.totalorder %v625, 111
        %v1363 = vsel %vm1362, %v1359, %v1361
        %v1364 = vsel %vm1362, %v1361, %v1359
        %s1365 = scalar_lea.vmem %s4, 36
        %v1366 = vld [vmem:[%s1365] sm:$0x3]
        %v1368 = vlaneseq
        %v1369 = vshrl.u32 %v1368, 7
        %v1370 = vsub.s32 0, %v1369
        %v1371 = vrot.slane %v1366, %v1370
        %v1372 = vlaneseq
        %v1373 = vshrl.u32 %v1372, 7
        %v1374 = vsub.s32 1, %v1373
        %v1375 = vrot.slane %v1366, %v1374
        %v1378 = vmul.f32 %v1363, %v1371
        %v1379 = vmul.f32 %v1364, %v1375
        %v1382 = vcombine.low %v1378, %v1379
        %v1384 = vunpack.c.l.s4 1966171168
        %v1385 = vunpack.c.0.s8 %v1384
        %v1386 = vlaneseq
        %v1387 = vshrl.u32 %v1386, 7
        %v1388 = vsub.s32 %v1385, %v1387
        %v1389 = vrot.slane %v1382, %v1388
        %v1391 = vunpack.c.l.s4 1966171168
        %v1392 = vunpack.c.0.s8 %v1391
        %v1393 = vlaneseq
        %v1394 = vshrl.u32 %v1393, 7
        %v1395 = vsub.s32 %v1392, %v1394
        %v1396 = vrot.slane %v1389, %v1395
        %s1398 = scalar_lea.vmem [#allocation2], 34
        %1399 = vst.msk [vmem:[%s1398] ss:$8 sm:$0x3] %vm664, %v1396
        %1400 = vst.msk [vmem:[%s1398] ss:$8 sm:$0x0] %vm664, %v1396
        %1401 = vrot.lane.b32.xlu0 %v613, 110
        %v1402 = vpop.permute.xlu0 %1401
        %1403 = vrot.lane.b32.xlu0 %v617, 110
        %v1404 = vpop.permute.xlu0 %1403
        %vm1405 = vcmp.lt.s32.totalorder %v625, 110
        %v1406 = vsel %vm1405, %v1402, %v1404
        %v1407 = vsel %vm1405, %v1404, %v1402
        %s1408 = scalar_lea.vmem %s4, 38
        %v1409 = vld [vmem:[%s1408] sm:$0x3]
        %v1411 = vlaneseq
        %v1412 = vshrl.u32 %v1411, 7
        %v1413 = vsub.s32 0, %v1412
        %v1414 = vrot.slane %v1409, %v1413
        %v1415 = vlaneseq
        %v1416 = vshrl.u32 %v1415, 7
        %v1417 = vsub.s32 1, %v1416
        %v1418 = vrot.slane %v1409, %v1417
        %v1421 = vmul.f32 %v1406, %v1414
        %v1422 = vmul.f32 %v1407, %v1418
        %v1425 = vcombine.low %v1421, %v1422
        %v1427 = vunpack.c.l.s4 1966171168
        %v1428 = vunpack.c.0.s8 %v1427
        %v1429 = vlaneseq
        %v1430 = vshrl.u32 %v1429, 7
        %v1431 = vsub.s32 %v1428, %v1430
        %v1432 = vrot.slane %v1425, %v1431
        %v1434 = vunpack.c.l.s4 1966171168
        %v1435 = vunpack.c.0.s8 %v1434
        %v1436 = vlaneseq
        %v1437 = vshrl.u32 %v1436, 7
        %v1438 = vsub.s32 %v1435, %v1437
        %v1439 = vrot.slane %v1432, %v1438
        %s1441 = scalar_lea.vmem [#allocation2], 35
        %1442 = vst.msk [vmem:[%s1441] ss:$8 sm:$0x3] %vm664, %v1439
        %1443 = vst.msk [vmem:[%s1441] ss:$8 sm:$0x0] %vm664, %v1439
        %1444 = vrot.lane.b32.xlu0 %v613, 98
        %v1445 = vpop.permute.xlu0 %1444
        %1446 = vrot.lane.b32.xlu0 %v617, 98
        %v1447 = vpop.permute.xlu0 %1446
        %vm1448 = vcmp.lt.s32.totalorder %v625, 98
        %v1449 = vsel %vm1448, %v1445, %v1447
        %v1450 = vsel %vm1448, %v1447, %v1445
        %s1451 = scalar_lea.vmem %s4, 40
        %v1452 = vld [vmem:[%s1451] sm:$0x3]
        %v1454 = vlaneseq
        %v1455 = vshrl.u32 %v1454, 7
        %v1456 = vsub.s32 0, %v1455
        %v1457 = vrot.slane %v1452, %v1456
        %v1458 = vlaneseq
        %v1459 = vshrl.u32 %v1458, 7
        %v1460 = vsub.s32 1, %v1459
        %v1461 = vrot.slane %v1452, %v1460
        %v1464 = vmul.f32 %v1449, %v1457
        %v1465 = vmul.f32 %v1450, %v1461
        %v1468 = vcombine.low %v1464, %v1465
        %v1470 = vunpack.c.l.s4 1966171168
        %v1471 = vunpack.c.0.s8 %v1470
        %v1472 = vlaneseq
        %v1473 = vshrl.u32 %v1472, 7
        %v1474 = vsub.s32 %v1471, %v1473
        %v1475 = vrot.slane %v1468, %v1474
        %v1477 = vunpack.c.l.s4 1966171168
        %v1478 = vunpack.c.0.s8 %v1477
        %v1479 = vlaneseq
        %v1480 = vshrl.u32 %v1479, 7
        %v1481 = vsub.s32 %v1478, %v1480
        %v1482 = vrot.slane %v1475, %v1481
        %s1484 = scalar_lea.vmem [#allocation2], 36
        %1485 = vst.msk [vmem:[%s1484] ss:$8 sm:$0x3] %vm664, %v1482
        %1486 = vst.msk [vmem:[%s1484] ss:$8 sm:$0x0] %vm664, %v1482
        %1487 = vrot.lane.b32.xlu0 %v613, 97
        %v1488 = vpop.permute.xlu0 %1487
        %1489 = vrot.lane.b32.xlu0 %v617, 97
        %v1490 = vpop.permute.xlu0 %1489
        %vm1491 = vcmp.lt.s32.totalorder %v625, 97
        %v1492 = vsel %vm1491, %v1488, %v1490
        %v1493 = vsel %vm1491, %v1490, %v1488
        %s1494 = scalar_lea.vmem %s4, 42
        %v1495 = vld [vmem:[%s1494] sm:$0x3]
        %v1497 = vlaneseq
        %v1498 = vshrl.u32 %v1497, 7
        %v1499 = vsub.s32 0, %v1498
        %v1500 = vrot.slane %v1495, %v1499
        %v1501 = vlaneseq
        %v1502 = vshrl.u32 %v1501, 7
        %v1503 = vsub.s32 1, %v1502
        %v1504 = vrot.slane %v1495, %v1503
        %v1507 = vmul.f32 %v1492, %v1500
        %v1508 = vmul.f32 %v1493, %v1504
        %v1511 = vcombine.low %v1507, %v1508
        %v1513 = vunpack.c.l.s4 1966171168
        %v1514 = vunpack.c.0.s8 %v1513
        %v1515 = vlaneseq
        %v1516 = vshrl.u32 %v1515, 7
        %v1517 = vsub.s32 %v1514, %v1516
        %v1518 = vrot.slane %v1511, %v1517
        %v1520 = vunpack.c.l.s4 1966171168
        %v1521 = vunpack.c.0.s8 %v1520
        %v1522 = vlaneseq
        %v1523 = vshrl.u32 %v1522, 7
        %v1524 = vsub.s32 %v1521, %v1523
        %v1525 = vrot.slane %v1518, %v1524
        %s1527 = scalar_lea.vmem [#allocation2], 37
        %1528 = vst.msk [vmem:[%s1527] ss:$8 sm:$0x3] %vm664, %v1525
        %1529 = vst.msk [vmem:[%s1527] ss:$8 sm:$0x0] %vm664, %v1525
        %1530 = vrot.lane.b32.xlu0 %v613, 96
        %v1531 = vpop.permute.xlu0 %1530
        %1532 = vrot.lane.b32.xlu0 %v617, 96
        %v1533 = vpop.permute.xlu0 %1532
        %vm1534 = vcmp.lt.s32.totalorder %v625, 96
        %v1535 = vsel %vm1534, %v1531, %v1533
        %v1536 = vsel %vm1534, %v1533, %v1531
        %s1537 = scalar_lea.vmem %s4, 44
        %v1538 = vld [vmem:[%s1537] sm:$0x3]
        %v1540 = vlaneseq
        %v1541 = vshrl.u32 %v1540, 7
        %v1542 = vsub.s32 0, %v1541
        %v1543 = vrot.slane %v1538, %v1542
        %v1544 = vlaneseq
        %v1545 = vshrl.u32 %v1544, 7
        %v1546 = vsub.s32 1, %v1545
        %v1547 = vrot.slane %v1538, %v1546
        %v1550 = vmul.f32 %v1535, %v1543
        %v1551 = vmul.f32 %v1536, %v1547
        %v1554 = vcombine.low %v1550, %v1551
        %v1556 = vunpack.c.l.s4 1966171168
        %v1557 = vunpack.c.0.s8 %v1556
        %v1558 = vlaneseq
        %v1559 = vshrl.u32 %v1558, 7
        %v1560 = vsub.s32 %v1557, %v1559
        %v1561 = vrot.slane %v1554, %v1560
        %v1563 = vunpack.c.l.s4 1966171168
        %v1564 = vunpack.c.0.s8 %v1563
        %v1565 = vlaneseq
        %v1566 = vshrl.u32 %v1565, 7
        %v1567 = vsub.s32 %v1564, %v1566
        %v1568 = vrot.slane %v1561, %v1567
        %s1570 = scalar_lea.vmem [#allocation2], 38
        %1571 = vst.msk [vmem:[%s1570] ss:$8 sm:$0x3] %vm664, %v1568
        %1572 = vst.msk [vmem:[%s1570] ss:$8 sm:$0x0] %vm664, %v1568
        %1573 = vrot.lane.b32.xlu0 %v613, 95
        %v1574 = vpop.permute.xlu0 %1573
        %1575 = vrot.lane.b32.xlu0 %v617, 95
        %v1576 = vpop.permute.xlu0 %1575
        %vm1577 = vcmp.lt.s32.totalorder %v625, 95
        %v1578 = vsel %vm1577, %v1574, %v1576
        %v1579 = vsel %vm1577, %v1576, %v1574
        %s1580 = scalar_lea.vmem %s4, 46
        %v1581 = vld [vmem:[%s1580] sm:$0x3]
        %v1583 = vlaneseq
        %v1584 = vshrl.u32 %v1583, 7
        %v1585 = vsub.s32 0, %v1584
        %v1586 = vrot.slane %v1581, %v1585
        %v1587 = vlaneseq
        %v1588 = vshrl.u32 %v1587, 7
        %v1589 = vsub.s32 1, %v1588
        %v1590 = vrot.slane %v1581, %v1589
        %v1593 = vmul.f32 %v1578, %v1586
        %v1594 = vmul.f32 %v1579, %v1590
        %v1597 = vcombine.low %v1593, %v1594
        %v1599 = vunpack.c.l.s4 1966171168
        %v1600 = vunpack.c.0.s8 %v1599
        %v1601 = vlaneseq
        %v1602 = vshrl.u32 %v1601, 7
        %v1603 = vsub.s32 %v1600, %v1602
        %v1604 = vrot.slane %v1597, %v1603
        %v1606 = vunpack.c.l.s4 1966171168
        %v1607 = vunpack.c.0.s8 %v1606
        %v1608 = vlaneseq
        %v1609 = vshrl.u32 %v1608, 7
        %v1610 = vsub.s32 %v1607, %v1609
        %v1611 = vrot.slane %v1604, %v1610
        %s1613 = scalar_lea.vmem [#allocation2], 39
        %1614 = vst.msk [vmem:[%s1613] ss:$8 sm:$0x3] %vm664, %v1611
        %1615 = vst.msk [vmem:[%s1613] ss:$8 sm:$0x0] %vm664, %v1611
        %1616 = vrot.lane.b32.xlu0 %v613, 94
        %v1617 = vpop.permute.xlu0 %1616
        %1618 = vrot.lane.b32.xlu0 %v617, 94
        %v1619 = vpop.permute.xlu0 %1618
        %vm1620 = vcmp.lt.s32.totalorder %v625, 94
        %v1621 = vsel %vm1620, %v1617, %v1619
        %v1622 = vsel %vm1620, %v1619, %v1617
        %s1623 = scalar_lea.vmem %s4, 48
        %v1624 = vld [vmem:[%s1623] sm:$0x3]
        %v1626 = vlaneseq
        %v1627 = vshrl.u32 %v1626, 7
        %v1628 = vsub.s32 0, %v1627
        %v1629 = vrot.slane %v1624, %v1628
        %v1630 = vlaneseq
        %v1631 = vshrl.u32 %v1630, 7
        %v1632 = vsub.s32 1, %v1631
        %v1633 = vrot.slane %v1624, %v1632
        %v1636 = vmul.f32 %v1621, %v1629
        %v1637 = vmul.f32 %v1622, %v1633
        %v1640 = vcombine.low %v1636, %v1637
        %v1642 = vunpack.c.l.s4 1966171168
        %v1643 = vunpack.c.0.s8 %v1642
        %v1644 = vlaneseq
        %v1645 = vshrl.u32 %v1644, 7
        %v1646 = vsub.s32 %v1643, %v1645
        %v1647 = vrot.slane %v1640, %v1646
        %v1649 = vunpack.c.l.s4 1966171168
        %v1650 = vunpack.c.0.s8 %v1649
        %v1651 = vlaneseq
        %v1652 = vshrl.u32 %v1651, 7
        %v1653 = vsub.s32 %v1650, %v1652
        %v1654 = vrot.slane %v1647, %v1653
        %s1656 = scalar_lea.vmem [#allocation2], 48
        %1657 = vst.msk [vmem:[%s1656] ss:$8 sm:$0x3] %vm664, %v1654
        %1658 = vst.msk [vmem:[%s1656] ss:$8 sm:$0x0] %vm664, %v1654
        %v1659 = vld [vmem:[%s1] sm:$0xff]
        %v1660 = vld [vmem:[%s1 + $0x8] sm:$0xff]
        %v1661 = vld [vmem:[#allocation2] sm:$0xff]
        %v1662 = vld [vmem:[#allocation2 + $0x8] sm:$0xff]
        %v1663 = vld [vmem:[#allocation2 + $0x10] sm:$0xff]
        %v1664 = vld [vmem:[#allocation2 + $0x18] sm:$0xff]
        %v1665 = vld [vmem:[#allocation2 + $0x20] sm:$0xff]
        %v1666 = vld [vmem:[#allocation2 + $0x28] sm:$0xff]
        %v1667 = vld [vmem:[#allocation2 + $0x30] sm:$0x1]
        %v1668 = vld [vmem:[#allocation2 + $0x38] sm:$0x1]
        %v1669 = vld [vmem:[%s2] sm:$0xff]
        %v1670 = vld [vmem:[%s2 + $0x8] sm:$0xff]
        %1672 = vset.pattern.permute.xlu0 0
        %1673 = vperm.xlu0 %1672, %v1669
        %v1674 = vpop.permute.xlu0 %1673
        %1677 = vset.pattern.permute.xlu0 0
        %1678 = vperm.xlu0 %1677, %v1670
        %v1679 = vpop.permute.xlu0 %1678
        %vm1681 = vcmask 203776
        %v1683 = vsel %vm1681, %v1659, 0
        %v1686 = vsel %vm1681, %v1660, 0
        %vm1688 = vcmask 1040384
        %v1690 = vsel %vm1688, %v1667, 0
        %v1693 = vsel %vm1688, %v1668, 0
        %1695 = vmatprep.subr.mxu0 %v1662
        %1696 = vmatpush1.msra.mxu0 %v1661
        %1697 = vmatprep.subr.mxu0 %v1664
        %1698 = vmatpush1.msra.mxu0 %v1663
        %1699 = vmatprep.subr.mxu0 %v1666
        %1700 = vmatpush1.msra.mxu0 %v1665
        %1701 = vmatprep.subr.mxu0 %v1693
        %1702 = vmatpush1.msra.mxu0 %v1690
        %1703 = vmatprep.subr.mxu0 0.0
        %1704 = vmatpush1.msra.mxu0 0.0
        %1705 = vmatprep.subr.mxu0 0.0
        %1706 = vmatpush1.msra.mxu0 0.0
        %1707 = vmatprep.subr.mxu0 0.0
        %1708 = vmatpush1.msra.mxu0 0.0
        %1709 = vmatprep.subr.mxu0 0.0
        %1710 = vmatpush1.msra.mxu0 0.0
        %1711 = vmatprep.subr.mxu0 0.0
        %1712 = vmatpush1.msra.mxu0 0.0
        %1713 = vmatprep.subr.mxu0 0.0
        %1714 = vmatpush1.msra.mxu0 0.0
        %1715 = vmatprep.subr.mxu0 0.0
        %1716 = vmatpush1.msra.mxu0 0.0
        %1717 = vmatprep.subr.mxu0 0.0
        %1718 = vmatpush1.msra.mxu0 0.0
        %1719 = vmatprep.subr.mxu0 0.0
        %1720 = vmatpush1.msra.mxu0 0.0
        %1721 = vmatprep.subr.mxu0 0.0
        %1722 = vmatpush1.msra.mxu0 0.0
        %1723 = vmatprep.subr.mxu0 0.0
        %1724 = vmatpush1.msra.mxu0 0.0
        %1725 = vmatprep.subr.mxu0 0.0
        %1726 = vmatpush1.msra.mxu0 0.0
        %1727 = vmatprep.subr.mxu0 0.0
        %1728 = vmatpush1.msra.mxu0 0.0
        %1729 = vmatprep.subr.mxu0 0.0
        %1730 = vmatpush1.msra.mxu0 0.0
        %1731 = vmatprep.subr.mxu0 0.0
        %1732 = vmatpush1.msra.mxu0 0.0
        %1733 = vmatprep.subr.mxu0 0.0
        %1734 = vmatpush1.msra.mxu0 0.0
        %1735 = vmatprep.subr.mxu0 0.0
        %1736 = vmatpush1.msra.mxu0 0.0
        %1737 = vmatprep.subr.mxu0 0.0
        %1738 = vmatpush1.msra.mxu0 0.0
        %1739 = vmatprep.subr.mxu0 0.0
        %1740 = vmatpush1.msra.mxu0 0.0
        %1741 = vmatprep.subr.mxu0 0.0
        %1742 = vmatpush1.msra.mxu0 0.0
        %1743 = vmatprep.subr.mxu0 0.0
        %1744 = vmatpush1.msra.mxu0 0.0
        %1745 = vmatprep.subr.mxu0 0.0
        %1746 = vmatpush1.msra.mxu0 0.0
        %1747 = vmatprep.subr.mxu0 0.0
        %1748 = vmatpush1.msra.mxu0 0.0
        %1749 = vmatprep.subr.mxu0 0.0
        %1750 = vmatpush1.msra.mxu0 0.0
        %1751 = vmatprep.subr.mxu0 0.0
        %1752 = vmatpush1.msra.mxu0 0.0
        %1753 = vmatprep.subr.mxu0 0.0
        %1754 = vmatpush1.msra.mxu0 0.0
        %1755 = vmatprep.subr.mxu0 0.0
        %1756 = vmatpush1.msra.mxu0 0.0
        %1757 = vmatprep.subr.mxu0 0.0
        %1758 = vmatpush1.msra.mxu0 0.0
        %1759 = vmatprep.mubr.f32.mxu0 0.0
        %1760 = vmatmul.mubr.f32.gmra.mrb[0].mxu0 %v1683
        %v1761 = vpop.f32.mrb[0].mxu0
        %v1762 = vadd.f32 %v1674, %v1761
        %v1763 = vpop.f32.mrb[0].mxu0
        %v1764 = vadd.f32 %v1674, %v1763
        %1765 = vmatprep.mubr.f32.mxu0 0.0
        %1766 = vmatmul.mubr.f32.gmra.mrb[0].mxu0 %v1686
        %v1767 = vpop.f32.mrb[0].mxu0
        %v1768 = vadd.f32 %v1679, %v1767
        %v1769 = vpop.f32.mrb[0].mxu0
        %v1770 = vadd.f32 %v1679, %v1769
        %1771 = vdwg.mxu0
        %v1772 = vld [vmem:[%s3] sm:$0xff]
        %v1773 = vld [vmem:[%s3 + $0x8] sm:$0xff]
        %v1774 = vadd.f32 %v1762, %v1764
        %1775 = vadd.xlane.f32.xlu0 %v1774
        %v1776 = vpop.xlane.xlu0 %1775
        %v1777 = vadd.f32 %v1768, %v1770
        %1778 = vadd.xlane.f32.xlu0 %v1777
        %v1779 = vpop.xlane.xlu0 %1778
        %v1780 = vmul.f32 %v1762, %v1762
        %v1781 = vmul.f32 %v1764, %v1764
        %v1782 = vmul.f32 %v1768, %v1768
        %v1783 = vmul.f32 %v1770, %v1770
        %v1784 = vadd.f32 %v1780, %v1781
        %1785 = vadd.xlane.f32.xlu0 %v1784
        %v1786 = vpop.xlane.xlu0 %1785
        %v1787 = vadd.f32 %v1782, %v1783
        %1788 = vadd.xlane.f32.xlu0 %v1787
        %v1789 = vpop.xlane.xlu0 %1788
        %vm1790 = vcmask 7168
        %v1791 = vsel %vm1790, %v1776, %v1786
        %v1792 = vsel %vm1790, %v1779, %v1789
        %vm1793 = vcmask 130048
        %v1795 = vsel %vm1793, %v1772, 0
        %v1798 = vsel %vm1793, %v1773, 0
        %1800 = vmatprep.subr.mxu0 0.0
        %1801 = vmatpush1.msra.mxu0 %v1791
        %1802 = vmatprep.subr.mxu0 0.0
        %1803 = vmatpush1.msra.mxu0 %v1792
        %1804 = vmatprep.subr.mxu0 0.0
        %1805 = vmatpush1.msra.mxu0 0.0
        %1806 = vmatprep.subr.mxu0 0.0
        %1807 = vmatpush1.msra.mxu0 0.0
        %1808 = vmatprep.subr.mxu0 0.0
        %1809 = vmatpush1.msra.mxu0 0.0
        %1810 = vmatprep.subr.mxu0 0.0
        %1811 = vmatpush1.msra.mxu0 0.0
        %1812 = vmatprep.subr.mxu0 0.0
        %1813 = vmatpush1.msra.mxu0 0.0
        %1814 = vmatprep.subr.mxu0 0.0
        %1815 = vmatpush1.msra.mxu0 0.0
        %1816 = vmatprep.subr.mxu0 0.0
        %1817 = vmatpush1.msra.mxu0 0.0
        %1818 = vmatprep.subr.mxu0 0.0
        %1819 = vmatpush1.msra.mxu0 0.0
        %1820 = vmatprep.subr.mxu0 0.0
        %1821 = vmatpush1.msra.mxu0 0.0
        %1822 = vmatprep.subr.mxu0 0.0
        %1823 = vmatpush1.msra.mxu0 0.0
        %1824 = vmatprep.subr.mxu0 0.0
        %1825 = vmatpush1.msra.mxu0 0.0
        %1826 = vmatprep.subr.mxu0 0.0
        %1827 = vmatpush1.msra.mxu0 0.0
        %1828 = vmatprep.subr.mxu0 0.0
        %1829 = vmatpush1.msra.mxu0 0.0
        %1830 = vmatprep.subr.mxu0 0.0
        %1831 = vmatpush1.msra.mxu0 0.0
        %1832 = vmatprep.subr.mxu0 0.0
        %1833 = vmatpush1.msra.mxu0 0.0
        %1834 = vmatprep.subr.mxu0 0.0
        %1835 = vmatpush1.msra.mxu0 0.0
        %1836 = vmatprep.subr.mxu0 0.0
        %1837 = vmatpush1.msra.mxu0 0.0
        %1838 = vmatprep.subr.mxu0 0.0
        %1839 = vmatpush1.msra.mxu0 0.0
        %1840 = vmatprep.subr.mxu0 0.0
        %1841 = vmatpush1.msra.mxu0 0.0
        %1842 = vmatprep.subr.mxu0 0.0
        %1843 = vmatpush1.msra.mxu0 0.0
        %1844 = vmatprep.subr.mxu0 0.0
        %1845 = vmatpush1.msra.mxu0 0.0
        %1846 = vmatprep.subr.mxu0 0.0
        %1847 = vmatpush1.msra.mxu0 0.0
        %1848 = vmatprep.subr.mxu0 0.0
        %1849 = vmatpush1.msra.mxu0 0.0
        %1850 = vmatprep.subr.mxu0 0.0
        %1851 = vmatpush1.msra.mxu0 0.0
        %1852 = vmatprep.subr.mxu0 0.0
        %1853 = vmatpush1.msra.mxu0 0.0
        %1854 = vmatprep.subr.mxu0 0.0
        %1855 = vmatpush1.msra.mxu0 0.0
        %1856 = vmatprep.subr.mxu0 0.0
        %1857 = vmatpush1.msra.mxu0 0.0
        %1858 = vmatprep.subr.mxu0 0.0
        %1859 = vmatpush1.msra.mxu0 0.0
        %1860 = vmatprep.subr.mxu0 0.0
        %1861 = vmatpush1.msra.mxu0 0.0
        %1862 = vmatprep.subr.mxu0 0.0
        %1863 = vmatpush1.msra.mxu0 0.0
        %1864 = vmatprep.mubr.f32.mxu0 0.0
        %1865 = vmatmul.mubr.f32.gmra.mrb[0].mxu0 %v1795
        %v1866 = vpop.f32.mrb[0].mxu0
        %v1867 = vadd.f32 0.0, %v1866
        %v1868 = vpop.f32.mrb[0].mxu0
        %1869 = vmatprep.mubr.f32.mxu0 0.0
        %1870 = vmatmul.mubr.f32.gmra.mrb[0].mxu0 %v1798
        %v1871 = vpop.f32.mrb[0].mxu0
        %v1872 = vadd.f32 0.0, %v1871
        %v1873 = vpop.f32.mrb[0].mxu0
        %1874 = vdwg.mxu0
        %v1875 = vmul.f32 %v1867, %v1867
        %v1876 = vmul.f32 %v1872, %v1872
        %1879 = vrot.lane.b32.xlu0 %v1875, 1
        %v1880 = vpop.permute.xlu0 %1879
        %1881 = vrot.lane.b32.xlu0 %v1876, 1
        %v1882 = vpop.permute.xlu0 %1881
        %v1885 = vsub.f32 %v1867, %v1880
        %v1886 = vsub.f32 %v1872, %v1882
        %1888 = vset.pattern.permute.xlu0 0
        %1889 = vperm.xlu0 %1888, %v1867
        %v1890 = vpop.permute.xlu0 %1889
        %1893 = vset.pattern.permute.xlu0 0
        %1894 = vperm.xlu0 %1893, %v1872
        %v1895 = vpop.permute.xlu0 %1894
        %v1897 = vsub.f32 %v1762, %v1890
        %v1898 = vsub.f32 %v1764, %v1890
        %v1899 = vsub.f32 %v1768, %v1895
        %v1900 = vsub.f32 %v1770, %v1895
        %v1901 = vadd.f32 %v1885, 1e-05
        %v1902 = vadd.f32 %v1886, 1e-05
        %v1903 = vrsqrt.pop %v1901
        %v1904 = vrsqrt.pop %v1902
        %1906 = vset.pattern.permute.xlu0 1
        %1907 = vperm.xlu0 %1906, %v1903
        %v1908 = vpop.permute.xlu0 %1907
        %1911 = vset.pattern.permute.xlu0 1
        %1912 = vperm.xlu0 %1911, %v1904
        %v1913 = vpop.permute.xlu0 %1912
        %v1915 = vmul.f32 %v1897, %v1908
        %v1916 = vmul.f32 %v1898, %v1908
        %v1917 = vmul.f32 %v1899, %v1913
        %v1918 = vmul.f32 %v1900, %v1913
        %1919 = vset.pattern.permute.xlu0 1
        %1920 = vperm.xlu0 %1919, %v1669
        %v1921 = vpop.permute.xlu0 %1920
        %1923 = vset.pattern.permute.xlu0 1
        %1924 = vperm.xlu0 %1923, %v1670
        %v1925 = vpop.permute.xlu0 %1924
        %v1927 = vmul.f32 %v1915, %v1921
        %v1928 = vmul.f32 %v1916, %v1921
        %v1929 = vmul.f32 %v1917, %v1925
        %v1930 = vmul.f32 %v1918, %v1925
        %1931 = vset.pattern.permute.xlu0 2
        %1932 = vperm.xlu0 %1931, %v1669
        %v1933 = vpop.permute.xlu0 %1932
        %1935 = vset.pattern.permute.xlu0 2
        %1936 = vperm.xlu0 %1935, %v1670
        %v1937 = vpop.permute.xlu0 %1936
        %v1939 = vadd.f32 %v1927, %v1933
        %v1940 = vadd.f32 %v1928, %v1933
        %v1941 = vadd.f32 %v1929, %v1937
        %v1942 = vadd.f32 %v1930, %v1937
        %v1943 = vmax.f32 %v1939, 0.0
        %v1944 = vmax.f32 %v1940, 0.0
        %v1945 = vmax.f32 %v1941, 0.0
        %v1946 = vmax.f32 %v1942, 0.0
        %1947 = vrot.lane.b32.xlu0 %v1943, 17
        %v1948 = vpop.permute.xlu0 %1947
        %1949 = vrot.lane.b32.xlu0 %v1945, 17
        %v1950 = vpop.permute.xlu0 %1949
        %1951 = vrot.lane.b32.xlu0 %v1944, 17
        %v1952 = vpop.permute.xlu0 %1951
        %1953 = vrot.lane.b32.xlu0 %v1946, 17
        %v1954 = vpop.permute.xlu0 %1953
        %v1955 = vsel %vm886, %v1948, %v1952
        %v1956 = vsel %vm886, %v1950, %v1954
        %v1957 = vsel %vm886, %v1952, %v1948
        %v1958 = vsel %vm886, %v1954, %v1950
        %v1959 = vld [vmem:[%s8] sm:$0x3]
        %v1961 = vlaneseq
        %v1962 = vshrl.u32 %v1961, 7
        %v1963 = vsub.s32 0, %v1962
        %v1964 = vrot.slane %v1959, %v1963
        %v1965 = vlaneseq
        %v1966 = vshrl.u32 %v1965, 7
        %v1967 = vsub.s32 1, %v1966
        %v1968 = vrot.slane %v1959, %v1967
        %v1971 = vmul.f32 %v1957, %v1964
        %v1972 = vmul.f32 %v1955, %v1968
        %v1973 = vmul.f32 %v1958, %v1964
        %v1974 = vmul.f32 %v1956, %v1968
        %1975 = vst [vmem:[#allocation3] sm:$0xff] %v1971
        %1976 = vst [vmem:[#allocation3 + $0x8] sm:$0xff] %v1972
        %1977 = vst [vmem:[#allocation3 + $0x10] sm:$0xff] %v1973
        %1978 = vst [vmem:[#allocation3 + $0x18] sm:$0xff] %v1974
        %1979 = vrot.lane.b32.xlu0 %v1943, 16
        %v1980 = vpop.permute.xlu0 %1979
        %1981 = vrot.lane.b32.xlu0 %v1945, 16
        %v1982 = vpop.permute.xlu0 %1981
        %1983 = vrot.lane.b32.xlu0 %v1944, 16
        %v1984 = vpop.permute.xlu0 %1983
        %1985 = vrot.lane.b32.xlu0 %v1946, 16
        %v1986 = vpop.permute.xlu0 %1985
        %v1987 = vsel %vm929, %v1980, %v1984
        %v1988 = vsel %vm929, %v1982, %v1986
        %v1989 = vsel %vm929, %v1984, %v1980
        %v1990 = vsel %vm929, %v1986, %v1982
        %s1991 = scalar_lea.vmem %s8, 2
        %v1992 = vld [vmem:[%s1991] sm:$0x3]
        %v1994 = vlaneseq
        %v1995 = vshrl.u32 %v1994, 7
        %v1996 = vsub.s32 0, %v1995
        %v1997 = vrot.slane %v1992, %v1996
        %v1998 = vlaneseq
        %v1999 = vshrl.u32 %v1998, 7
        %v2000 = vsub.s32 1, %v1999
        %v2001 = vrot.slane %v1992, %v2000
        %v2004 = vmul.f32 %v1989, %v1997
        %v2005 = vmul.f32 %v1987, %v2001
        %v2006 = vmul.f32 %v1990, %v1997
        %v2007 = vmul.f32 %v1988, %v2001
        %2008 = vst [vmem:[#allocation3 + $0x20] sm:$0xff] %v2004
        %2009 = vst [vmem:[#allocation3 + $0x28] sm:$0xff] %v2005
        %2010 = vst [vmem:[#allocation3 + $0x30] sm:$0xff] %v2006
        %2011 = vst [vmem:[#allocation3 + $0x38] sm:$0xff] %v2007
        %2012 = vrot.lane.b32.xlu0 %v1943, 15
        %v2013 = vpop.permute.xlu0 %2012
        %2014 = vrot.lane.b32.xlu0 %v1945, 15
        %v2015 = vpop.permute.xlu0 %2014
        %2016 = vrot.lane.b32.xlu0 %v1944, 15
        %v2017 = vpop.permute.xlu0 %2016
        %2018 = vrot.lane.b32.xlu0 %v1946, 15
        %v2019 = vpop.permute.xlu0 %2018
        %v2020 = vsel %vm972, %v2013, %v2017
        %v2021 = vsel %vm972, %v2015, %v2019
        %v2022 = vsel %vm972, %v2017, %v2013
        %v2023 = vsel %vm972, %v2019, %v2015
        %s2024 = scalar_lea.vmem %s8, 4
        %v2025 = vld [vmem:[%s2024] sm:$0x3]
        %v2027 = vlaneseq
        %v2028 = vshrl.u32 %v2027, 7
        %v2029 = vsub.s32 0, %v2028
        %v2030 = vrot.slane %v2025, %v2029
        %v2031 = vlaneseq
        %v2032 = vshrl.u32 %v2031, 7
        %v2033 = vsub.s32 1, %v2032
        %v2034 = vrot.slane %v2025, %v2033
        %v2037 = vmul.f32 %v2022, %v2030
        %v2038 = vmul.f32 %v2020, %v2034
        %v2039 = vmul.f32 %v2023, %v2030
        %v2040 = vmul.f32 %v2021, %v2034
        %2041 = vst [vmem:[#allocation3 + $0x40] sm:$0xff] %v2037
        %2042 = vst [vmem:[#allocation3 + $0x48] sm:$0xff] %v2038
        %2043 = vst [vmem:[#allocation3 + $0x50] sm:$0xff] %v2039
        %2044 = vst [vmem:[#allocation3 + $0x58] sm:$0xff] %v2040
        %2045 = vrot.lane.b32.xlu0 %v1943, 1
        %v2046 = vpop.permute.xlu0 %2045
        %2047 = vrot.lane.b32.xlu0 %v1945, 1
        %v2048 = vpop.permute.xlu0 %2047
        %2049 = vrot.lane.b32.xlu0 %v1944, 1
        %v2050 = vpop.permute.xlu0 %2049
        %2051 = vrot.lane.b32.xlu0 %v1946, 1
        %v2052 = vpop.permute.xlu0 %2051
        %v2053 = vsel %vm1101, %v2046, %v2050
        %v2054 = vsel %vm1101, %v2048, %v2052
        %v2055 = vsel %vm1101, %v2050, %v2046
        %v2056 = vsel %vm1101, %v2052, %v2048
        %s2057 = scalar_lea.vmem %s8, 6
        %v2058 = vld [vmem:[%s2057] sm:$0x3]
        %v2060 = vlaneseq
        %v2061 = vshrl.u32 %v2060, 7
        %v2062 = vsub.s32 0, %v2061
        %v2063 = vrot.slane %v2058, %v2062
        %v2064 = vlaneseq
        %v2065 = vshrl.u32 %v2064, 7
        %v2066 = vsub.s32 1, %v2065
        %v2067 = vrot.slane %v2058, %v2066
        %v2070 = vmul.f32 %v2055, %v2063
        %v2071 = vmul.f32 %v2053, %v2067
        %v2072 = vmul.f32 %v2056, %v2063
        %v2073 = vmul.f32 %v2054, %v2067
        %2074 = vst [vmem:[#allocation3 + $0x60] sm:$0xff] %v2070
        %2075 = vst [vmem:[#allocation3 + $0x68] sm:$0xff] %v2071
        %2076 = vst [vmem:[#allocation3 + $0x70] sm:$0xff] %v2072
        %2077 = vst [vmem:[#allocation3 + $0x78] sm:$0xff] %v2073
        %2078 = vst [vmem:[#allocation3 + $0x80] sm:$0xff] %v1943
        %2079 = vst [vmem:[#allocation3 + $0x88] sm:$0xff] %v1944
        %2080 = vst [vmem:[#allocation3 + $0x90] sm:$0xff] %v1945
        %2081 = vst [vmem:[#allocation3 + $0x98] sm:$0xff] %v1946
        %2082 = vrot.lane.b32.xlu0 %v1943, 127
        %v2083 = vpop.permute.xlu0 %2082
        %2084 = vrot.lane.b32.xlu0 %v1945, 127
        %v2085 = vpop.permute.xlu0 %2084
        %2086 = vrot.lane.b32.xlu0 %v1944, 127
        %v2087 = vpop.permute.xlu0 %2086
        %2088 = vrot.lane.b32.xlu0 %v1946, 127
        %v2089 = vpop.permute.xlu0 %2088
        %v2090 = vsel %vm1147, %v2083, %v2087
        %v2091 = vsel %vm1147, %v2085, %v2089
        %v2092 = vsel %vm1147, %v2087, %v2083
        %v2093 = vsel %vm1147, %v2089, %v2085
        %s2094 = scalar_lea.vmem %s8, 10
        %v2095 = vld [vmem:[%s2094] sm:$0x3]
        %v2097 = vlaneseq
        %v2098 = vshrl.u32 %v2097, 7
        %v2099 = vsub.s32 0, %v2098
        %v2100 = vrot.slane %v2095, %v2099
        %v2101 = vlaneseq
        %v2102 = vshrl.u32 %v2101, 7
        %v2103 = vsub.s32 1, %v2102
        %v2104 = vrot.slane %v2095, %v2103
        %v2107 = vmul.f32 %v2090, %v2100
        %v2108 = vmul.f32 %v2092, %v2104
        %v2109 = vmul.f32 %v2091, %v2100
        %v2110 = vmul.f32 %v2093, %v2104
        %2111 = vst [vmem:[#allocation3 + $0xa0] sm:$0xff] %v2107
        %2112 = vst [vmem:[#allocation3 + $0xa8] sm:$0xff] %v2108
        %2113 = vst [vmem:[#allocation3 + $0xb0] sm:$0xff] %v2109
        %2114 = vst [vmem:[#allocation3 + $0xb8] sm:$0xff] %v2110
        %2115 = vrot.lane.b32.xlu0 %v1943, 113
        %v2116 = vpop.permute.xlu0 %2115
        %2117 = vrot.lane.b32.xlu0 %v1945, 113
        %v2118 = vpop.permute.xlu0 %2117
        %2119 = vrot.lane.b32.xlu0 %v1944, 113
        %v2120 = vpop.permute.xlu0 %2119
        %2121 = vrot.lane.b32.xlu0 %v1946, 113
        %v2122 = vpop.permute.xlu0 %2121
        %v2123 = vsel %vm1276, %v2116, %v2120
        %v2124 = vsel %vm1276, %v2118, %v2122
        %v2125 = vsel %vm1276, %v2120, %v2116
        %v2126 = vsel %vm1276, %v2122, %v2118
        %s2127 = scalar_lea.vmem %s8, 12
        %v2128 = vld [vmem:[%s2127] sm:$0x3]
        %v2130 = vlaneseq
        %v2131 = vshrl.u32 %v2130, 7
        %v2132 = vsub.s32 0, %v2131
        %v2133 = vrot.slane %v2128, %v2132
        %v2134 = vlaneseq
        %v2135 = vshrl.u32 %v2134, 7
        %v2136 = vsub.s32 1, %v2135
        %v2137 = vrot.slane %v2128, %v2136
        %v2140 = vmul.f32 %v2123, %v2133
        %v2141 = vmul.f32 %v2125, %v2137
        %v2142 = vmul.f32 %v2124, %v2133
        %v2143 = vmul.f32 %v2126, %v2137
        %2144 = vst [vmem:[#allocation3 + $0xc0] sm:$0xff] %v2140
        %2145 = vst [vmem:[#allocation3 + $0xc8] sm:$0xff] %v2141
        %2146 = vst [vmem:[#allocation3 + $0xd0] sm:$0xff] %v2142
        %2147 = vst [vmem:[#allocation3 + $0xd8] sm:$0xff] %v2143
        %2148 = vrot.lane.b32.xlu0 %v1943, 112
        %v2149 = vpop.permute.xlu0 %2148
        %2150 = vrot.lane.b32.xlu0 %v1945, 112
        %v2151 = vpop.permute.xlu0 %2150
        %2152 = vrot.lane.b32.xlu0 %v1944, 112
        %v2153 = vpop.permute.xlu0 %2152
        %2154 = vrot.lane.b32.xlu0 %v1946, 112
        %v2155 = vpop.permute.xlu0 %2154
        %v2156 = vsel %vm1319, %v2149, %v2153
        %v2157 = vsel %vm1319, %v2151, %v2155
        %v2158 = vsel %vm1319, %v2153, %v2149
        %v2159 = vsel %vm1319, %v2155, %v2151
        %s2160 = scalar_lea.vmem %s8, 14
        %v2161 = vld [vmem:[%s2160] sm:$0x3]
        %v2163 = vlaneseq
        %v2164 = vshrl.u32 %v2163, 7
        %v2165 = vsub.s32 0, %v2164
        %v2166 = vrot.slane %v2161, %v2165
        %v2167 = vlaneseq
        %v2168 = vshrl.u32 %v2167, 7
        %v2169 = vsub.s32 1, %v2168
        %v2170 = vrot.slane %v2161, %v2169
        %v2173 = vmul.f32 %v2156, %v2166
        %v2174 = vmul.f32 %v2158, %v2170
        %v2175 = vmul.f32 %v2157, %v2166
        %v2176 = vmul.f32 %v2159, %v2170
        %2177 = vst [vmem:[#allocation3 + $0xe0] sm:$0xff] %v2173
        %2178 = vst [vmem:[#allocation3 + $0xe8] sm:$0xff] %v2174
        %2179 = vst [vmem:[#allocation3 + $0xf0] sm:$0xff] %v2175
        %2180 = vst [vmem:[#allocation3 + $0xf8] sm:$0xff] %v2176
        %2181 = vrot.lane.b32.xlu0 %v1943, 111
        %v2182 = vpop.permute.xlu0 %2181
        %2183 = vrot.lane.b32.xlu0 %v1945, 111
        %v2184 = vpop.permute.xlu0 %2183
        %2185 = vrot.lane.b32.xlu0 %v1944, 111
        %v2186 = vpop.permute.xlu0 %2185
        %2187 = vrot.lane.b32.xlu0 %v1946, 111
        %v2188 = vpop.permute.xlu0 %2187
        %v2189 = vsel %vm1362, %v2182, %v2186
        %v2190 = vsel %vm1362, %v2184, %v2188
        %v2191 = vsel %vm1362, %v2186, %v2182
        %v2192 = vsel %vm1362, %v2188, %v2184
        %s2193 = scalar_lea.vmem %s8, 16
        %v2194 = vld [vmem:[%s2193] sm:$0x3]
        %v2196 = vlaneseq
        %v2197 = vshrl.u32 %v2196, 7
        %v2198 = vsub.s32 0, %v2197
        %v2199 = vrot.slane %v2194, %v2198
        %v2200 = vlaneseq
        %v2201 = vshrl.u32 %v2200, 7
        %v2202 = vsub.s32 1, %v2201
        %v2203 = vrot.slane %v2194, %v2202
        %v2206 = vmul.f32 %v2189, %v2199
        %v2207 = vmul.f32 %v2191, %v2203
        %v2208 = vmul.f32 %v2190, %v2199
        %v2209 = vmul.f32 %v2192, %v2203
        %2210 = vst [vmem:[#allocation3 + $0x100] sm:$0xff] %v2206
        %2211 = vst [vmem:[#allocation3 + $0x108] sm:$0xff] %v2207
        %2212 = vst [vmem:[#allocation3 + $0x110] sm:$0xff] %v2208
        %2213 = vst [vmem:[#allocation3 + $0x118] sm:$0xff] %v2209
        %v2214 = vld [vmem:[%s5] sm:$0xff]
        %v2215 = vld [vmem:[%s5 + $0x8] sm:$0xff]
        %v2216 = vld [vmem:[%s5 + $0x10] sm:$0xff]
        %v2217 = vld [vmem:[%s5 + $0x18] sm:$0xff]
        %v2218 = vld [vmem:[%s5 + $0x20] sm:$0xff]
        %v2219 = vld [vmem:[%s5 + $0x28] sm:$0xff]
        %v2220 = vld [vmem:[#allocation3] sm:$0xff]
        %v2221 = vld [vmem:[#allocation3 + $0x8] sm:$0xff]
        %v2222 = vld [vmem:[#allocation3 + $0x10] sm:$0xff]
        %v2223 = vld [vmem:[#allocation3 + $0x18] sm:$0xff]
        %v2224 = vld [vmem:[#allocation3 + $0x20] sm:$0xff]
        %v2225 = vld [vmem:[#allocation3 + $0x28] sm:$0xff]
        %v2226 = vld [vmem:[#allocation3 + $0x30] sm:$0xff]
        %v2227 = vld [vmem:[#allocation3 + $0x38] sm:$0xff]
        %v2228 = vld [vmem:[#allocation3 + $0x40] sm:$0xff]
        %v2229 = vld [vmem:[#allocation3 + $0x48] sm:$0xff]
        %v2230 = vld [vmem:[#allocation3 + $0x50] sm:$0xff]
        %v2231 = vld [vmem:[#allocation3 + $0x58] sm:$0xff]
        %v2232 = vld [vmem:[#allocation3 + $0x60] sm:$0xff]
        %v2233 = vld [vmem:[#allocation3 + $0x68] sm:$0xff]
        %v2234 = vld [vmem:[#allocation3 + $0x70] sm:$0xff]
        %v2235 = vld [vmem:[#allocation3 + $0x78] sm:$0xff]
        %v2236 = vld [vmem:[#allocation3 + $0x80] sm:$0xff]
        %v2237 = vld [vmem:[#allocation3 + $0x88] sm:$0xff]
        %v2238 = vld [vmem:[#allocation3 + $0x90] sm:$0xff]
        %v2239 = vld [vmem:[#allocation3 + $0x98] sm:$0xff]
        %v2240 = vld [vmem:[#allocation3 + $0xa0] sm:$0xff]
        %v2241 = vld [vmem:[#allocation3 + $0xa8] sm:$0xff]
        %v2242 = vld [vmem:[#allocation3 + $0xb0] sm:$0xff]
        %v2243 = vld [vmem:[#allocation3 + $0xb8] sm:$0xff]
        %v2244 = vld [vmem:[#allocation3 + $0xc0] sm:$0xff]
        %v2245 = vld [vmem:[#allocation3 + $0xc8] sm:$0xff]
        %v2246 = vld [vmem:[#allocation3 + $0xd0] sm:$0xff]
        %v2247 = vld [vmem:[#allocation3 + $0xd8] sm:$0xff]
        %v2248 = vld [vmem:[#allocation3 + $0xe0] sm:$0xff]
        %v2249 = vld [vmem:[#allocation3 + $0xe8] sm:$0xff]
        %v2250 = vld [vmem:[#allocation3 + $0xf0] sm:$0xff]
        %v2251 = vld [vmem:[#allocation3 + $0xf8] sm:$0xff]
        %v2252 = vld [vmem:[#allocation3 + $0x100] sm:$0xff]
        %v2253 = vld [vmem:[#allocation3 + $0x108] sm:$0xff]
        %v2254 = vld [vmem:[#allocation3 + $0x110] sm:$0xff]
        %v2255 = vld [vmem:[#allocation3 + $0x118] sm:$0xff]
        %v2256 = vld [vmem:[%s6] sm:$0xff]
        %v2257 = vld [vmem:[%s6 + $0x8] sm:$0xff]
        %v2258 = vld [vmem:[%s6 + $0x10] sm:$0xff]
        %2260 = vset.pattern.permute.xlu0 0
        %2261 = vperm.xlu0 %2260, %v2256
        %v2262 = vpop.permute.xlu0 %2261
        %2265 = vset.pattern.permute.xlu0 0
        %2266 = vperm.xlu0 %2265, %v2257
        %v2267 = vpop.permute.xlu0 %2266
        %2270 = vset.pattern.permute.xlu0 0
        %2271 = vperm.xlu0 %2270, %v2258
        %v2272 = vpop.permute.xlu0 %2271
        %v2275 = vsel %vm1793, %v2215, 0
        %v2278 = vsel %vm1793, %v2217, 0
        %v2281 = vsel %vm1793, %v2219, 0
        %2283 = vmatprep.subr.mxu0 %v2221
        %2284 = vmatpush1.msra.mxu0 %v2220
        %2285 = vmatprep.subr.mxu0 %v2223
        %2286 = vmatpush1.msra.mxu0 %v2222
        %2287 = vmatprep.subr.mxu0 %v2225
        %2288 = vmatpush1.msra.mxu0 %v2224
        %2289 = vmatprep.subr.mxu0 %v2227
        %2290 = vmatpush1.msra.mxu0 %v2226
        %2291 = vmatprep.subr.mxu0 %v2229
        %2292 = vmatpush1.msra.mxu0 %v2228
        %2293 = vmatprep.subr.mxu0 %v2231
        %2294 = vmatpush1.msra.mxu0 %v2230
        %2295 = vmatprep.subr.mxu0 %v2233
        %2296 = vmatpush1.msra.mxu0 %v2232
        %2297 = vmatprep.subr.mxu0 %v2235
        %2298 = vmatpush1.msra.mxu0 %v2234
        %2299 = vmatprep.subr.mxu0 %v2237
        %2300 = vmatpush1.msra.mxu0 %v2236
        %2301 = vmatprep.subr.mxu0 %v2239
        %2302 = vmatpush1.msra.mxu0 %v2238
        %2303 = vmatprep.subr.mxu0 %v2241
        %2304 = vmatpush1.msra.mxu0 %v2240
        %2305 = vmatprep.subr.mxu0 %v2243
        %2306 = vmatpush1.msra.mxu0 %v2242
        %2307 = vmatprep.subr.mxu0 %v2245
        %2308 = vmatpush1.msra.mxu0 %v2244
        %2309 = vmatprep.subr.mxu0 %v2247
        %2310 = vmatpush1.msra.mxu0 %v2246
        %2311 = vmatprep.subr.mxu0 %v2249
        %2312 = vmatpush1.msra.mxu0 %v2248
        %2313 = vmatprep.subr.mxu0 %v2251
        %2314 = vmatpush1.msra.mxu0 %v2250
        %2315 = vmatprep.subr.mxu0 %v2253
        %2316 = vmatpush1.msra.mxu0 %v2252
        %2317 = vmatprep.subr.mxu0 %v2255
        %2318 = vmatpush1.msra.mxu0 %v2254
        %2319 = vmatprep.subr.mxu0 0.0
        %2320 = vmatpush1.msra.mxu0 0.0
        %2321 = vmatprep.subr.mxu0 0.0
        %2322 = vmatpush1.msra.mxu0 0.0
        %2323 = vmatprep.subr.mxu0 0.0
        %2324 = vmatpush1.msra.mxu0 0.0
        %2325 = vmatprep.subr.mxu0 0.0
        %2326 = vmatpush1.msra.mxu0 0.0
        %2327 = vmatprep.subr.mxu0 0.0
        %2328 = vmatpush1.msra.mxu0 0.0
        %2329 = vmatprep.subr.mxu0 0.0
        %2330 = vmatpush1.msra.mxu0 0.0
        %2331 = vmatprep.subr.mxu0 0.0
        %2332 = vmatpush1.msra.mxu0 0.0
        %2333 = vmatprep.subr.mxu0 0.0
        %2334 = vmatpush1.msra.mxu0 0.0
        %2335 = vmatprep.subr.mxu0 0.0
        %2336 = vmatpush1.msra.mxu0 0.0
        %2337 = vmatprep.subr.mxu0 0.0
        %2338 = vmatpush1.msra.mxu0 0.0
        %2339 = vmatprep.subr.mxu0 0.0
        %2340 = vmatpush1.msra.mxu0 0.0
        %2341 = vmatprep.subr.mxu0 0.0
        %2342 = vmatpush1.msra.mxu0 0.0
        %2343 = vmatprep.subr.mxu0 0.0
        %2344 = vmatpush1.msra.mxu0 0.0
        %2345 = vmatprep.subr.mxu0 0.0
        %2346 = vmatpush1.msra.mxu0 0.0
        %2347 = vmatprep.mubr.f32.mxu0 %v2275
        %2348 = vmatmul.mubr.f32.gmra.mrb[0].mxu0 %v2214
        %v2349 = vpop.f32.mrb[0].mxu0
        %v2350 = vadd.f32 %v2262, %v2349
        %v2351 = vpop.f32.mrb[0].mxu0
        %v2352 = vadd.f32 %v2262, %v2351
        %2353 = vmatprep.mubr.f32.mxu0 %v2278
        %2354 = vmatmul.mubr.f32.gmra.mrb[0].mxu0 %v2216
        %v2355 = vpop.f32.mrb[0].mxu0
        %v2356 = vadd.f32 %v2267, %v2355
        %v2357 = vpop.f32.mrb[0].mxu0
        %v2358 = vadd.f32 %v2267, %v2357
        %2359 = vmatprep.mubr.f32.mxu0 %v2281
        %2360 = vmatmul.mubr.f32.gmra.mrb[0].mxu0 %v2218
        %v2361 = vpop.f32.mrb[0].mxu0
        %v2362 = vadd.f32 %v2272, %v2361
        %v2363 = vpop.f32.mrb[0].mxu0
        %v2364 = vadd.f32 %v2272, %v2363
        %2365 = vdwg.mxu0
        %v2366 = vld [vmem:[%s7] sm:$0xff]
        %v2367 = vld [vmem:[%s7 + $0x8] sm:$0xff]
        %v2368 = vld [vmem:[%s7 + $0x10] sm:$0xff]
        %v2369 = vadd.f32 %v2350, %v2352
        %2370 = vadd.xlane.f32.xlu0 %v2369
        %v2371 = vpop.xlane.xlu0 %2370
        %v2372 = vadd.f32 %v2356, %v2358
        %2373 = vadd.xlane.f32.xlu0 %v2372
        %v2374 = vpop.xlane.xlu0 %2373
        %v2375 = vadd.f32 %v2362, %v2364
        %2376 = vadd.xlane.f32.xlu0 %v2375
        %v2377 = vpop.xlane.xlu0 %2376
        %v2378 = vmul.f32 %v2350, %v2350
        %v2379 = vmul.f32 %v2352, %v2352
        %v2380 = vmul.f32 %v2356, %v2356
        %v2381 = vmul.f32 %v2358, %v2358
        %v2382 = vmul.f32 %v2362, %v2362
        %v2383 = vmul.f32 %v2364, %v2364
        %v2384 = vadd.f32 %v2378, %v2379
        %2385 = vadd.xlane.f32.xlu0 %v2384
        %v2386 = vpop.xlane.xlu0 %2385
        %v2387 = vadd.f32 %v2380, %v2381
        %2388 = vadd.xlane.f32.xlu0 %v2387
        %v2389 = vpop.xlane.xlu0 %2388
        %v2390 = vadd.f32 %v2382, %v2383
        %2391 = vadd.xlane.f32.xlu0 %v2390
        %v2392 = vpop.xlane.xlu0 %2391
        %v2393 = vsel %vm1790, %v2371, %v2386
        %v2394 = vsel %vm1790, %v2374, %v2389
        %v2395 = vsel %vm1790, %v2377, %v2392
        %vm2396 = vcmask 195584
        %v2398 = vsel %vm2396, %v2366, 0
        %v2401 = vsel %vm2396, %v2367, 0
        %v2404 = vsel %vm2396, %v2368, 0
        %2406 = vmatprep.subr.mxu0 0.0
        %2407 = vmatpush1.msra.mxu0 %v2393
        %2408 = vmatprep.subr.mxu0 0.0
        %2409 = vmatpush1.msra.mxu0 %v2394
        %2410 = vmatprep.subr.mxu0 0.0
        %2411 = vmatpush1.msra.mxu0 %v2395
        %2412 = vmatprep.subr.mxu0 0.0
        %2413 = vmatpush1.msra.mxu0 0.0
        %2414 = vmatprep.subr.mxu0 0.0
        %2415 = vmatpush1.msra.mxu0 0.0
        %2416 = vmatprep.subr.mxu0 0.0
        %2417 = vmatpush1.msra.mxu0 0.0
        %2418 = vmatprep.subr.mxu0 0.0
        %2419 = vmatpush1.msra.mxu0 0.0
        %2420 = vmatprep.subr.mxu0 0.0
        %2421 = vmatpush1.msra.mxu0 0.0
        %2422 = vmatprep.subr.mxu0 0.0
        %2423 = vmatpush1.msra.mxu0 0.0
        %2424 = vmatprep.subr.mxu0 0.0
        %2425 = vmatpush1.msra.mxu0 0.0
        %2426 = vmatprep.subr.mxu0 0.0
        %2427 = vmatpush1.msra.mxu0 0.0
        %2428 = vmatprep.subr.mxu0 0.0
        %2429 = vmatpush1.msra.mxu0 0.0
        %2430 = vmatprep.subr.mxu0 0.0
        %2431 = vmatpush1.msra.mxu0 0.0
        %2432 = vmatprep.subr.mxu0 0.0
        %2433 = vmatpush1.msra.mxu0 0.0
        %2434 = vmatprep.subr.mxu0 0.0
        %2435 = vmatpush1.msra.mxu0 0.0
        %2436 = vmatprep.subr.mxu0 0.0
        %2437 = vmatpush1.msra.mxu0 0.0
        %2438 = vmatprep.subr.mxu0 0.0
        %2439 = vmatpush1.msra.mxu0 0.0
        %2440 = vmatprep.subr.mxu0 0.0
        %2441 = vmatpush1.msra.mxu0 0.0
        %2442 = vmatprep.subr.mxu0 0.0
        %2443 = vmatpush1.msra.mxu0 0.0
        %2444 = vmatprep.subr.mxu0 0.0
        %2445 = vmatpush1.msra.mxu0 0.0
        %2446 = vmatprep.subr.mxu0 0.0
        %2447 = vmatpush1.msra.mxu0 0.0
        %2448 = vmatprep.subr.mxu0 0.0
        %2449 = vmatpush1.msra.mxu0 0.0
        %2450 = vmatprep.subr.mxu0 0.0
        %2451 = vmatpush1.msra.mxu0 0.0
        %2452 = vmatprep.subr.mxu0 0.0
        %2453 = vmatpush1.msra.mxu0 0.0
        %2454 = vmatprep.subr.mxu0 0.0
        %2455 = vmatpush1.msra.mxu0 0.0
        %2456 = vmatprep.subr.mxu0 0.0
        %2457 = vmatpush1.msra.mxu0 0.0
        %2458 = vmatprep.subr.mxu0 0.0
        %2459 = vmatpush1.msra.mxu0 0.0
        %2460 = vmatprep.subr.mxu0 0.0
        %2461 = vmatpush1.msra.mxu0 0.0
        %2462 = vmatprep.subr.mxu0 0.0
        %2463 = vmatpush1.msra.mxu0 0.0
        %2464 = vmatprep.subr.mxu0 0.0
        %2465 = vmatpush1.msra.mxu0 0.0
        %2466 = vmatprep.subr.mxu0 0.0
        %2467 = vmatpush1.msra.mxu0 0.0
        %2468 = vmatprep.subr.mxu0 0.0
        %2469 = vmatpush1.msra.mxu0 0.0
        %2470 = vmatprep.mubr.f32.mxu0 0.0
        %2471 = vmatmul.mubr.f32.gmra.mrb[0].mxu0 %v2398
        %v2472 = vpop.f32.mrb[0].mxu0
        %v2473 = vadd.f32 0.0, %v2472
        %v2474 = vpop.f32.mrb[0].mxu0
        %2475 = vmatprep.mubr.f32.mxu0 0.0
        %2476 = vmatmul.mubr.f32.gmra.mrb[0].mxu0 %v2401
        %v2477 = vpop.f32.mrb[0].mxu0
        %v2478 = vadd.f32 0.0, %v2477
        %v2479 = vpop.f32.mrb[0].mxu0
        %2480 = vmatprep.mubr.f32.mxu0 0.0
        %2481 = vmatmul.mubr.f32.gmra.mrb[0].mxu0 %v2404
        %v2482 = vpop.f32.mrb[0].mxu0
        %v2483 = vadd.f32 0.0, %v2482
        %v2484 = vpop.f32.mrb[0].mxu0
        %2485 = vdwg.mxu0
        %v2486 = vmul.f32 %v2473, %v2473
        %v2487 = vmul.f32 %v2478, %v2478
        %v2488 = vmul.f32 %v2483, %v2483
        %2492 = vrot.lane.b32.xlu0 %v2486, 1
        %v2493 = vpop.permute.xlu0 %2492
        %2494 = vrot.lane.b32.xlu0 %v2487, 1
        %v2495 = vpop.permute.xlu0 %2494
        %2496 = vrot.lane.b32.xlu0 %v2488, 1
        %v2497 = vpop.permute.xlu0 %2496
        %v2501 = vsub.f32 %v2473, %v2493
        %v2502 = vsub.f32 %v2478, %v2495
        %v2503 = vsub.f32 %v2483, %v2497
        %2505 = vset.pattern.permute.xlu0 0
        %2506 = vperm.xlu0 %2505, %v2473
        %v2507 = vpop.permute.xlu0 %2506
        %2510 = vset.pattern.permute.xlu0 0
        %2511 = vperm.xlu0 %2510, %v2478
        %v2512 = vpop.permute.xlu0 %2511
        %2515 = vset.pattern.permute.xlu0 0
        %2516 = vperm.xlu0 %2515, %v2483
        %v2517 = vpop.permute.xlu0 %2516
        %v2519 = vsub.f32 %v2350, %v2507
        %v2520 = vsub.f32 %v2352, %v2507
        %v2521 = vsub.f32 %v2356, %v2512
        %v2522 = vsub.f32 %v2358, %v2512
        %v2523 = vsub.f32 %v2362, %v2517
        %v2524 = vsub.f32 %v2364, %v2517
        %v2525 = vadd.f32 %v2501, 1e-05
        %v2526 = vadd.f32 %v2502, 1e-05
        %v2527 = vadd.f32 %v2503, 1e-05
        %v2528 = vrsqrt.pop %v2525
        %v2529 = vrsqrt.pop %v2526
        %v2530 = vrsqrt.pop %v2527
        %2532 = vset.pattern.permute.xlu0 1
        %2533 = vperm.xlu0 %2532, %v2528
        %v2534 = vpop.permute.xlu0 %2533
        %2537 = vset.pattern.permute.xlu0 1
        %2538 = vperm.xlu0 %2537, %v2529
        %v2539 = vpop.permute.xlu0 %2538
        %2542 = vset.pattern.permute.xlu0 1
        %2543 = vperm.xlu0 %2542, %v2530
        %v2544 = vpop.permute.xlu0 %2543
        %v2546 = vmul.f32 %v2519, %v2534
        %v2547 = vmul.f32 %v2520, %v2534
        %v2548 = vmul.f32 %v2521, %v2539
        %v2549 = vmul.f32 %v2522, %v2539
        %v2550 = vmul.f32 %v2523, %v2544
        %v2551 = vmul.f32 %v2524, %v2544
        %2552 = vset.pattern.permute.xlu0 1
        %2553 = vperm.xlu0 %2552, %v2256
        %v2554 = vpop.permute.xlu0 %2553
        %2556 = vset.pattern.permute.xlu0 1
        %2557 = vperm.xlu0 %2556, %v2257
        %v2558 = vpop.permute.xlu0 %2557
        %2560 = vset.pattern.permute.xlu0 1
        %2561 = vperm.xlu0 %2560, %v2258
        %v2562 = vpop.permute.xlu0 %2561
        %v2564 = vmul.f32 %v2546, %v2554
        %v2565 = vmul.f32 %v2547, %v2554
        %v2566 = vmul.f32 %v2548, %v2558
        %v2567 = vmul.f32 %v2549, %v2558
        %v2568 = vmul.f32 %v2550, %v2562
        %v2569 = vmul.f32 %v2551, %v2562
        %2570 = vset.pattern.permute.xlu0 2
        %2571 = vperm.xlu0 %2570, %v2256
        %v2572 = vpop.permute.xlu0 %2571
        %2574 = vset.pattern.permute.xlu0 2
        %2575 = vperm.xlu0 %2574, %v2257
        %v2576 = vpop.permute.xlu0 %2575
        %2578 = vset.pattern.permute.xlu0 2
        %2579 = vperm.xlu0 %2578, %v2258
        %v2580 = vpop.permute.xlu0 %2579
        %v2582 = vadd.f32 %v2564, %v2572
        %v2583 = vadd.f32 %v2565, %v2572
        %v2584 = vadd.f32 %v2566, %v2576
        %v2585 = vadd.f32 %v2567, %v2576
        %v2586 = vadd.f32 %v2568, %v2580
        %v2587 = vadd.f32 %v2569, %v2580
        %v2588 = vmax.f32 %v2582, 0.0
        %v2589 = vmax.f32 %v2583, 0.0
        %v2590 = vmax.f32 %v2584, 0.0
        %v2591 = vmax.f32 %v2585, 0.0
        %v2592 = vmax.f32 %v2586, 0.0
        %v2593 = vmax.f32 %v2587, 0.0
        %2594 = vrot.lane.b32.xlu0 %v2588, 17
        %v2595 = vpop.permute.xlu0 %2594
        %2596 = vrot.lane.b32.xlu0 %v2590, 17
        %v2597 = vpop.permute.xlu0 %2596
        %2598 = vrot.lane.b32.xlu0 %v2592, 17
        %v2599 = vpop.permute.xlu0 %2598
        %2600 = vrot.lane.b32.xlu0 %v2589, 17
        %v2601 = vpop.permute.xlu0 %2600
        %2602 = vrot.lane.b32.xlu0 %v2591, 17
        %v2603 = vpop.permute.xlu0 %2602
        %2604 = vrot.lane.b32.xlu0 %v2593, 17
        %v2605 = vpop.permute.xlu0 %2604
        %v2606 = vsel %vm886, %v2595, %v2601
        %v2607 = vsel %vm886, %v2597, %v2603
        %v2608 = vsel %vm886, %v2599, %v2605
        %v2609 = vsel %vm886, %v2601, %v2595
        %v2610 = vsel %vm886, %v2603, %v2597
        %v2611 = vsel %vm886, %v2605, %v2599
        %v2612 = vld [vmem:[%s8] sm:$0x3]
        %v2614 = vlaneseq
        %v2615 = vshrl.u32 %v2614, 7
        %v2616 = vsub.s32 0, %v2615
        %v2617 = vrot.slane %v2612, %v2616
        %v2618 = vlaneseq
        %v2619 = vshrl.u32 %v2618, 7
        %v2620 = vsub.s32 1, %v2619
        %v2621 = vrot.slane %v2612, %v2620
        %v2624 = vmul.f32 %v2609, %v2617
        %v2625 = vmul.f32 %v2606, %v2621
        %v2626 = vmul.f32 %v2610, %v2617
        %v2627 = vmul.f32 %v2607, %v2621
        %v2628 = vmul.f32 %v2611, %v2617
        %v2629 = vmul.f32 %v2608, %v2621
        %2630 = vst [vmem:[#allocation4] sm:$0xff] %v2624
        %2631 = vst [vmem:[#allocation4 + $0x8] sm:$0xff] %v2625
        %2632 = vst [vmem:[#allocation4 + $0x10] sm:$0xff] %v2626
        %2633 = vst [vmem:[#allocation4 + $0x18] sm:$0xff] %v2627
        %2634 = vst [vmem:[#allocation4 + $0x20] sm:$0xff] %v2628
        %2635 = vst [vmem:[#allocation4 + $0x28] sm:$0xff] %v2629
        %2636 = vrot.lane.b32.xlu0 %v2588, 16
        %v2637 = vpop.permute.xlu0 %2636
        %2638 = vrot.lane.b32.xlu0 %v2590, 16
        %v2639 = vpop.permute.xlu0 %2638
        %2640 = vrot.lane.b32.xlu0 %v2592, 16
        %v2641 = vpop.permute.xlu0 %2640
        %2642 = vrot.lane.b32.xlu0 %v2589, 16
        %v2643 = vpop.permute.xlu0 %2642
        %2644 = vrot.lane.b32.xlu0 %v2591, 16
        %v2645 = vpop.permute.xlu0 %2644
        %2646 = vrot.lane.b32.xlu0 %v2593, 16
        %v2647 = vpop.permute.xlu0 %2646
        %v2648 = vsel %vm929, %v2637, %v2643
        %v2649 = vsel %vm929, %v2639, %v2645
        %v2650 = vsel %vm929, %v2641, %v2647
        %v2651 = vsel %vm929, %v2643, %v2637
        %v2652 = vsel %vm929, %v2645, %v2639
        %v2653 = vsel %vm929, %v2647, %v2641
        %v2654 = vld [vmem:[%s1991] sm:$0x3]
        %v2656 = vlaneseq
        %v2657 = vshrl.u32 %v2656, 7
        %v2658 = vsub.s32 0, %v2657
        %v2659 = vrot.slane %v2654, %v2658
        %v2660 = vlaneseq
        %v2661 = vshrl.u32 %v2660, 7
        %v2662 = vsub.s32 1, %v2661
        %v2663 = vrot.slane %v2654, %v2662
        %v2666 = vmul.f32 %v2651, %v2659
        %v2667 = vmul.f32 %v2648, %v2663
        %v2668 = vmul.f32 %v2652, %v2659
        %v2669 = vmul.f32 %v2649, %v2663
        %v2670 = vmul.f32 %v2653, %v2659
        %v2671 = vmul.f32 %v2650, %v2663
        %2672 = vst [vmem:[#allocation4 + $0x30] sm:$0xff] %v2666
        %2673 = vst [vmem:[#allocation4 + $0x38] sm:$0xff] %v2667
        %2674 = vst [vmem:[#allocation4 + $0x40] sm:$0xff] %v2668
        %2675 = vst [vmem:[#allocation4 + $0x48] sm:$0xff] %v2669
        %2676 = vst [vmem:[#allocation4 + $0x50] sm:$0xff] %v2670
        %2677 = vst [vmem:[#allocation4 + $0x58] sm:$0xff] %v2671
        %2678 = vrot.lane.b32.xlu0 %v2588, 15
        %v2679 = vpop.permute.xlu0 %2678
        %2680 = vrot.lane.b32.xlu0 %v2590, 15
        %v2681 = vpop.permute.xlu0 %2680
        %2682 = vrot.lane.b32.xlu0 %v2592, 15
        %v2683 = vpop.permute.xlu0 %2682
        %2684 = vrot.lane.b32.xlu0 %v2589, 15
        %v2685 = vpop.permute.xlu0 %2684
        %2686 = vrot.lane.b32.xlu0 %v2591, 15
        %v2687 = vpop.permute.xlu0 %2686
        %2688 = vrot.lane.b32.xlu0 %v2593, 15
        %v2689 = vpop.permute.xlu0 %2688
        %v2690 = vsel %vm972, %v2679, %v2685
        %v2691 = vsel %vm972, %v2681, %v2687
        %v2692 = vsel %vm972, %v2683, %v2689
        %v2693 = vsel %vm972, %v2685, %v2679
        %v2694 = vsel %vm972, %v2687, %v2681
        %v2695 = vsel %vm972, %v2689, %v2683
        %v2696 = vld [vmem:[%s2024] sm:$0x3]
        %v2698 = vlaneseq
        %v2699 = vshrl.u32 %v2698, 7
        %v2700 = vsub.s32 0, %v2699
        %v2701 = vrot.slane %v2696, %v2700
        %v2702 = vlaneseq
        %v2703 = vshrl.u32 %v2702, 7
        %v2704 = vsub.s32 1, %v2703
        %v2705 = vrot.slane %v2696, %v2704
        %v2708 = vmul.f32 %v2693, %v2701
        %v2709 = vmul.f32 %v2690, %v2705
        %v2710 = vmul.f32 %v2694, %v2701
        %v2711 = vmul.f32 %v2691, %v2705
        %v2712 = vmul.f32 %v2695, %v2701
        %v2713 = vmul.f32 %v2692, %v2705
        %2714 = vst [vmem:[#allocation4 + $0x60] sm:$0xff] %v2708
        %2715 = vst [vmem:[#allocation4 + $0x68] sm:$0xff] %v2709
        %2716 = vst [vmem:[#allocation4 + $0x70] sm:$0xff] %v2710
        %2717 = vst [vmem:[#allocation4 + $0x78] sm:$0xff] %v2711
        %2718 = vst [vmem:[#allocation4 + $0x80] sm:$0xff] %v2712
        %2719 = vst [vmem:[#allocation4 + $0x88] sm:$0xff] %v2713
        %2720 = vrot.lane.b32.xlu0 %v2588, 1
        %v2721 = vpop.permute.xlu0 %2720
        %2722 = vrot.lane.b32.xlu0 %v2590, 1
        %v2723 = vpop.permute.xlu0 %2722
        %2724 = vrot.lane.b32.xlu0 %v2592, 1
        %v2725 = vpop.permute.xlu0 %2724
        %2726 = vrot.lane.b32.xlu0 %v2589, 1
        %v2727 = vpop.permute.xlu0 %2726
        %2728 = vrot.lane.b32.xlu0 %v2591, 1
        %v2729 = vpop.permute.xlu0 %2728
        %2730 = vrot.lane.b32.xlu0 %v2593, 1
        %v2731 = vpop.permute.xlu0 %2730
        %v2732 = vsel %vm1101, %v2721, %v2727
        %v2733 = vsel %vm1101, %v2723, %v2729
        %v2734 = vsel %vm1101, %v2725, %v2731
        %v2735 = vsel %vm1101, %v2727, %v2721
        %v2736 = vsel %vm1101, %v2729, %v2723
        %v2737 = vsel %vm1101, %v2731, %v2725
        %v2738 = vld [vmem:[%s2057] sm:$0x3]
        %v2740 = vlaneseq
        %v2741 = vshrl.u32 %v2740, 7
        %v2742 = vsub.s32 0, %v2741
        %v2743 = vrot.slane %v2738, %v2742
        %v2744 = vlaneseq
        %v2745 = vshrl.u32 %v2744, 7
        %v2746 = vsub.s32 1, %v2745
        %v2747 = vrot.slane %v2738, %v2746
        %v2750 = vmul.f32 %v2735, %v2743
        %v2751 = vmul.f32 %v2732, %v2747
        %v2752 = vmul.f32 %v2736, %v2743
        %v2753 = vmul.f32 %v2733, %v2747
        %v2754 = vmul.f32 %v2737, %v2743
        %v2755 = vmul.f32 %v2734, %v2747
        %2756 = vst [vmem:[#allocation4 + $0x90] sm:$0xff] %v2750
        %2757 = vst [vmem:[#allocation4 + $0x98] sm:$0xff] %v2751
        %2758 = vst [vmem:[#allocation4 + $0xa0] sm:$0xff] %v2752
        %2759 = vst [vmem:[#allocation4 + $0xa8] sm:$0xff] %v2753
        %2760 = vst [vmem:[#allocation4 + $0xb0] sm:$0xff] %v2754
        %2761 = vst [vmem:[#allocation4 + $0xb8] sm:$0xff] %v2755
        %2762 = vst [vmem:[#allocation4 + $0xc0] sm:$0xff] %v2588
        %2763 = vst [vmem:[#allocation4 + $0xc8] sm:$0xff] %v2589
        %2764 = vst [vmem:[#allocation4 + $0xd0] sm:$0xff] %v2590
        %2765 = vst [vmem:[#allocation4 + $0xd8] sm:$0xff] %v2591
        %2766 = vst [vmem:[#allocation4 + $0xe0] sm:$0xff] %v2592
        %2767 = vst [vmem:[#allocation4 + $0xe8] sm:$0xff] %v2593
        %2768 = vrot.lane.b32.xlu0 %v2588, 127
        %v2769 = vpop.permute.xlu0 %2768
        %2770 = vrot.lane.b32.xlu0 %v2590, 127
        %v2771 = vpop.permute.xlu0 %2770
        %2772 = vrot.lane.b32.xlu0 %v2592, 127
        %v2773 = vpop.permute.xlu0 %2772
        %2774 = vrot.lane.b32.xlu0 %v2589, 127
        %v2775 = vpop.permute.xlu0 %2774
        %2776 = vrot.lane.b32.xlu0 %v2591, 127
        %v2777 = vpop.permute.xlu0 %2776
        %2778 = vrot.lane.b32.xlu0 %v2593, 127
        %v2779 = vpop.permute.xlu0 %2778
        %v2780 = vsel %vm1147, %v2769, %v2775
        %v2781 = vsel %vm1147, %v2771, %v2777
        %v2782 = vsel %vm1147, %v2773, %v2779
        %v2783 = vsel %vm1147, %v2775, %v2769
        %v2784 = vsel %vm1147, %v2777, %v2771
        %v2785 = vsel %vm1147, %v2779, %v2773
        %v2786 = vld [vmem:[%s2094] sm:$0x3]
        %v2788 = vlaneseq
        %v2789 = vshrl.u32 %v2788, 7
        %v2790 = vsub.s32 0, %v2789
        %v2791 = vrot.slane %v2786, %v2790
        %v2792 = vlaneseq
        %v2793 = vshrl.u32 %v2792, 7
        %v2794 = vsub.s32 1, %v2793
        %v2795 = vrot.slane %v2786, %v2794
        %v2798 = vmul.f32 %v2780, %v2791
        %v2799 = vmul.f32 %v2783, %v2795
        %v2800 = vmul.f32 %v2781, %v2791
        %v2801 = vmul.f32 %v2784, %v2795
        %v2802 = vmul.f32 %v2782, %v2791
        %v2803 = vmul.f32 %v2785, %v2795
        %2804 = vst [vmem:[#allocation4 + $0xf0] sm:$0xff] %v2798
        %2805 = vst [vmem:[#allocation4 + $0xf8] sm:$0xff] %v2799
        %2806 = vst [vmem:[#allocation4 + $0x100] sm:$0xff] %v2800
        %2807 = vst [vmem:[#allocation4 + $0x108] sm:$0xff] %v2801
        %2808 = vst [vmem:[#allocation4 + $0x110] sm:$0xff] %v2802
        %2809 = vst [vmem:[#allocation4 + $0x118] sm:$0xff] %v2803
        %2810 = vrot.lane.b32.xlu0 %v2588, 113
        %v2811 = vpop.permute.xlu0 %2810
        %2812 = vrot.lane.b32.xlu0 %v2590, 113
        %v2813 = vpop.permute.xlu0 %2812
        %2814 = vrot.lane.b32.xlu0 %v2592, 113
        %v2815 = vpop.permute.xlu0 %2814
        %2816 = vrot.lane.b32.xlu0 %v2589, 113
        %v2817 = vpop.permute.xlu0 %2816
        %2818 = vrot.lane.b32.xlu0 %v2591, 113
        %v2819 = vpop.permute.xlu0 %2818
        %2820 = vrot.lane.b32.xlu0 %v2593, 113
        %v2821 = vpop.permute.xlu0 %2820
        %v2822 = vsel %vm1276, %v2811, %v2817
        %v2823 = vsel %vm1276, %v2813, %v2819
        %v2824 = vsel %vm1276, %v2815, %v2821
        %v2825 = vsel %vm1276, %v2817, %v2811
        %v2826 = vsel %vm1276, %v2819, %v2813
        %v2827 = vsel %vm1276, %v2821, %v2815
        %v2828 = vld [vmem:[%s2127] sm:$0x3]
        %v2830 = vlaneseq
        %v2831 = vshrl.u32 %v2830, 7
        %v2832 = vsub.s32 0, %v2831
        %v2833 = vrot.slane %v2828, %v2832
        %v2834 = vlaneseq
        %v2835 = vshrl.u32 %v2834, 7
        %v2836 = vsub.s32 1, %v2835
        %v2837 = vrot.slane %v2828, %v2836
        %v2840 = vmul.f32 %v2822, %v2833
        %v2841 = vmul.f32 %v2825, %v2837
        %v2842 = vmul.f32 %v2823, %v2833
        %v2843 = vmul.f32 %v2826, %v2837
        %v2844 = vmul.f32 %v2824, %v2833
        %v2845 = vmul.f32 %v2827, %v2837
        %2846 = vst [vmem:[#allocation4 + $0x120] sm:$0xff] %v2840
        %2847 = vst [vmem:[#allocation4 + $0x128] sm:$0xff] %v2841
        %2848 = vst [vmem:[#allocation4 + $0x130] sm:$0xff] %v2842
        %2849 = vst [vmem:[#allocation4 + $0x138] sm:$0xff] %v2843
        %2850 = vst [vmem:[#allocation4 + $0x140] sm:$0xff] %v2844
        %2851 = vst [vmem:[#allocation4 + $0x148] sm:$0xff] %v2845
        %2852 = vrot.lane.b32.xlu0 %v2588, 112
        %v2853 = vpop.permute.xlu0 %2852
        %2854 = vrot.lane.b32.xlu0 %v2590, 112
        %v2855 = vpop.permute.xlu0 %2854
        %2856 = vrot.lane.b32.xlu0 %v2592, 112
        %v2857 = vpop.permute.xlu0 %2856
        %2858 = vrot.lane.b32.xlu0 %v2589, 112
        %v2859 = vpop.permute.xlu0 %2858
        %2860 = vrot.lane.b32.xlu0 %v2591, 112
        %v2861 = vpop.permute.xlu0 %2860
        %2862 = vrot.lane.b32.xlu0 %v2593, 112
        %v2863 = vpop.permute.xlu0 %2862
        %v2864 = vsel %vm1319, %v2853, %v2859
        %v2865 = vsel %vm1319, %v2855, %v2861
        %v2866 = vsel %vm1319, %v2857, %v2863
        %v2867 = vsel %vm1319, %v2859, %v2853
        %v2868 = vsel %vm1319, %v2861, %v2855
        %v2869 = vsel %vm1319, %v2863, %v2857
        %v2870 = vld [vmem:[%s2160] sm:$0x3]
        %v2872 = vlaneseq
        %v2873 = vshrl.u32 %v2872, 7
        %v2874 = vsub.s32 0, %v2873
        %v2875 = vrot.slane %v2870, %v2874
        %v2876 = vlaneseq
        %v2877 = vshrl.u32 %v2876, 7
        %v2878 = vsub.s32 1, %v2877
        %v2879 = vrot.slane %v2870, %v2878
        %v2882 = vmul.f32 %v2864, %v2875
        %v2883 = vmul.f32 %v2867, %v2879
        %v2884 = vmul.f32 %v2865, %v2875
        %v2885 = vmul.f32 %v2868, %v2879
        %v2886 = vmul.f32 %v2866, %v2875
        %v2887 = vmul.f32 %v2869, %v2879
        %2888 = vst [vmem:[#allocation4 + $0x150] sm:$0xff] %v2882
        %2889 = vst [vmem:[#allocation4 + $0x158] sm:$0xff] %v2883
        %2890 = vst [vmem:[#allocation4 + $0x160] sm:$0xff] %v2884
        %2891 = vst [vmem:[#allocation4 + $0x168] sm:$0xff] %v2885
        %2892 = vst [vmem:[#allocation4 + $0x170] sm:$0xff] %v2886
        %2893 = vst [vmem:[#allocation4 + $0x178] sm:$0xff] %v2887
        %2894 = vrot.lane.b32.xlu0 %v2588, 111
        %v2895 = vpop.permute.xlu0 %2894
        %2896 = vrot.lane.b32.xlu0 %v2590, 111
        %v2897 = vpop.permute.xlu0 %2896
        %2898 = vrot.lane.b32.xlu0 %v2592, 111
        %v2899 = vpop.permute.xlu0 %2898
        %2900 = vrot.lane.b32.xlu0 %v2589, 111
        %v2901 = vpop.permute.xlu0 %2900
        %2902 = vrot.lane.b32.xlu0 %v2591, 111
        %v2903 = vpop.permute.xlu0 %2902
        %2904 = vrot.lane.b32.xlu0 %v2593, 111
        %v2905 = vpop.permute.xlu0 %2904
        %v2906 = vsel %vm1362, %v2895, %v2901
        %v2907 = vsel %vm1362, %v2897, %v2903
        %v2908 = vsel %vm1362, %v2899, %v2905
        %v2909 = vsel %vm1362, %v2901, %v2895
        %v2910 = vsel %vm1362, %v2903, %v2897
        %v2911 = vsel %vm1362, %v2905, %v2899
        %v2912 = vld [vmem:[%s2193] sm:$0x3]
        %v2914 = vlaneseq
        %v2915 = vshrl.u32 %v2914, 7
        %v2916 = vsub.s32 0, %v2915
        %v2917 = vrot.slane %v2912, %v2916
        %v2918 = vlaneseq
        %v2919 = vshrl.u32 %v2918, 7
        %v2920 = vsub.s32 1, %v2919
        %v2921 = vrot.slane %v2912, %v2920
        %v2924 = vmul.f32 %v2906, %v2917
        %v2925 = vmul.f32 %v2909, %v2921
        %v2926 = vmul.f32 %v2907, %v2917
        %v2927 = vmul.f32 %v2910, %v2921
        %v2928 = vmul.f32 %v2908, %v2917
        %v2929 = vmul.f32 %v2911, %v2921
        %2930 = vst [vmem:[#allocation4 + $0x180] sm:$0xff] %v2924
        %2931 = vst [vmem:[#allocation4 + $0x188] sm:$0xff] %v2925
        %2932 = vst [vmem:[#allocation4 + $0x190] sm:$0xff] %v2926
        %2933 = vst [vmem:[#allocation4 + $0x198] sm:$0xff] %v2927
        %2934 = vst [vmem:[#allocation4 + $0x1a0] sm:$0xff] %v2928
        %2935 = vst [vmem:[#allocation4 + $0x1a8] sm:$0xff] %v2929
        %v2936 = vld [vmem:[#allocation4] sm:$0xff]
        %v2937 = vld [vmem:[#allocation4 + $0x8] sm:$0xff]
        %v2938 = vld [vmem:[#allocation4 + $0x10] sm:$0xff]
        %v2939 = vld [vmem:[#allocation4 + $0x18] sm:$0xff]
        %v2940 = vld [vmem:[#allocation4 + $0x20] sm:$0xff]
        %v2941 = vld [vmem:[#allocation4 + $0x28] sm:$0xff]
        %v2942 = vld [vmem:[#allocation4 + $0x30] sm:$0xff]
        %v2943 = vld [vmem:[#allocation4 + $0x38] sm:$0xff]
        %v2944 = vld [vmem:[#allocation4 + $0x40] sm:$0xff]
        %v2945 = vld [vmem:[#allocation4 + $0x48] sm:$0xff]
        %v2946 = vld [vmem:[#allocation4 + $0x50] sm:$0xff]
        %v2947 = vld [vmem:[#allocation4 + $0x58] sm:$0xff]
        %v2948 = vld [vmem:[#allocation4 + $0x60] sm:$0xff]
        %v2949 = vld [vmem:[#allocation4 + $0x68] sm:$0xff]
        %v2950 = vld [vmem:[#allocation4 + $0x70] sm:$0xff]
        %v2951 = vld [vmem:[#allocation4 + $0x78] sm:$0xff]
        %v2952 = vld [vmem:[#allocation4 + $0x80] sm:$0xff]
        %v2953 = vld [vmem:[#allocation4 + $0x88] sm:$0xff]
        %v2954 = vld [vmem:[#allocation4 + $0x90] sm:$0xff]
        %v2955 = vld [vmem:[#allocation4 + $0x98] sm:$0xff]
        %v2956 = vld [vmem:[#allocation4 + $0xa0] sm:$0xff]
        %v2957 = vld [vmem:[#allocation4 + $0xa8] sm:$0xff]
        %v2958 = vld [vmem:[#allocation4 + $0xb0] sm:$0xff]
        %v2959 = vld [vmem:[#allocation4 + $0xb8] sm:$0xff]
        %v2960 = vld [vmem:[#allocation4 + $0xc0] sm:$0xff]
        %v2961 = vld [vmem:[#allocation4 + $0xc8] sm:$0xff]
        %v2962 = vld [vmem:[#allocation4 + $0xd0] sm:$0xff]
        %v2963 = vld [vmem:[#allocation4 + $0xd8] sm:$0xff]
        %v2964 = vld [vmem:[#allocation4 + $0xe0] sm:$0xff]
        %v2965 = vld [vmem:[#allocation4 + $0xe8] sm:$0xff]
        %v2966 = vld [vmem:[#allocation4 + $0xf0] sm:$0xff]
        %v2967 = vld [vmem:[#allocation4 + $0xf8] sm:$0xff]
        %v2968 = vld [vmem:[#allocation4 + $0x100] sm:$0xff]
        %v2969 = vld [vmem:[#allocation4 + $0x108] sm:$0xff]
        %v2970 = vld [vmem:[#allocation4 + $0x110] sm:$0xff]
        %v2971 = vld [vmem:[#allocation4 + $0x118] sm:$0xff]
        %v2972 = vld [vmem:[#allocation4 + $0x120] sm:$0xff]
        %v2973 = vld [vmem:[#allocation4 + $0x128] sm:$0xff]
        %v2974 = vld [vmem:[#allocation4 + $0x130] sm:$0xff]
        %v2975 = vld [vmem:[#allocation4 + $0x138] sm:$0xff]
        %v2976 = vld [vmem:[#allocation4 + $0x140] sm:$0xff]
        %v2977 = vld [vmem:[#allocation4 + $0x148] sm:$0xff]
        %v2978 = vld [vmem:[#allocation4 + $0x150] sm:$0xff]
        %v2979 = vld [vmem:[#allocation4 + $0x158] sm:$0xff]
        %v2980 = vld [vmem:[#allocation4 + $0x160] sm:$0xff]
        %v2981 = vld [vmem:[#allocation4 + $0x168] sm:$0xff]
        %v2982 = vld [vmem:[#allocation4 + $0x170] sm:$0xff]
        %v2983 = vld [vmem:[#allocation4 + $0x178] sm:$0xff]
        %v2984 = vld [vmem:[#allocation4 + $0x180] sm:$0xff]
        %v2985 = vld [vmem:[#allocation4 + $0x188] sm:$0xff]
        %v2986 = vld [vmem:[#allocation4 + $0x190] sm:$0xff]
        %v2987 = vld [vmem:[#allocation4 + $0x198] sm:$0xff]
        %v2988 = vld [vmem:[#allocation4 + $0x1a0] sm:$0xff]
        %v2989 = vld [vmem:[#allocation4 + $0x1a8] sm:$0xff]
        %v2990 = vld [vmem:[%s12] sm:$0xff]
        %v2991 = vld [vmem:[%s12 + $0x8] sm:$0xff]
        %v2992 = vld [vmem:[%s12 + $0x10] sm:$0xff]
        %v2993 = vld [vmem:[%s12 + $0x18] sm:$0xff]
        %v2994 = vld [vmem:[%s12 + $0x20] sm:$0xff]
        %v2995 = vld [vmem:[%s12 + $0x28] sm:$0xff]
        %v2996 = vld [vmem:[%s12 + $0x30] sm:$0xff]
        %v2997 = vld [vmem:[%s12 + $0x38] sm:$0xff]
        %v2998 = vld [vmem:[%s12 + $0x40] sm:$0xff]
        %v2999 = vld [vmem:[%s12 + $0x48] sm:$0xff]
        %v3000 = vld [vmem:[%s12 + $0x50] sm:$0xff]
        %v3001 = vld [vmem:[%s12 + $0x58] sm:$0xff]
        %v3002 = vld [vmem:[%s12 + $0x60] sm:$0xff]
        %v3003 = vld [vmem:[%s12 + $0x68] sm:$0xff]
        %v3004 = vld [vmem:[%s12 + $0x70] sm:$0xff]
        %v3005 = vld [vmem:[%s12 + $0x78] sm:$0xff]
        %v3006 = vld [vmem:[%s12 + $0x80] sm:$0xff]
        %v3007 = vld [vmem:[%s12 + $0x88] sm:$0xff]
        %v3008 = vld [vmem:[%s12 + $0x90] sm:$0xff]
        %v3009 = vld [vmem:[%s12 + $0x98] sm:$0xff]
        %v3010 = vld [vmem:[%s12 + $0xa0] sm:$0xff]
        %v3011 = vld [vmem:[%s12 + $0xa8] sm:$0xff]
        %v3012 = vld [vmem:[%s12 + $0xb0] sm:$0xff]
        %v3013 = vld [vmem:[%s12 + $0xb8] sm:$0xff]
        %v3014 = vld [vmem:[%s12 + $0xc0] sm:$0xff]
        %v3015 = vld [vmem:[%s12 + $0xc8] sm:$0xff]
        %v3016 = vld [vmem:[%s12 + $0xd0] sm:$0xff]
        %v3017 = vld [vmem:[%s12 + $0xd8] sm:$0xff]
        %v3018 = vld [vmem:[%s12 + $0xe0] sm:$0xff]
        %v3019 = vld [vmem:[%s12 + $0xe8] sm:$0xff]
        %v3020 = vld [vmem:[%s12 + $0xf0] sm:$0xff]
        %v3021 = vld [vmem:[%s12 + $0xf8] sm:$0xff]
        %3022 = vmatprep.subr.mxu0 0.0
        %3023 = vmatpush1.msra.mxu0 %v2990
        %3024 = vmatprep.subr.mxu0 0.0
        %3025 = vmatpush1.msra.mxu0 %v2991
        %3026 = vmatprep.subr.mxu0 0.0
        %3027 = vmatpush1.msra.mxu0 %v2992
        %3028 = vmatprep.subr.mxu0 0.0
        %3029 = vmatpush1.msra.mxu0 %v2993
        %3030 = vmatprep.subr.mxu0 0.0
        %3031 = vmatpush1.msra.mxu0 %v2994
        %3032 = vmatprep.subr.mxu0 0.0
        %3033 = vmatpush1.msra.mxu0 %v2995
        %3034 = vmatprep.subr.mxu0 0.0
        %3035 = vmatpush1.msra.mxu0 %v2996
        %3036 = vmatprep.subr.mxu0 0.0
        %3037 = vmatpush1.msra.mxu0 %v2997
        %3038 = vmatprep.subr.mxu0 0.0
        %3039 = vmatpush1.msra.mxu0 %v2998
        %3040 = vmatprep.subr.mxu0 0.0
        %3041 = vmatpush1.msra.mxu0 %v2999
        %3042 = vmatprep.subr.mxu0 0.0
        %3043 = vmatpush1.msra.mxu0 %v3000
        %3044 = vmatprep.subr.mxu0 0.0
        %3045 = vmatpush1.msra.mxu0 %v3001
        %3046 = vmatprep.subr.mxu0 0.0
        %3047 = vmatpush1.msra.mxu0 %v3002
        %3048 = vmatprep.subr.mxu0 0.0
        %3049 = vmatpush1.msra.mxu0 %v3003
        %3050 = vmatprep.subr.mxu0 0.0
        %3051 = vmatpush1.msra.mxu0 %v3004
        %3052 = vmatprep.subr.mxu0 0.0
        %3053 = vmatpush1.msra.mxu0 %v3005
        %3054 = vmatprep.subr.mxu0 0.0
        %3055 = vmatpush1.msra.mxu0 %v3006
        %3056 = vmatprep.subr.mxu0 0.0
        %3057 = vmatpush1.msra.mxu0 %v3007
        %3058 = vmatprep.subr.mxu0 0.0
        %3059 = vmatpush1.msra.mxu0 %v3008
        %3060 = vmatprep.subr.mxu0 0.0
        %3061 = vmatpush1.msra.mxu0 %v3009
        %3062 = vmatprep.subr.mxu0 0.0
        %3063 = vmatpush1.msra.mxu0 %v3010
        %3064 = vmatprep.subr.mxu0 0.0
        %3065 = vmatpush1.msra.mxu0 %v3011
        %3066 = vmatprep.subr.mxu0 0.0
        %3067 = vmatpush1.msra.mxu0 %v3012
        %3068 = vmatprep.subr.mxu0 0.0
        %3069 = vmatpush1.msra.mxu0 %v3013
        %3070 = vmatprep.subr.mxu0 0.0
        %3071 = vmatpush1.msra.mxu0 %v3014
        %3072 = vmatprep.subr.mxu0 0.0
        %3073 = vmatpush1.msra.mxu0 %v3015
        %3074 = vmatprep.subr.mxu0 0.0
        %3075 = vmatpush1.msra.mxu0 %v3016
        %3076 = vmatprep.subr.mxu0 0.0
        %3077 = vmatpush1.msra.mxu0 %v3017
        %3078 = vmatprep.subr.mxu0 0.0
        %3079 = vmatpush1.msra.mxu0 %v3018
        %3080 = vmatprep.subr.mxu0 0.0
        %3081 = vmatpush1.msra.mxu0 %v3019
        %3082 = vmatprep.subr.mxu0 0.0
        %3083 = vmatpush1.msra.mxu0 %v3020
        %3084 = vmatprep.subr.mxu0 0.0
        %3085 = vmatpush1.msra.mxu0 %v3021
        %3086 = vmatprep.mubr.f32.mxu0 %v2937
        %3087 = vmatmul.mubr.f32.gmra.mrb[0].mxu0 %v2936
        %v3088 = vpop.f32.mrb[0].mxu0
        %v3089 = vadd.f32 0.0, %v3088
        %v3090 = vpop.f32.mrb[0].mxu0
        %3091 = vmatprep.mubr.f32.mxu0 %v2939
        %3092 = vmatmul.mubr.f32.gmra.mrb[0].mxu0 %v2938
        %v3093 = vpop.f32.mrb[0].mxu0
        %v3094 = vadd.f32 0.0, %v3093
        %v3095 = vpop.f32.mrb[0].mxu0
        %3096 = vmatprep.mubr.f32.mxu0 %v2941
        %3097 = vmatmul.mubr.f32.gmra.mrb[0].mxu0 %v2940
        %v3098 = vpop.f32.mrb[0].mxu0
        %v3099 = vadd.f32 0.0, %v3098
        %v3100 = vpop.f32.mrb[0].mxu0
        %3101 = vmatprep.mubr.f32.mxu0 %v2943
        %3102 = vmatmul.mubr.f32.gmra.mrb[0].mxu0 %v2942
        %v3103 = vpop.f32.mrb[0].mxu0
        %v3104 = vadd.f32 0.0, %v3103
        %v3105 = vpop.f32.mrb[0].mxu0
        %3106 = vmatprep.mubr.f32.mxu0 %v2945
        %3107 = vmatmul.mubr.f32.gmra.mrb[0].mxu0 %v2944
        %v3108 = vpop.f32.mrb[0].mxu0
        %v3109 = vadd.f32 0.0, %v3108
        %v3110 = vpop.f32.mrb[0].mxu0
        %3111 = vmatprep.mubr.f32.mxu0 %v2947
        %3112 = vmatmul.mubr.f32.gmra.mrb[0].mxu0 %v2946
        %v3113 = vpop.f32.mrb[0].mxu0
        %v3114 = vadd.f32 0.0, %v3113
        %v3115 = vpop.f32.mrb[0].mxu0
        %3116 = vmatprep.mubr.f32.mxu0 %v2949
        %3117 = vmatmul.mubr.f32.gmra.mrb[0].mxu0 %v2948
        %v3118 = vpop.f32.mrb[0].mxu0
        %v3119 = vadd.f32 0.0, %v3118
        %v3120 = vpop.f32.mrb[0].mxu0
        %3121 = vmatprep.mubr.f32.mxu0 %v2951
        %3122 = vmatmul.mubr.f32.gmra.mrb[0].mxu0 %v2950
        %v3123 = vpop.f32.mrb[0].mxu0
        %v3124 = vadd.f32 0.0, %v3123
        %v3125 = vpop.f32.mrb[0].mxu0
        %3126 = vmatprep.mubr.f32.mxu0 %v2953
        %3127 = vmatmul.mubr.f32.gmra.mrb[0].mxu0 %v2952
        %v3128 = vpop.f32.mrb[0].mxu0
        %v3129 = vadd.f32 0.0, %v3128
        %v3130 = vpop.f32.mrb[0].mxu0
        %3131 = vmatprep.mubr.f32.mxu0 %v2955
        %3132 = vmatmul.mubr.f32.gmra.mrb[0].mxu0 %v2954
        %v3133 = vpop.f32.mrb[0].mxu0
        %v3134 = vadd.f32 0.0, %v3133
        %v3135 = vpop.f32.mrb[0].mxu0
        %3136 = vmatprep.mubr.f32.mxu0 %v2957
        %3137 = vmatmul.mubr.f32.gmra.mrb[0].mxu0 %v2956
        %v3138 = vpop.f32.mrb[0].mxu0
        %v3139 = vadd.f32 0.0, %v3138
        %v3140 = vpop.f32.mrb[0].mxu0
        %3141 = vmatprep.mubr.f32.mxu0 %v2959
        %3142 = vmatmul.mubr.f32.gmra.mrb[0].mxu0 %v2958
        %v3143 = vpop.f32.mrb[0].mxu0
        %v3144 = vadd.f32 0.0, %v3143
        %v3145 = vpop.f32.mrb[0].mxu0
        %3146 = vmatprep.mubr.f32.mxu0 %v2961
        %3147 = vmatmul.mubr.f32.gmra.mrb[0].mxu0 %v2960
        %v3148 = vpop.f32.mrb[0].mxu0
        %v3149 = vadd.f32 0.0, %v3148
        %v3150 = vpop.f32.mrb[0].mxu0
        %3151 = vmatprep.mubr.f32.mxu0 %v2963
        %3152 = vmatmul.mubr.f32.gmra.mrb[0].mxu0 %v2962
        %v3153 = vpop.f32.mrb[0].mxu0
        %v3154 = vadd.f32 0.0, %v3153
        %v3155 = vpop.f32.mrb[0].mxu0
        %3156 = vmatprep.mubr.f32.mxu0 %v2965
        %3157 = vmatmul.mubr.f32.gmra.mrb[0].mxu0 %v2964
        %v3158 = vpop.f32.mrb[0].mxu0
        %v3159 = vadd.f32 0.0, %v3158
        %v3160 = vpop.f32.mrb[0].mxu0
        %3161 = vmatprep.mubr.f32.mxu0 %v2967
        %3162 = vmatmul.mubr.f32.gmra.mrb[0].mxu0 %v2966
        %v3163 = vpop.f32.mrb[0].mxu0
        %v3164 = vadd.f32 0.0, %v3163
        %v3165 = vpop.f32.mrb[0].mxu0
        %3166 = vmatprep.mubr.f32.mxu0 %v2969
        %3167 = vmatmul.mubr.f32.gmra.mrb[0].mxu0 %v2968
        %v3168 = vpop.f32.mrb[0].mxu0
        %v3169 = vadd.f32 0.0, %v3168
        %v3170 = vpop.f32.mrb[0].mxu0
        %3171 = vmatprep.mubr.f32.mxu0 %v2971
        %3172 = vmatmul.mubr.f32.gmra.mrb[0].mxu0 %v2970
        %v3173 = vpop.f32.mrb[0].mxu0
        %v3174 = vadd.f32 0.0, %v3173
        %v3175 = vpop.f32.mrb[0].mxu0
        %3176 = vmatprep.mubr.f32.mxu0 %v2973
        %3177 = vmatmul.mubr.f32.gmra.mrb[0].mxu0 %v2972
        %v3178 = vpop.f32.mrb[0].mxu0
        %v3179 = vadd.f32 0.0, %v3178
        %v3180 = vpop.f32.mrb[0].mxu0
        %3181 = vmatprep.mubr.f32.mxu0 %v2975
        %3182 = vmatmul.mubr.f32.gmra.mrb[0].mxu0 %v2974
        %v3183 = vpop.f32.mrb[0].mxu0
        %v3184 = vadd.f32 0.0, %v3183
        %v3185 = vpop.f32.mrb[0].mxu0
        %3186 = vmatprep.mubr.f32.mxu0 %v2977
        %3187 = vmatmul.mubr.f32.gmra.mrb[0].mxu0 %v2976
        %v3188 = vpop.f32.mrb[0].mxu0
        %v3189 = vadd.f32 0.0, %v3188
        %v3190 = vpop.f32.mrb[0].mxu0
        %3191 = vmatprep.mubr.f32.mxu0 %v2979
        %3192 = vmatmul.mubr.f32.gmra.mrb[0].mxu0 %v2978
        %v3193 = vpop.f32.mrb[0].mxu0
        %v3194 = vadd.f32 0.0, %v3193
        %v3195 = vpop.f32.mrb[0].mxu0
        %3196 = vmatprep.mubr.f32.mxu0 %v2981
        %3197 = vmatmul.mubr.f32.gmra.mrb[0].mxu0 %v2980
        %v3198 = vpop.f32.mrb[0].mxu0
        %v3199 = vadd.f32 0.0, %v3198
        %v3200 = vpop.f32.mrb[0].mxu0
        %3201 = vmatprep.mubr.f32.mxu0 %v2983
        %3202 = vmatmul.mubr.f32.gmra.mrb[0].mxu0 %v2982
        %v3203 = vpop.f32.mrb[0].mxu0
        %v3204 = vadd.f32 0.0, %v3203
        %v3205 = vpop.f32.mrb[0].mxu0
        %3206 = vmatprep.mubr.f32.mxu0 %v2985
        %3207 = vmatmul.mubr.f32.gmra.mrb[0].mxu0 %v2984
        %v3208 = vpop.f32.mrb[0].mxu0
        %v3209 = vadd.f32 0.0, %v3208
        %v3210 = vpop.f32.mrb[0].mxu0
        %3211 = vmatprep.mubr.f32.mxu0 %v2987
        %3212 = vmatmul.mubr.f32.gmra.mrb[0].mxu0 %v2986
        %v3213 = vpop.f32.mrb[0].mxu0
        %v3214 = vadd.f32 0.0, %v3213
        %v3215 = vpop.f32.mrb[0].mxu0
        %3216 = vmatprep.mubr.f32.mxu0 %v2989
        %3217 = vmatmul.mubr.f32.gmra.mrb[0].mxu0 %v2988
        %v3218 = vpop.f32.mrb[0].mxu0
        %v3219 = vadd.f32 0.0, %v3218
        %v3220 = vpop.f32.mrb[0].mxu0
        %3221 = vdwg.mxu0
        %v3222 = vld [vmem:[%s9] sm:$0xff]
        %v3223 = vld [vmem:[%s9 + $0x8] sm:$0xff]
        %v3224 = vld [vmem:[%s9 + $0x10] sm:$0xff]
        %v3225 = vld [vmem:[%s9 + $0x18] sm:$0xff]
        %v3226 = vld [vmem:[%s9 + $0x20] sm:$0xff]
        %v3227 = vld [vmem:[%s9 + $0x28] sm:$0xff]
        %v3228 = vld [vmem:[%s9 + $0x30] sm:$0xff]
        %v3229 = vld [vmem:[%s9 + $0x38] sm:$0xff]
        %v3230 = vld [vmem:[%s9 + $0x40] sm:$0xff]
        %v3231 = vld [vmem:[%s9 + $0x48] sm:$0xff]
        %v3232 = vld [vmem:[%s9 + $0x50] sm:$0xff]
        %v3233 = vld [vmem:[%s9 + $0x58] sm:$0xff]
        %v3234 = vld [vmem:[%s9 + $0x60] sm:$0xff]
        %v3235 = vld [vmem:[%s9 + $0x68] sm:$0xff]
        %v3236 = vld [vmem:[%s9 + $0x70] sm:$0xff]
        %v3237 = vld [vmem:[%s9 + $0x78] sm:$0xff]
        %v3238 = vld [vmem:[%s9 + $0x80] sm:$0xff]
        %v3239 = vld [vmem:[%s9 + $0x88] sm:$0xff]
        %v3240 = vld [vmem:[%s9 + $0x90] sm:$0xff]
        %v3241 = vld [vmem:[%s9 + $0x98] sm:$0xff]
        %v3242 = vld [vmem:[%s9 + $0xa0] sm:$0xff]
        %v3243 = vld [vmem:[%s9 + $0xa8] sm:$0xff]
        %v3244 = vld [vmem:[%s9 + $0xb0] sm:$0xff]
        %v3245 = vld [vmem:[%s9 + $0xb8] sm:$0xff]
        %v3246 = vld [vmem:[%s9 + $0xc0] sm:$0xf]
        %v3247 = vld [vmem:[%s9 + $0xc8] sm:$0xf]
        %v3248 = vld [vmem:[%s10] sm:$0xff]
        %v3249 = vld [vmem:[%s10 + $0x8] sm:$0xff]
        %v3250 = vld [vmem:[%s10 + $0x10] sm:$0xff]
        %v3251 = vld [vmem:[%s10 + $0x18] sm:$0xff]
        %v3252 = vld [vmem:[%s10 + $0x20] sm:$0xff]
        %v3253 = vld [vmem:[%s10 + $0x28] sm:$0xff]
        %v3254 = vld [vmem:[%s10 + $0x30] sm:$0xff]
        %v3255 = vld [vmem:[%s10 + $0x38] sm:$0xff]
        %v3256 = vld [vmem:[%s10 + $0x40] sm:$0xff]
        %v3257 = vld [vmem:[%s10 + $0x48] sm:$0xff]
        %v3258 = vld [vmem:[%s10 + $0x50] sm:$0xff]
        %v3259 = vld [vmem:[%s10 + $0x58] sm:$0xff]
        %v3260 = vld [vmem:[%s10 + $0x60] sm:$0xf]
        %3262 = vset.pattern.permute.xlu0 0
        %3263 = vperm.xlu0 %3262, %v3248
        %v3264 = vpop.permute.xlu0 %3263
        %3267 = vset.pattern.permute.xlu0 0
        %3268 = vperm.xlu0 %3267, %v3249
        %v3269 = vpop.permute.xlu0 %3268
        %3272 = vset.pattern.permute.xlu0 0
        %3273 = vperm.xlu0 %3272, %v3250
        %v3274 = vpop.permute.xlu0 %3273
        %3277 = vset.pattern.permute.xlu0 0
        %3278 = vperm.xlu0 %3277, %v3251
        %v3279 = vpop.permute.xlu0 %3278
        %3282 = vset.pattern.permute.xlu0 0
        %3283 = vperm.xlu0 %3282, %v3252
        %v3284 = vpop.permute.xlu0 %3283
        %3287 = vset.pattern.permute.xlu0 0
        %3288 = vperm.xlu0 %3287, %v3253
        %v3289 = vpop.permute.xlu0 %3288
        %3292 = vset.pattern.permute.xlu0 0
        %3293 = vperm.xlu0 %3292, %v3254
        %v3294 = vpop.permute.xlu0 %3293
        %3297 = vset.pattern.permute.xlu0 0
        %3298 = vperm.xlu0 %3297, %v3255
        %v3299 = vpop.permute.xlu0 %3298
        %3302 = vset.pattern.permute.xlu0 0
        %3303 = vperm.xlu0 %3302, %v3256
        %v3304 = vpop.permute.xlu0 %3303
        %3307 = vset.pattern.permute.xlu0 0
        %3308 = vperm.xlu0 %3307, %v3257
        %v3309 = vpop.permute.xlu0 %3308
        %3312 = vset.pattern.permute.xlu0 0
        %3313 = vperm.xlu0 %3312, %v3258
        %v3314 = vpop.permute.xlu0 %3313
        %3317 = vset.pattern.permute.xlu0 0
        %3318 = vperm.xlu0 %3317, %v3259
        %v3319 = vpop.permute.xlu0 %3318
        %3322 = vset.pattern.permute.xlu0 0
        %3323 = vperm.xlu0 %3322, %v3260
        %v3324 = vpop.permute.xlu0 %3323
        %vm3326 = vcmask 719872
        %v3328 = vsel %vm3326, %v3223, 0
        %v3331 = vsel %vm3326, %v3225, 0
        %v3334 = vsel %vm3326, %v3227, 0
        %v3337 = vsel %vm3326, %v3229, 0
        %v3340 = vsel %vm3326, %v3231, 0
        %v3343 = vsel %vm3326, %v3233, 0
        %v3346 = vsel %vm3326, %v3235, 0
        %v3349 = vsel %vm3326, %v3237, 0
        %v3352 = vsel %vm3326, %v3239, 0
        %v3355 = vsel %vm3326, %v3241, 0
        %v3358 = vsel %vm3326, %v3243, 0
        %v3361 = vsel %vm3326, %v3245, 0
        %v3364 = vsel %vm3326, %v3247, 0
        %3366 = vmatprep.subr.mxu0 0.0
        %3367 = vmatpush1.msra.mxu0 %v3089
        %3368 = vmatprep.subr.mxu0 0.0
        %3369 = vmatpush1.msra.mxu0 %v3094
        %3370 = vmatprep.subr.mxu0 0.0
        %3371 = vmatpush1.msra.mxu0 %v3099
        %3372 = vmatprep.subr.mxu0 0.0
        %3373 = vmatpush1.msra.mxu0 %v3104
        %3374 = vmatprep.subr.mxu0 0.0
        %3375 = vmatpush1.msra.mxu0 %v3109
        %3376 = vmatprep.subr.mxu0 0.0
        %3377 = vmatpush1.msra.mxu0 %v3114
        %3378 = vmatprep.subr.mxu0 0.0
        %3379 = vmatpush1.msra.mxu0 %v3119
        %3380 = vmatprep.subr.mxu0 0.0
        %3381 = vmatpush1.msra.mxu0 %v3124
        %3382 = vmatprep.subr.mxu0 0.0
        %3383 = vmatpush1.msra.mxu0 %v3129
        %3384 = vmatprep.subr.mxu0 0.0
        %3385 = vmatpush1.msra.mxu0 %v3134
        %3386 = vmatprep.subr.mxu0 0.0
        %3387 = vmatpush1.msra.mxu0 %v3139
        %3388 = vmatprep.subr.mxu0 0.0
        %3389 = vmatpush1.msra.mxu0 %v3144
        %3390 = vmatprep.subr.mxu0 0.0
        %3391 = vmatpush1.msra.mxu0 %v3149
        %3392 = vmatprep.subr.mxu0 0.0
        %3393 = vmatpush1.msra.mxu0 %v3154
        %3394 = vmatprep.subr.mxu0 0.0
        %3395 = vmatpush1.msra.mxu0 %v3159
        %3396 = vmatprep.subr.mxu0 0.0
        %3397 = vmatpush1.msra.mxu0 %v3164
        %3398 = vmatprep.subr.mxu0 0.0
        %3399 = vmatpush1.msra.mxu0 %v3169
        %3400 = vmatprep.subr.mxu0 0.0
        %3401 = vmatpush1.msra.mxu0 %v3174
        %3402 = vmatprep.subr.mxu0 0.0
        %3403 = vmatpush1.msra.mxu0 %v3179
        %3404 = vmatprep.subr.mxu0 0.0
        %3405 = vmatpush1.msra.mxu0 %v3184
        %3406 = vmatprep.subr.mxu0 0.0
        %3407 = vmatpush1.msra.mxu0 %v3189
        %3408 = vmatprep.subr.mxu0 0.0
        %3409 = vmatpush1.msra.mxu0 %v3194
        %3410 = vmatprep.subr.mxu0 0.0
        %3411 = vmatpush1.msra.mxu0 %v3199
        %3412 = vmatprep.subr.mxu0 0.0
        %3413 = vmatpush1.msra.mxu0 %v3204
        %3414 = vmatprep.subr.mxu0 0.0
        %3415 = vmatpush1.msra.mxu0 %v3209
        %3416 = vmatprep.subr.mxu0 0.0
        %3417 = vmatpush1.msra.mxu0 %v3214
        %3418 = vmatprep.subr.mxu0 0.0
        %3419 = vmatpush1.msra.mxu0 %v3219
        %3420 = vmatprep.subr.mxu0 0.0
        %3421 = vmatpush1.msra.mxu0 0.0
        %3422 = vmatprep.subr.mxu0 0.0
        %3423 = vmatpush1.msra.mxu0 0.0
        %3424 = vmatprep.subr.mxu0 0.0
        %3425 = vmatpush1.msra.mxu0 0.0
        %3426 = vmatprep.subr.mxu0 0.0
        %3427 = vmatpush1.msra.mxu0 0.0
        %3428 = vmatprep.subr.mxu0 0.0
        %3429 = vmatpush1.msra.mxu0 0.0
        %3430 = vmatprep.mubr.f32.mxu0 %v3328
        %3431 = vmatmul.mubr.f32.gmra.mrb[0].mxu0 %v3222
        %v3432 = vpop.f32.mrb[0].mxu0
        %v3433 = vadd.f32 %v3264, %v3432
        %v3434 = vpop.f32.mrb[0].mxu0
        %3435 = vmatprep.mubr.f32.mxu0 %v3331
        %3436 = vmatmul.mubr.f32.gmra.mrb[0].mxu0 %v3224
        %v3437 = vpop.f32.mrb[0].mxu0
        %v3438 = vadd.f32 %v3269, %v3437
        %v3439 = vpop.f32.mrb[0].mxu0
        %3440 = vmatprep.mubr.f32.mxu0 %v3334
        %3441 = vmatmul.mubr.f32.gmra.mrb[0].mxu0 %v3226
        %v3442 = vpop.f32.mrb[0].mxu0
        %v3443 = vadd.f32 %v3274, %v3442
        %v3444 = vpop.f32.mrb[0].mxu0
        %3445 = vmatprep.mubr.f32.mxu0 %v3337
        %3446 = vmatmul.mubr.f32.gmra.mrb[0].mxu0 %v3228
        %v3447 = vpop.f32.mrb[0].mxu0
        %v3448 = vadd.f32 %v3279, %v3447
        %v3449 = vpop.f32.mrb[0].mxu0
        %3450 = vmatprep.mubr.f32.mxu0 %v3340
        %3451 = vmatmul.mubr.f32.gmra.mrb[0].mxu0 %v3230
        %v3452 = vpop.f32.mrb[0].mxu0
        %v3453 = vadd.f32 %v3284, %v3452
        %v3454 = vpop.f32.mrb[0].mxu0
        %3455 = vmatprep.mubr.f32.mxu0 %v3343
        %3456 = vmatmul.mubr.f32.gmra.mrb[0].mxu0 %v3232
        %v3457 = vpop.f32.mrb[0].mxu0
        %v3458 = vadd.f32 %v3289, %v3457
        %v3459 = vpop.f32.mrb[0].mxu0
        %3460 = vmatprep.mubr.f32.mxu0 %v3346
        %3461 = vmatmul.mubr.f32.gmra.mrb[0].mxu0 %v3234
        %v3462 = vpop.f32.mrb[0].mxu0
        %v3463 = vadd.f32 %v3294, %v3462
        %v3464 = vpop.f32.mrb[0].mxu0
        %3465 = vmatprep.mubr.f32.mxu0 %v3349
        %3466 = vmatmul.mubr.f32.gmra.mrb[0].mxu0 %v3236
        %v3467 = vpop.f32.mrb[0].mxu0
        %v3468 = vadd.f32 %v3299, %v3467
        %v3469 = vpop.f32.mrb[0].mxu0
        %3470 = vmatprep.mubr.f32.mxu0 %v3352
        %3471 = vmatmul.mubr.f32.gmra.mrb[0].mxu0 %v3238
        %v3472 = vpop.f32.mrb[0].mxu0
        %v3473 = vadd.f32 %v3304, %v3472
        %v3474 = vpop.f32.mrb[0].mxu0
        %3475 = vmatprep.mubr.f32.mxu0 %v3355
        %3476 = vmatmul.mubr.f32.gmra.mrb[0].mxu0 %v3240
        %v3477 = vpop.f32.mrb[0].mxu0
        %v3478 = vadd.f32 %v3309, %v3477
        %v3479 = vpop.f32.mrb[0].mxu0
        %3480 = vmatprep.mubr.f32.mxu0 %v3358
        %3481 = vmatmul.mubr.f32.gmra.mrb[0].mxu0 %v3242
        %v3482 = vpop.f32.mrb[0].mxu0
        %v3483 = vadd.f32 %v3314, %v3482
        %v3484 = vpop.f32.mrb[0].mxu0
        %3485 = vmatprep.mubr.f32.mxu0 %v3361
        %3486 = vmatmul.mubr.f32.gmra.mrb[0].mxu0 %v3244
        %v3487 = vpop.f32.mrb[0].mxu0
        %v3488 = vadd.f32 %v3319, %v3487
        %v3489 = vpop.f32.mrb[0].mxu0
        %3490 = vmatprep.mubr.f32.mxu0 %v3364
        %3491 = vmatmul.mubr.f32.gmra.mrb[0].mxu0 %v3246
        %v3492 = vpop.f32.mrb[0].mxu0
        %v3493 = vadd.f32 %v3324, %v3492
        %v3494 = vpop.f32.mrb[0].mxu0
        %3495 = vdwg.mxu0
        %v3496 = vld [vmem:[%s11] sm:$0xff]
        %v3497 = vld [vmem:[%s11 + $0x8] sm:$0xff]
        %v3498 = vld [vmem:[%s11 + $0x10] sm:$0xff]
        %v3499 = vld [vmem:[%s11 + $0x18] sm:$0xff]
        %v3500 = vld [vmem:[%s11 + $0x20] sm:$0xff]
        %v3501 = vld [vmem:[%s11 + $0x28] sm:$0xff]
        %v3502 = vld [vmem:[%s11 + $0x30] sm:$0xff]
        %v3503 = vld [vmem:[%s11 + $0x38] sm:$0xff]
        %v3504 = vld [vmem:[%s11 + $0x40] sm:$0xff]
        %v3505 = vld [vmem:[%s11 + $0x48] sm:$0xff]
        %v3506 = vld [vmem:[%s11 + $0x50] sm:$0xff]
        %v3507 = vld [vmem:[%s11 + $0x58] sm:$0xff]
        %v3508 = vld [vmem:[%s11 + $0x60] sm:$0xf]
        %vm3509 = vcmask 523264
        %v3510 = vsel %vm3509, %v3433, 0.0
        %3511 = vadd.xlane.f32.xlu0 %v3510
        %v3512 = vpop.xlane.xlu0 %3511
        %v3513 = vsel %vm3509, %v3438, 0.0
        %3514 = vadd.xlane.f32.xlu0 %v3513
        %v3515 = vpop.xlane.xlu0 %3514
        %v3516 = vsel %vm3509, %v3443, 0.0
        %3517 = vadd.xlane.f32.xlu0 %v3516
        %v3518 = vpop.xlane.xlu0 %3517
        %v3519 = vsel %vm3509, %v3448, 0.0
        %3520 = vadd.xlane.f32.xlu0 %v3519
        %v3521 = vpop.xlane.xlu0 %3520
        %v3522 = vsel %vm3509, %v3453, 0.0
        %3523 = vadd.xlane.f32.xlu0 %v3522
        %v3524 = vpop.xlane.xlu0 %3523
        %v3525 = vsel %vm3509, %v3458, 0.0
        %3526 = vadd.xlane.f32.xlu0 %v3525
        %v3527 = vpop.xlane.xlu0 %3526
        %v3528 = vsel %vm3509, %v3463, 0.0
        %3529 = vadd.xlane.f32.xlu0 %v3528
        %v3530 = vpop.xlane.xlu0 %3529
        %v3531 = vsel %vm3509, %v3468, 0.0
        %3532 = vadd.xlane.f32.xlu0 %v3531
        %v3533 = vpop.xlane.xlu0 %3532
        %v3534 = vsel %vm3509, %v3473, 0.0
        %3535 = vadd.xlane.f32.xlu0 %v3534
        %v3536 = vpop.xlane.xlu0 %3535
        %v3537 = vsel %vm3509, %v3478, 0.0
        %3538 = vadd.xlane.f32.xlu0 %v3537
        %v3539 = vpop.xlane.xlu0 %3538
        %v3540 = vsel %vm3509, %v3483, 0.0
        %3541 = vadd.xlane.f32.xlu0 %v3540
        %v3542 = vpop.xlane.xlu0 %3541
        %v3543 = vsel %vm3509, %v3488, 0.0
        %3544 = vadd.xlane.f32.xlu0 %v3543
        %v3545 = vpop.xlane.xlu0 %3544
        %vm3546 = vcmask 519168
        %v3547 = vsel %vm3546, %v3493, 0.0
        %3548 = vadd.xlane.f32.xlu0 %v3547
        %v3549 = vpop.xlane.xlu0 %3548
        %v3550 = vmul.f32 %v3433, %v3433
        %v3551 = vmul.f32 %v3438, %v3438
        %v3552 = vmul.f32 %v3443, %v3443
        %v3553 = vmul.f32 %v3448, %v3448
        %v3554 = vmul.f32 %v3453, %v3453
        %v3555 = vmul.f32 %v3458, %v3458
        %v3556 = vmul.f32 %v3463, %v3463
        %v3557 = vmul.f32 %v3468, %v3468
        %v3558 = vmul.f32 %v3473, %v3473
        %v3559 = vmul.f32 %v3478, %v3478
        %v3560 = vmul.f32 %v3483, %v3483
        %v3561 = vmul.f32 %v3488, %v3488
        %v3562 = vmul.f32 %v3493, %v3493
        %v3563 = vsel %vm3509, %v3550, 0.0
        %3564 = vadd.xlane.f32.xlu0 %v3563
        %v3565 = vpop.xlane.xlu0 %3564
        %v3566 = vsel %vm3509, %v3551, 0.0
        %3567 = vadd.xlane.f32.xlu0 %v3566
        %v3568 = vpop.xlane.xlu0 %3567
        %v3569 = vsel %vm3509, %v3552, 0.0
        %3570 = vadd.xlane.f32.xlu0 %v3569
        %v3571 = vpop.xlane.xlu0 %3570
        %v3572 = vsel %vm3509, %v3553, 0.0
        %3573 = vadd.xlane.f32.xlu0 %v3572
        %v3574 = vpop.xlane.xlu0 %3573
        %v3575 = vsel %vm3509, %v3554, 0.0
        %3576 = vadd.xlane.f32.xlu0 %v3575
        %v3577 = vpop.xlane.xlu0 %3576
        %v3578 = vsel %vm3509, %v3555, 0.0
        %3579 = vadd.xlane.f32.xlu0 %v3578
        %v3580 = vpop.xlane.xlu0 %3579
        %v3581 = vsel %vm3509, %v3556, 0.0
        %3582 = vadd.xlane.f32.xlu0 %v3581
        %v3583 = vpop.xlane.xlu0 %3582
        %v3584 = vsel %vm3509, %v3557, 0.0
        %3585 = vadd.xlane.f32.xlu0 %v3584
        %v3586 = vpop.xlane.xlu0 %3585
        %v3587 = vsel %vm3509, %v3558, 0.0
        %3588 = vadd.xlane.f32.xlu0 %v3587
        %v3589 = vpop.xlane.xlu0 %3588
        %v3590 = vsel %vm3509, %v3559, 0.0
        %3591 = vadd.xlane.f32.xlu0 %v3590
        %v3592 = vpop.xlane.xlu0 %3591
        %v3593 = vsel %vm3509, %v3560, 0.0
        %3594 = vadd.xlane.f32.xlu0 %v3593
        %v3595 = vpop.xlane.xlu0 %3594
        %v3596 = vsel %vm3509, %v3561, 0.0
        %3597 = vadd.xlane.f32.xlu0 %v3596
        %v3598 = vpop.xlane.xlu0 %3597
        %v3599 = vsel %vm3546, %v3562, 0.0
        %3600 = vadd.xlane.f32.xlu0 %v3599
        %v3601 = vpop.xlane.xlu0 %3600
        %v3602 = vsel %vm1790, %v3512, %v3565
        %v3603 = vsel %vm1790, %v3515, %v3568
        %v3604 = vsel %vm1790, %v3518, %v3571
        %v3605 = vsel %vm1790, %v3521, %v3574
        %v3606 = vsel %vm1790, %v3524, %v3577
        %v3607 = vsel %vm1790, %v3527, %v3580
        %v3608 = vsel %vm1790, %v3530, %v3583
        %v3609 = vsel %vm1790, %v3533, %v3586
        %v3610 = vsel %vm1790, %v3536, %v3589
        %v3611 = vsel %vm1790, %v3539, %v3592
        %v3612 = vsel %vm1790, %v3542, %v3595
        %v3613 = vsel %vm1790, %v3545, %v3598
        %v3614 = vsel %vm1790, %v3549, %v3601
        %vm3615 = vcmask 818176
        %v3617 = vsel %vm3615, %v3496, 0
        %v3620 = vsel %vm3615, %v3497, 0
        %v3623 = vsel %vm3615, %v3498, 0
        %v3626 = vsel %vm3615, %v3499, 0
        %v3629 = vsel %vm3615, %v3500, 0
        %v3632 = vsel %vm3615, %v3501, 0
        %v3635 = vsel %vm3615, %v3502, 0
        %v3638 = vsel %vm3615, %v3503, 0
        %v3641 = vsel %vm3615, %v3504, 0
        %v3644 = vsel %vm3615, %v3505, 0
        %v3647 = vsel %vm3615, %v3506, 0
        %v3650 = vsel %vm3615, %v3507, 0
        %v3653 = vsel %vm3615, %v3508, 0
        %vm3655 = vcmask 1043456
        %v3657 = vsel %vm3655, %v3614, 0
        %3659 = vmatprep.subr.mxu0 0.0
        %3660 = vmatpush1.msra.mxu0 %v3602
        %3661 = vmatprep.subr.mxu0 0.0
        %3662 = vmatpush1.msra.mxu0 %v3603
        %3663 = vmatprep.subr.mxu0 0.0
        %3664 = vmatpush1.msra.mxu0 %v3604
        %3665 = vmatprep.subr.mxu0 0.0
        %3666 = vmatpush1.msra.mxu0 %v3605
        %3667 = vmatprep.subr.mxu0 0.0
        %3668 = vmatpush1.msra.mxu0 %v3606
        %3669 = vmatprep.subr.mxu0 0.0
        %3670 = vmatpush1.msra.mxu0 %v3607
        %3671 = vmatprep.subr.mxu0 0.0
        %3672 = vmatpush1.msra.mxu0 %v3608
        %3673 = vmatprep.subr.mxu0 0.0
        %3674 = vmatpush1.msra.mxu0 %v3609
        %3675 = vmatprep.subr.mxu0 0.0
        %3676 = vmatpush1.msra.mxu0 %v3610
        %3677 = vmatprep.subr.mxu0 0.0
        %3678 = vmatpush1.msra.mxu0 %v3611
        %3679 = vmatprep.subr.mxu0 0.0
        %3680 = vmatpush1.msra.mxu0 %v3612
        %3681 = vmatprep.subr.mxu0 0.0
        %3682 = vmatpush1.msra.mxu0 %v3613
        %3683 = vmatprep.subr.mxu0 0.0
        %3684 = vmatpush1.msra.mxu0 %v3657
        %3685 = vmatprep.subr.mxu0 0.0
        %3686 = vmatpush1.msra.mxu0 0.0
        %3687 = vmatprep.subr.mxu0 0.0
        %3688 = vmatpush1.msra.mxu0 0.0
        %3689 = vmatprep.subr.mxu0 0.0
        %3690 = vmatpush1.msra.mxu0 0.0
        %3691 = vmatprep.subr.mxu0 0.0
        %3692 = vmatpush1.msra.mxu0 0.0
        %3693 = vmatprep.subr.mxu0 0.0
        %3694 = vmatpush1.msra.mxu0 0.0
        %3695 = vmatprep.subr.mxu0 0.0
        %3696 = vmatpush1.msra.mxu0 0.0
        %3697 = vmatprep.subr.mxu0 0.0
        %3698 = vmatpush1.msra.mxu0 0.0
        %3699 = vmatprep.subr.mxu0 0.0
        %3700 = vmatpush1.msra.mxu0 0.0
        %3701 = vmatprep.subr.mxu0 0.0
        %3702 = vmatpush1.msra.mxu0 0.0
        %3703 = vmatprep.subr.mxu0 0.0
        %3704 = vmatpush1.msra.mxu0 0.0
        %3705 = vmatprep.subr.mxu0 0.0
        %3706 = vmatpush1.msra.mxu0 0.0
        %3707 = vmatprep.subr.mxu0 0.0
        %3708 = vmatpush1.msra.mxu0 0.0
        %3709 = vmatprep.subr.mxu0 0.0
        %3710 = vmatpush1.msra.mxu0 0.0
        %3711 = vmatprep.subr.mxu0 0.0
        %3712 = vmatpush1.msra.mxu0 0.0
        %3713 = vmatprep.subr.mxu0 0.0
        %3714 = vmatpush1.msra.mxu0 0.0
        %3715 = vmatprep.subr.mxu0 0.0
        %3716 = vmatpush1.msra.mxu0 0.0
        %3717 = vmatprep.subr.mxu0 0.0
        %3718 = vmatpush1.msra.mxu0 0.0
        %3719 = vmatprep.subr.mxu0 0.0
        %3720 = vmatpush1.msra.mxu0 0.0
        %3721 = vmatprep.subr.mxu0 0.0
        %3722 = vmatpush1.msra.mxu0 0.0
        %3723 = vmatprep.mubr.f32.mxu0 0.0
        %3724 = vmatmul.mubr.f32.gmra.mrb[0].mxu0 %v3617
        %v3725 = vpop.f32.mrb[0].mxu0
        %v3726 = vadd.f32 0.0, %v3725
        %v3727 = vpop.f32.mrb[0].mxu0
        %3728 = vmatprep.mubr.f32.mxu0 0.0
        %3729 = vmatmul.mubr.f32.gmra.mrb[0].mxu0 %v3620
        %v3730 = vpop.f32.mrb[0].mxu0
        %v3731 = vadd.f32 0.0, %v3730
        %v3732 = vpop.f32.mrb[0].mxu0
        %3733 = vmatprep.mubr.f32.mxu0 0.0
        %3734 = vmatmul.mubr.f32.gmra.mrb[0].mxu0 %v3623
        %v3735 = vpop.f32.mrb[0].mxu0
        %v3736 = vadd.f32 0.0, %v3735
        %v3737 = vpop.f32.mrb[0].mxu0
        %3738 = vmatprep.mubr.f32.mxu0 0.0
        %3739 = vmatmul.mubr.f32.gmra.mrb[0].mxu0 %v3626
        %v3740 = vpop.f32.mrb[0].mxu0
        %v3741 = vadd.f32 0.0, %v3740
        %v3742 = vpop.f32.mrb[0].mxu0
        %3743 = vmatprep.mubr.f32.mxu0 0.0
        %3744 = vmatmul.mubr.f32.gmra.mrb[0].mxu0 %v3629
        %v3745 = vpop.f32.mrb[0].mxu0
        %v3746 = vadd.f32 0.0, %v3745
        %v3747 = vpop.f32.mrb[0].mxu0
        %3748 = vmatprep.mubr.f32.mxu0 0.0
        %3749 = vmatmul.mubr.f32.gmra.mrb[0].mxu0 %v3632
        %v3750 = vpop.f32.mrb[0].mxu0
        %v3751 = vadd.f32 0.0, %v3750
        %v3752 = vpop.f32.mrb[0].mxu0
        %3753 = vmatprep.mubr.f32.mxu0 0.0
        %3754 = vmatmul.mubr.f32.gmra.mrb[0].mxu0 %v3635
        %v3755 = vpop.f32.mrb[0].mxu0
        %v3756 = vadd.f32 0.0, %v3755
        %v3757 = vpop.f32.mrb[0].mxu0
        %3758 = vmatprep.mubr.f32.mxu0 0.0
        %3759 = vmatmul.mubr.f32.gmra.mrb[0].mxu0 %v3638
        %v3760 = vpop.f32.mrb[0].mxu0
        %v3761 = vadd.f32 0.0, %v3760
        %v3762 = vpop.f32.mrb[0].mxu0
        %3763 = vmatprep.mubr.f32.mxu0 0.0
        %3764 = vmatmul.mubr.f32.gmra.mrb[0].mxu0 %v3641
        %v3765 = vpop.f32.mrb[0].mxu0
        %v3766 = vadd.f32 0.0, %v3765
        %v3767 = vpop.f32.mrb[0].mxu0
        %3768 = vmatprep.mubr.f32.mxu0 0.0
        %3769 = vmatmul.mubr.f32.gmra.mrb[0].mxu0 %v3644
        %v3770 = vpop.f32.mrb[0].mxu0
        %v3771 = vadd.f32 0.0, %v3770
        %v3772 = vpop.f32.mrb[0].mxu0
        %3773 = vmatprep.mubr.f32.mxu0 0.0
        %3774 = vmatmul.mubr.f32.gmra.mrb[0].mxu0 %v3647
        %v3775 = vpop.f32.mrb[0].mxu0
        %v3776 = vadd.f32 0.0, %v3775
        %v3777 = vpop.f32.mrb[0].mxu0
        %3778 = vmatprep.mubr.f32.mxu0 0.0
        %3779 = vmatmul.mubr.f32.gmra.mrb[0].mxu0 %v3650
        %v3780 = vpop.f32.mrb[0].mxu0
        %v3781 = vadd.f32 0.0, %v3780
        %v3782 = vpop.f32.mrb[0].mxu0
        %3783 = vmatprep.mubr.f32.mxu0 0.0
        %3784 = vmatmul.mubr.f32.gmra.mrb[0].mxu0 %v3653
        %v3785 = vpop.f32.mrb[0].mxu0
        %v3786 = vadd.f32 0.0, %v3785
        %v3787 = vpop.f32.mrb[0].mxu0
        %3788 = vdwg.mxu0
        %v3789 = vmul.f32 %v3726, %v3726
        %v3790 = vmul.f32 %v3731, %v3731
        %v3791 = vmul.f32 %v3736, %v3736
        %v3792 = vmul.f32 %v3741, %v3741
        %v3793 = vmul.f32 %v3746, %v3746
        %v3794 = vmul.f32 %v3751, %v3751
        %v3795 = vmul.f32 %v3756, %v3756
        %v3796 = vmul.f32 %v3761, %v3761
        %v3797 = vmul.f32 %v3766, %v3766
        %v3798 = vmul.f32 %v3771, %v3771
        %v3799 = vmul.f32 %v3776, %v3776
        %v3800 = vmul.f32 %v3781, %v3781
        %v3801 = vmul.f32 %v3786, %v3786
        %3815 = vrot.lane.b32.xlu0 %v3789, 1
        %v3816 = vpop.permute.xlu0 %3815
        %3817 = vrot.lane.b32.xlu0 %v3790, 1
        %v3818 = vpop.permute.xlu0 %3817
        %3819 = vrot.lane.b32.xlu0 %v3791, 1
        %v3820 = vpop.permute.xlu0 %3819
        %3821 = vrot.lane.b32.xlu0 %v3792, 1
        %v3822 = vpop.permute.xlu0 %3821
        %3823 = vrot.lane.b32.xlu0 %v3793, 1
        %v3824 = vpop.permute.xlu0 %3823
        %3825 = vrot.lane.b32.xlu0 %v3794, 1
        %v3826 = vpop.permute.xlu0 %3825
        %3827 = vrot.lane.b32.xlu0 %v3795, 1
        %v3828 = vpop.permute.xlu0 %3827
        %3829 = vrot.lane.b32.xlu0 %v3796, 1
        %v3830 = vpop.permute.xlu0 %3829
        %3831 = vrot.lane.b32.xlu0 %v3797, 1
        %v3832 = vpop.permute.xlu0 %3831
        %3833 = vrot.lane.b32.xlu0 %v3798, 1
        %v3834 = vpop.permute.xlu0 %3833
        %3835 = vrot.lane.b32.xlu0 %v3799, 1
        %v3836 = vpop.permute.xlu0 %3835
        %3837 = vrot.lane.b32.xlu0 %v3800, 1
        %v3838 = vpop.permute.xlu0 %3837
        %3839 = vrot.lane.b32.xlu0 %v3801, 1
        %v3840 = vpop.permute.xlu0 %3839
        %v3854 = vsub.f32 %v3726, %v3816
        %v3855 = vsub.f32 %v3731, %v3818
        %v3856 = vsub.f32 %v3736, %v3820
        %v3857 = vsub.f32 %v3741, %v3822
        %v3858 = vsub.f32 %v3746, %v3824
        %v3859 = vsub.f32 %v3751, %v3826
        %v3860 = vsub.f32 %v3756, %v3828
        %v3861 = vsub.f32 %v3761, %v3830
        %v3862 = vsub.f32 %v3766, %v3832
        %v3863 = vsub.f32 %v3771, %v3834
        %v3864 = vsub.f32 %v3776, %v3836
        %v3865 = vsub.f32 %v3781, %v3838
        %v3866 = vsub.f32 %v3786, %v3840
        %3868 = vset.pattern.permute.xlu0 0
        %3869 = vperm.xlu0 %3868, %v3726
        %v3870 = vpop.permute.xlu0 %3869
        %3873 = vset.pattern.permute.xlu0 0
        %3874 = vperm.xlu0 %3873, %v3731
        %v3875 = vpop.permute.xlu0 %3874
        %3878 = vset.pattern.permute.xlu0 0
        %3879 = vperm.xlu0 %3878, %v3736
        %v3880 = vpop.permute.xlu0 %3879
        %3883 = vset.pattern.permute.xlu0 0
        %3884 = vperm.xlu0 %3883, %v3741
        %v3885 = vpop.permute.xlu0 %3884
        %3888 = vset.pattern.permute.xlu0 0
        %3889 = vperm.xlu0 %3888, %v3746
        %v3890 = vpop.permute.xlu0 %3889
        %3893 = vset.pattern.permute.xlu0 0
        %3894 = vperm.xlu0 %3893, %v3751
        %v3895 = vpop.permute.xlu0 %3894
        %3898 = vset.pattern.permute.xlu0 0
        %3899 = vperm.xlu0 %3898, %v3756
        %v3900 = vpop.permute.xlu0 %3899
        %3903 = vset.pattern.permute.xlu0 0
        %3904 = vperm.xlu0 %3903, %v3761
        %v3905 = vpop.permute.xlu0 %3904
        %3908 = vset.pattern.permute.xlu0 0
        %3909 = vperm.xlu0 %3908, %v3766
        %v3910 = vpop.permute.xlu0 %3909
        %3913 = vset.pattern.permute.xlu0 0
        %3914 = vperm.xlu0 %3913, %v3771
        %v3915 = vpop.permute.xlu0 %3914
        %3918 = vset.pattern.permute.xlu0 0
        %3919 = vperm.xlu0 %3918, %v3776
        %v3920 = vpop.permute.xlu0 %3919
        %3923 = vset.pattern.permute.xlu0 0
        %3924 = vperm.xlu0 %3923, %v3781
        %v3925 = vpop.permute.xlu0 %3924
        %3928 = vset.pattern.permute.xlu0 0
        %3929 = vperm.xlu0 %3928, %v3786
        %v3930 = vpop.permute.xlu0 %3929
        %v3932 = vsub.f32 %v3433, %v3870
        %v3933 = vsub.f32 %v3438, %v3875
        %v3934 = vsub.f32 %v3443, %v3880
        %v3935 = vsub.f32 %v3448, %v3885
        %v3936 = vsub.f32 %v3453, %v3890
        %v3937 = vsub.f32 %v3458, %v3895
        %v3938 = vsub.f32 %v3463, %v3900
        %v3939 = vsub.f32 %v3468, %v3905
        %v3940 = vsub.f32 %v3473, %v3910
        %v3941 = vsub.f32 %v3478, %v3915
        %v3942 = vsub.f32 %v3483, %v3920
        %v3943 = vsub.f32 %v3488, %v3925
        %v3944 = vsub.f32 %v3493, %v3930
        %v3945 = vadd.f32 %v3854, 1e-05
        %v3946 = vadd.f32 %v3855, 1e-05
        %v3947 = vadd.f32 %v3856, 1e-05
        %v3948 = vadd.f32 %v3857, 1e-05
        %v3949 = vadd.f32 %v3858, 1e-05
        %v3950 = vadd.f32 %v3859, 1e-05
        %v3951 = vadd.f32 %v3860, 1e-05
        %v3952 = vadd.f32 %v3861, 1e-05
        %v3953 = vadd.f32 %v3862, 1e-05
        %v3954 = vadd.f32 %v3863, 1e-05
        %v3955 = vadd.f32 %v3864, 1e-05
        %v3956 = vadd.f32 %v3865, 1e-05
        %v3957 = vadd.f32 %v3866, 1e-05
        %v3958 = vrsqrt.pop %v3945
        %v3959 = vrsqrt.pop %v3946
        %v3960 = vrsqrt.pop %v3947
        %v3961 = vrsqrt.pop %v3948
        %v3962 = vrsqrt.pop %v3949
        %v3963 = vrsqrt.pop %v3950
        %v3964 = vrsqrt.pop %v3951
        %v3965 = vrsqrt.pop %v3952
        %v3966 = vrsqrt.pop %v3953
        %v3967 = vrsqrt.pop %v3954
        %v3968 = vrsqrt.pop %v3955
        %v3969 = vrsqrt.pop %v3956
        %v3970 = vrsqrt.pop %v3957
        %3972 = vset.pattern.permute.xlu0 1
        %3973 = vperm.xlu0 %3972, %v3958
        %v3974 = vpop.permute.xlu0 %3973
        %3977 = vset.pattern.permute.xlu0 1
        %3978 = vperm.xlu0 %3977, %v3959
        %v3979 = vpop.permute.xlu0 %3978
        %3982 = vset.pattern.permute.xlu0 1
        %3983 = vperm.xlu0 %3982, %v3960
        %v3984 = vpop.permute.xlu0 %3983
        %3987 = vset.pattern.permute.xlu0 1
        %3988 = vperm.xlu0 %3987, %v3961
        %v3989 = vpop.permute.xlu0 %3988
        %3992 = vset.pattern.permute.xlu0 1
        %3993 = vperm.xlu0 %3992, %v3962
        %v3994 = vpop.permute.xlu0 %3993
        %3997 = vset.pattern.permute.xlu0 1
        %3998 = vperm.xlu0 %3997, %v3963
        %v3999 = vpop.permute.xlu0 %3998
        %4002 = vset.pattern.permute.xlu0 1
        %4003 = vperm.xlu0 %4002, %v3964
        %v4004 = vpop.permute.xlu0 %4003
        %4007 = vset.pattern.permute.xlu0 1
        %4008 = vperm.xlu0 %4007, %v3965
        %v4009 = vpop.permute.xlu0 %4008
        %4012 = vset.pattern.permute.xlu0 1
        %4013 = vperm.xlu0 %4012, %v3966
        %v4014 = vpop.permute.xlu0 %4013
        %4017 = vset.pattern.permute.xlu0 1
        %4018 = vperm.xlu0 %4017, %v3967
        %v4019 = vpop.permute.xlu0 %4018
        %4022 = vset.pattern.permute.xlu0 1
        %4023 = vperm.xlu0 %4022, %v3968
        %v4024 = vpop.permute.xlu0 %4023
        %4027 = vset.pattern.permute.xlu0 1
        %4028 = vperm.xlu0 %4027, %v3969
        %v4029 = vpop.permute.xlu0 %4028
        %4032 = vset.pattern.permute.xlu0 1
        %4033 = vperm.xlu0 %4032, %v3970
        %v4034 = vpop.permute.xlu0 %4033
        %v4036 = vmul.f32 %v3932, %v3974
        %v4037 = vmul.f32 %v3933, %v3979
        %v4038 = vmul.f32 %v3934, %v3984
        %v4039 = vmul.f32 %v3935, %v3989
        %v4040 = vmul.f32 %v3936, %v3994
        %v4041 = vmul.f32 %v3937, %v3999
        %v4042 = vmul.f32 %v3938, %v4004
        %v4043 = vmul.f32 %v3939, %v4009
        %v4044 = vmul.f32 %v3940, %v4014
        %v4045 = vmul.f32 %v3941, %v4019
        %v4046 = vmul.f32 %v3942, %v4024
        %v4047 = vmul.f32 %v3943, %v4029
        %v4048 = vmul.f32 %v3944, %v4034
        %4049 = vset.pattern.permute.xlu0 1
        %4050 = vperm.xlu0 %4049, %v3248
        %v4051 = vpop.permute.xlu0 %4050
        %4053 = vset.pattern.permute.xlu0 1
        %4054 = vperm.xlu0 %4053, %v3249
        %v4055 = vpop.permute.xlu0 %4054
        %4057 = vset.pattern.permute.xlu0 1
        %4058 = vperm.xlu0 %4057, %v3250
        %v4059 = vpop.permute.xlu0 %4058
        %4061 = vset.pattern.permute.xlu0 1
        %4062 = vperm.xlu0 %4061, %v3251
        %v4063 = vpop.permute.xlu0 %4062
        %4065 = vset.pattern.permute.xlu0 1
        %4066 = vperm.xlu0 %4065, %v3252
        %v4067 = vpop.permute.xlu0 %4066
        %4069 = vset.pattern.permute.xlu0 1
        %4070 = vperm.xlu0 %4069, %v3253
        %v4071 = vpop.permute.xlu0 %4070
        %4073 = vset.pattern.permute.xlu0 1
        %4074 = vperm.xlu0 %4073, %v3254
        %v4075 = vpop.permute.xlu0 %4074
        %4077 = vset.pattern.permute.xlu0 1
        %4078 = vperm.xlu0 %4077, %v3255
        %v4079 = vpop.permute.xlu0 %4078
        %4081 = vset.pattern.permute.xlu0 1
        %4082 = vperm.xlu0 %4081, %v3256
        %v4083 = vpop.permute.xlu0 %4082
        %4085 = vset.pattern.permute.xlu0 1
        %4086 = vperm.xlu0 %4085, %v3257
        %v4087 = vpop.permute.xlu0 %4086
        %4089 = vset.pattern.permute.xlu0 1
        %4090 = vperm.xlu0 %4089, %v3258
        %v4091 = vpop.permute.xlu0 %4090
        %4093 = vset.pattern.permute.xlu0 1
        %4094 = vperm.xlu0 %4093, %v3259
        %v4095 = vpop.permute.xlu0 %4094
        %4097 = vset.pattern.permute.xlu0 1
        %4098 = vperm.xlu0 %4097, %v3260
        %v4099 = vpop.permute.xlu0 %4098
        %v4101 = vmul.f32 %v4036, %v4051
        %v4102 = vmul.f32 %v4037, %v4055
        %v4103 = vmul.f32 %v4038, %v4059
        %v4104 = vmul.f32 %v4039, %v4063
        %v4105 = vmul.f32 %v4040, %v4067
        %v4106 = vmul.f32 %v4041, %v4071
        %v4107 = vmul.f32 %v4042, %v4075
        %v4108 = vmul.f32 %v4043, %v4079
        %v4109 = vmul.f32 %v4044, %v4083
        %v4110 = vmul.f32 %v4045, %v4087
        %v4111 = vmul.f32 %v4046, %v4091
        %v4112 = vmul.f32 %v4047, %v4095
        %v4113 = vmul.f32 %v4048, %v4099
        %4114 = vset.pattern.permute.xlu0 2
        %4115 = vperm.xlu0 %4114, %v3248
        %v4116 = vpop.permute.xlu0 %4115
        %4118 = vset.pattern.permute.xlu0 2
        %4119 = vperm.xlu0 %4118, %v3249
        %v4120 = vpop.permute.xlu0 %4119
        %4122 = vset.pattern.permute.xlu0 2
        %4123 = vperm.xlu0 %4122, %v3250
        %v4124 = vpop.permute.xlu0 %4123
        %4126 = vset.pattern.permute.xlu0 2
        %4127 = vperm.xlu0 %4126, %v3251
        %v4128 = vpop.permute.xlu0 %4127
        %4130 = vset.pattern.permute.xlu0 2
        %4131 = vperm.xlu0 %4130, %v3252
        %v4132 = vpop.permute.xlu0 %4131
        %4134 = vset.pattern.permute.xlu0 2
        %4135 = vperm.xlu0 %4134, %v3253
        %v4136 = vpop.permute.xlu0 %4135
        %4138 = vset.pattern.permute.xlu0 2
        %4139 = vperm.xlu0 %4138, %v3254
        %v4140 = vpop.permute.xlu0 %4139
        %4142 = vset.pattern.permute.xlu0 2
        %4143 = vperm.xlu0 %4142, %v3255
        %v4144 = vpop.permute.xlu0 %4143
        %4146 = vset.pattern.permute.xlu0 2
        %4147 = vperm.xlu0 %4146, %v3256
        %v4148 = vpop.permute.xlu0 %4147
        %4150 = vset.pattern.permute.xlu0 2
        %4151 = vperm.xlu0 %4150, %v3257
        %v4152 = vpop.permute.xlu0 %4151
        %4154 = vset.pattern.permute.xlu0 2
        %4155 = vperm.xlu0 %4154, %v3258
        %v4156 = vpop.permute.xlu0 %4155
        %4158 = vset.pattern.permute.xlu0 2
        %4159 = vperm.xlu0 %4158, %v3259
        %v4160 = vpop.permute.xlu0 %4159
        %4162 = vset.pattern.permute.xlu0 2
        %4163 = vperm.xlu0 %4162, %v3260
        %v4164 = vpop.permute.xlu0 %4163
        %v4166 = vadd.f32 %v4101, %v4116
        %v4167 = vadd.f32 %v4102, %v4120
        %v4168 = vadd.f32 %v4103, %v4124
        %v4169 = vadd.f32 %v4104, %v4128
        %v4170 = vadd.f32 %v4105, %v4132
        %v4171 = vadd.f32 %v4106, %v4136
        %v4172 = vadd.f32 %v4107, %v4140
        %v4173 = vadd.f32 %v4108, %v4144
        %v4174 = vadd.f32 %v4109, %v4148
        %v4175 = vadd.f32 %v4110, %v4152
        %v4176 = vadd.f32 %v4111, %v4156
        %v4177 = vadd.f32 %v4112, %v4160
        %v4178 = vadd.f32 %v4113, %v4164
        %v4179 = vmax.f32 %v4166, 0.0
        %v4180 = vmax.f32 %v4167, 0.0
        %v4181 = vmax.f32 %v4168, 0.0
        %v4182 = vmax.f32 %v4169, 0.0
        %v4183 = vmax.f32 %v4170, 0.0
        %v4184 = vmax.f32 %v4171, 0.0
        %v4185 = vmax.f32 %v4172, 0.0
        %v4186 = vmax.f32 %v4173, 0.0
        %v4187 = vmax.f32 %v4174, 0.0
        %v4188 = vmax.f32 %v4175, 0.0
        %v4189 = vmax.f32 %v4176, 0.0
        %v4190 = vmax.f32 %v4177, 0.0
        %v4191 = vmax.f32 %v4178, 0.0
        %v4193 = vsel %vm3509, %v4179, 0
        %v4196 = vsel %vm3509, %v4180, 0
        %v4199 = vsel %vm3509, %v4181, 0
        %v4202 = vsel %vm3509, %v4182, 0
        %v4205 = vsel %vm3509, %v4183, 0
        %v4208 = vsel %vm3509, %v4184, 0
        %v4211 = vsel %vm3509, %v4185, 0
        %v4214 = vsel %vm3509, %v4186, 0
        %v4217 = vsel %vm3509, %v4187, 0
        %v4220 = vsel %vm3509, %v4188, 0
        %v4223 = vsel %vm3509, %v4189, 0
        %v4226 = vsel %vm3509, %v4190, 0
        %v4229 = vsel %vm3509, %v4191, 0
        %4231 = vmatprep.subr.mxu0 0.0
        %4232 = vmatpush1.msra.mxu0 0.015625
        %4233 = vmatprep.subr.mxu0 0.0
        %4234 = vmatpush1.msra.mxu0 0.015625
        %4235 = vmatprep.subr.mxu0 0.0
        %4236 = vmatpush1.msra.mxu0 0.015625
        %4237 = vmatprep.subr.mxu0 0.0
        %4238 = vmatpush1.msra.mxu0 0.015625
        %4239 = vmatprep.subr.mxu0 0.0
        %4240 = vmatpush1.msra.mxu0 0.015625
        %4241 = vmatprep.subr.mxu0 0.0
        %4242 = vmatpush1.msra.mxu0 0.015625
        %4243 = vmatprep.subr.mxu0 0.0
        %4244 = vmatpush1.msra.mxu0 0.015625
        %4245 = vmatprep.subr.mxu0 0.0
        %4246 = vmatpush1.msra.mxu0 0.015625
        %4247 = vmatprep.subr.mxu0 0.0
        %4248 = vmatpush1.msra.mxu0 0.0
        %4249 = vmatprep.subr.mxu0 0.0
        %4250 = vmatpush1.msra.mxu0 0.0
        %4251 = vmatprep.subr.mxu0 0.0
        %4252 = vmatpush1.msra.mxu0 0.0
        %4253 = vmatprep.subr.mxu0 0.0
        %4254 = vmatpush1.msra.mxu0 0.0
        %4255 = vmatprep.subr.mxu0 0.0
        %4256 = vmatpush1.msra.mxu0 0.0
        %4257 = vmatprep.subr.mxu0 0.0
        %4258 = vmatpush1.msra.mxu0 0.0
        %4259 = vmatprep.subr.mxu0 0.0
        %4260 = vmatpush1.msra.mxu0 0.0
        %4261 = vmatprep.subr.mxu0 0.0
        %4262 = vmatpush1.msra.mxu0 0.0
        %4263 = vmatprep.subr.mxu0 0.0
        %4264 = vmatpush1.msra.mxu0 0.0
        %4265 = vmatprep.subr.mxu0 0.0
        %4266 = vmatpush1.msra.mxu0 0.0
        %4267 = vmatprep.subr.mxu0 0.0
        %4268 = vmatpush1.msra.mxu0 0.0
        %4269 = vmatprep.subr.mxu0 0.0
        %4270 = vmatpush1.msra.mxu0 0.0
        %4271 = vmatprep.subr.mxu0 0.0
        %4272 = vmatpush1.msra.mxu0 0.0
        %4273 = vmatprep.subr.mxu0 0.0
        %4274 = vmatpush1.msra.mxu0 0.0
        %4275 = vmatprep.subr.mxu0 0.0
        %4276 = vmatpush1.msra.mxu0 0.0
        %4277 = vmatprep.subr.mxu0 0.0
        %4278 = vmatpush1.msra.mxu0 0.0
        %4279 = vmatprep.subr.mxu0 0.0
        %4280 = vmatpush1.msra.mxu0 0.0
        %4281 = vmatprep.subr.mxu0 0.0
        %4282 = vmatpush1.msra.mxu0 0.0
        %4283 = vmatprep.subr.mxu0 0.0
        %4284 = vmatpush1.msra.mxu0 0.0
        %4285 = vmatprep.subr.mxu0 0.0
        %4286 = vmatpush1.msra.mxu0 0.0
        %4287 = vmatprep.subr.mxu0 0.0
        %4288 = vmatpush1.msra.mxu0 0.0
        %4289 = vmatprep.subr.mxu0 0.0
        %4290 = vmatpush1.msra.mxu0 0.0
        %4291 = vmatprep.subr.mxu0 0.0
        %4292 = vmatpush1.msra.mxu0 0.0
        %4293 = vmatprep.subr.mxu0 0.0
        %4294 = vmatpush1.msra.mxu0 0.0
        %4295 = vmatprep.mubr.f32.mxu0 0.0
        %4296 = vmatmul.mubr.f32.gmra.mrb[0].mxu0 %v4193
        %v4297 = vpop.f32.mrb[0].mxu0
        %v4298 = vadd.f32 0.0, %v4297
        %v4299 = vpop.f32.mrb[0].mxu0
        %4300 = vmatprep.mubr.f32.mxu0 0.0
        %4301 = vmatmul.mubr.f32.gmra.mrb[0].mxu0 %v4196
        %v4302 = vpop.f32.mrb[0].mxu0
        %v4303 = vadd.f32 0.0, %v4302
        %v4304 = vpop.f32.mrb[0].mxu0
        %4305 = vmatprep.mubr.f32.mxu0 0.0
        %4306 = vmatmul.mubr.f32.gmra.mrb[0].mxu0 %v4199
        %v4307 = vpop.f32.mrb[0].mxu0
        %v4308 = vadd.f32 0.0, %v4307
        %v4309 = vpop.f32.mrb[0].mxu0
        %4310 = vmatprep.mubr.f32.mxu0 0.0
        %4311 = vmatmul.mubr.f32.gmra.mrb[0].mxu0 %v4202
        %v4312 = vpop.f32.mrb[0].mxu0
        %v4313 = vadd.f32 0.0, %v4312
        %v4314 = vpop.f32.mrb[0].mxu0
        %4315 = vmatprep.mubr.f32.mxu0 0.0
        %4316 = vmatmul.mubr.f32.gmra.mrb[0].mxu0 %v4205
        %v4317 = vpop.f32.mrb[0].mxu0
        %v4318 = vadd.f32 0.0, %v4317
        %v4319 = vpop.f32.mrb[0].mxu0
        %4320 = vmatprep.mubr.f32.mxu0 0.0
        %4321 = vmatmul.mubr.f32.gmra.mrb[0].mxu0 %v4208
        %v4322 = vpop.f32.mrb[0].mxu0
        %v4323 = vadd.f32 0.0, %v4322
        %v4324 = vpop.f32.mrb[0].mxu0
        %4325 = vmatprep.mubr.f32.mxu0 0.0
        %4326 = vmatmul.mubr.f32.gmra.mrb[0].mxu0 %v4211
        %v4327 = vpop.f32.mrb[0].mxu0
        %v4328 = vadd.f32 0.0, %v4327
        %v4329 = vpop.f32.mrb[0].mxu0
        %4330 = vmatprep.mubr.f32.mxu0 0.0
        %4331 = vmatmul.mubr.f32.gmra.mrb[0].mxu0 %v4214
        %v4332 = vpop.f32.mrb[0].mxu0
        %v4333 = vadd.f32 0.0, %v4332
        %v4334 = vpop.f32.mrb[0].mxu0
        %4335 = vmatprep.mubr.f32.mxu0 0.0
        %4336 = vmatmul.mubr.f32.gmra.mrb[0].mxu0 %v4217
        %v4337 = vpop.f32.mrb[0].mxu0
        %v4338 = vadd.f32 0.0, %v4337
        %v4339 = vpop.f32.mrb[0].mxu0
        %4340 = vmatprep.mubr.f32.mxu0 0.0
        %4341 = vmatmul.mubr.f32.gmra.mrb[0].mxu0 %v4220
        %v4342 = vpop.f32.mrb[0].mxu0
        %v4343 = vadd.f32 0.0, %v4342
        %v4344 = vpop.f32.mrb[0].mxu0
        %4345 = vmatprep.mubr.f32.mxu0 0.0
        %4346 = vmatmul.mubr.f32.gmra.mrb[0].mxu0 %v4223
        %v4347 = vpop.f32.mrb[0].mxu0
        %v4348 = vadd.f32 0.0, %v4347
        %v4349 = vpop.f32.mrb[0].mxu0
        %4350 = vmatprep.mubr.f32.mxu0 0.0
        %4351 = vmatmul.mubr.f32.gmra.mrb[0].mxu0 %v4226
        %v4352 = vpop.f32.mrb[0].mxu0
        %v4353 = vadd.f32 0.0, %v4352
        %v4354 = vpop.f32.mrb[0].mxu0
        %4355 = vmatprep.mubr.f32.mxu0 0.0
        %4356 = vmatmul.mubr.f32.gmra.mrb[0].mxu0 %v4229
        %v4357 = vpop.f32.mrb[0].mxu0
        %v4358 = vadd.f32 0.0, %v4357
        %v4359 = vpop.f32.mrb[0].mxu0
        %4360 = vdwg.mxu0
        %4361 = vxpose.xlu0.b32.start [1/16] %v4298, 128
        %4362 = vxpose.xlu0.b32.cont [2/16] %v4303, 128
        %4363 = vxpose.xlu0.b32.cont [3/16] %v4308, 128
        %4364 = vxpose.xlu0.b32.cont [4/16] %v4313, 128
        %4365 = vxpose.xlu0.b32.cont [5/16] %v4318, 128
        %4366 = vxpose.xlu0.b32.cont [6/16] %v4323, 128
        %4367 = vxpose.xlu0.b32.cont [7/16] %v4328, 128
        %4368 = vxpose.xlu0.b32.cont [8/16] %v4333, 128
        %4369 = vxpose.xlu0.b32.cont [9/16] %v4338, 128
        %4370 = vxpose.xlu0.b32.cont [10/16] %v4343, 128
        %4371 = vxpose.xlu0.b32.cont [11/16] %v4348, 128
        %4372 = vxpose.xlu0.b32.cont [12/16] %v4353, 128
        %4373 = vxpose.xlu0.b32.cont [13/16] %v4358, 128
        %4374 = vxpose.xlu0.b32.cont [14/16] 0.0, 128
        %4375 = vxpose.xlu0.b32.cont [15/16] 0.0, 128
        %4376 = vxpose.xlu0.b32.end [16/16] 0.0, 128
        %v4377 = vpop.trf.xlu0
        %v4378 = vpop.trf.xlu0
        %v4379 = vpop.trf.xlu0
        %v4380 = vpop.trf.xlu0
        %v4381 = vpop.trf.xlu0
        %v4382 = vpop.trf.xlu0
        %v4383 = vpop.trf.xlu0
        %v4384 = vpop.trf.xlu0
        %v4385 = vpop.trf.xlu0
        %v4386 = vpop.trf.xlu0
        %v4387 = vpop.trf.xlu0
        %v4388 = vpop.trf.xlu0
        %v4389 = vpop.trf.xlu0
        %v4390 = vpop.trf.xlu0
        %v4391 = vpop.trf.xlu0
        %v4392 = vpop.trf.xlu0
        %v4393 = vld [vmem:[%s13] sm:$0xff]
        %v4394 = vld [vmem:[%s13 + $0x8] sm:$0xff]
        %v4395 = vld [vmem:[%s13 + $0x10] sm:$0xff]
        %v4396 = vld [vmem:[%s13 + $0x18] sm:$0xff]
        %v4397 = vld [vmem:[%s13 + $0x20] sm:$0xff]
        %v4398 = vld [vmem:[%s13 + $0x28] sm:$0xff]
        %v4399 = vld [vmem:[%s13 + $0x30] sm:$0xff]
        %v4400 = vld [vmem:[%s13 + $0x38] sm:$0xff]
        %v4401 = vld [vmem:[%s13 + $0x40] sm:$0xff]
        %v4402 = vld [vmem:[%s13 + $0x48] sm:$0xff]
        %v4403 = vld [vmem:[%s13 + $0x50] sm:$0xff]
        %v4404 = vld [vmem:[%s13 + $0x58] sm:$0xff]
        %v4405 = vld [vmem:[%s13 + $0x60] sm:$0xf]
        %v4406 = vld [vmem:[%s14] sm:$0x1]
        %v4408 = vsel %vm3615, %v4377, 0
        %v4411 = vsel %vm3655, %v4405, 0
        %4413 = vmatprep.subr.mxu0 0.0
        %4414 = vmatpush1.msra.mxu0 %v4393
        %4415 = vmatprep.subr.mxu0 0.0
        %4416 = vmatpush1.msra.mxu0 %v4394
        %4417 = vmatprep.subr.mxu0 0.0
        %4418 = vmatpush1.msra.mxu0 %v4395
        %4419 = vmatprep.subr.mxu0 0.0
        %4420 = vmatpush1.msra.mxu0 %v4396
        %4421 = vmatprep.subr.mxu0 0.0
        %4422 = vmatpush1.msra.mxu0 %v4397
        %4423 = vmatprep.subr.mxu0 0.0
        %4424 = vmatpush1.msra.mxu0 %v4398
        %4425 = vmatprep.subr.mxu0 0.0
        %4426 = vmatpush1.msra.mxu0 %v4399
        %4427 = vmatprep.subr.mxu0 0.0
        %4428 = vmatpush1.msra.mxu0 %v4400
        %4429 = vmatprep.subr.mxu0 0.0
        %4430 = vmatpush1.msra.mxu0 %v4401
        %4431 = vmatprep.subr.mxu0 0.0
        %4432 = vmatpush1.msra.mxu0 %v4402
        %4433 = vmatprep.subr.mxu0 0.0
        %4434 = vmatpush1.msra.mxu0 %v4403
        %4435 = vmatprep.subr.mxu0 0.0
        %4436 = vmatpush1.msra.mxu0 %v4404
        %4437 = vmatprep.subr.mxu0 0.0
        %4438 = vmatpush1.msra.mxu0 %v4411
        %4439 = vmatprep.subr.mxu0 0.0
        %4440 = vmatpush1.msra.mxu0 0.0
        %4441 = vmatprep.subr.mxu0 0.0
        %4442 = vmatpush1.msra.mxu0 0.0
        %4443 = vmatprep.subr.mxu0 0.0
        %4444 = vmatpush1.msra.mxu0 0.0
        %4445 = vmatprep.subr.mxu0 0.0
        %4446 = vmatpush1.msra.mxu0 0.0
        %4447 = vmatprep.subr.mxu0 0.0
        %4448 = vmatpush1.msra.mxu0 0.0
        %4449 = vmatprep.subr.mxu0 0.0
        %4450 = vmatpush1.msra.mxu0 0.0
        %4451 = vmatprep.subr.mxu0 0.0
        %4452 = vmatpush1.msra.mxu0 0.0
        %4453 = vmatprep.subr.mxu0 0.0
        %4454 = vmatpush1.msra.mxu0 0.0
        %4455 = vmatprep.subr.mxu0 0.0
        %4456 = vmatpush1.msra.mxu0 0.0
        %4457 = vmatprep.subr.mxu0 0.0
        %4458 = vmatpush1.msra.mxu0 0.0
        %4459 = vmatprep.subr.mxu0 0.0
        %4460 = vmatpush1.msra.mxu0 0.0
        %4461 = vmatprep.subr.mxu0 0.0
        %4462 = vmatpush1.msra.mxu0 0.0
        %4463 = vmatprep.subr.mxu0 0.0
        %4464 = vmatpush1.msra.mxu0 0.0
        %4465 = vmatprep.subr.mxu0 0.0
        %4466 = vmatpush1.msra.mxu0 0.0
        %4467 = vmatprep.subr.mxu0 0.0
        %4468 = vmatpush1.msra.mxu0 0.0
        %4469 = vmatprep.subr.mxu0 0.0
        %4470 = vmatpush1.msra.mxu0 0.0
        %4471 = vmatprep.subr.mxu0 0.0
        %4472 = vmatpush1.msra.mxu0 0.0
        %4473 = vmatprep.subr.mxu0 0.0
        %4474 = vmatpush1.msra.mxu0 0.0
        %4475 = vmatprep.subr.mxu0 0.0
        %4476 = vmatpush1.msra.mxu0 0.0
        %4477 = vmatprep.mubr.f32.mxu0 0.0
        %4478 = vmatmul.mubr.f32.gmra.mrb[0].mxu0 %v4408
        %v4479 = vpop.f32.mrb[0].mxu0
        %v4480 = vadd.f32 %v4406, %v4479
        %v4481 = vpop.f32.mrb[0].mxu0
        %4482 = vdwg.mxu0
        %v4483 = vld [vmem:[%s14 + $0x1] sm:$0x1]
        %v4484 = vld [vmem:[%s14 + $0x2] sm:$0x1]
        %vm4485 = vcmask 811008
        %v4486 = vsel %vm4485, %v4480, 0.0
        %4487 = vadd.xlane.f32.xlu0 %v4486
        %v4488 = vpop.xlane.xlu0 %4487
        %v4489 = vrcp.pop 100.0
        %v4490 = vmul.f32 %v4488, %v4489
        %v4491 = vsub.f32 %v4480, %v4490
        %v4492 = vmul.f32 %v4491, %v4491
        %v4493 = vsel %vm4485, %v4492, 0.0
        %4494 = vadd.xlane.f32.xlu0 %v4493
        %v4495 = vpop.xlane.xlu0 %4494
        %v4496 = vmul.f32 %v4495, %v4489
        %v4497 = vadd.f32 %v4496, 1e-05
        %v4498 = vrsqrt.pop %v4497
        %v4499 = vmul.f32 %v4491, %v4498
        %v4500 = vmul.f32 %v4499, %v4483
        %v4501 = vadd.f32 %v4500, %v4484
        %v4502 = vmul.f32 %v4501, 0.5
        %v4503 = vmul.f32 %v4501, 0.70710677
        %v4504 = verf.f32.pop %v4503
        %v4505 = vadd.f32 %v4504, 1.0
        %v4506 = vmul.f32 %v4502, %v4505
        %v4507 = vld [vmem:[%s14 + $0x3] sm:$0x1]
        %v4508 = vld [vmem:[%s14 + $0x4] sm:$0x1]
        %v4509 = vsel %vm4485, %v4506, 0.0
        %4510 = vadd.xlane.f32.xlu0 %v4509
        %v4511 = vpop.xlane.xlu0 %4510
        %v4512 = vmul.f32 %v4511, %v4489
        %v4513 = vsub.f32 %v4506, %v4512
        %v4514 = vmul.f32 %v4513, %v4513
        %v4515 = vsel %vm4485, %v4514, 0.0
        %4516 = vadd.xlane.f32.xlu0 %v4515
        %v4517 = vpop.xlane.xlu0 %4516
        %v4518 = vmul.f32 %v4517, %v4489
        %v4519 = vadd.f32 %v4518, 1e-05
        %v4520 = vrsqrt.pop %v4519
        %v4521 = vmul.f32 %v4513, %v4520
        %v4522 = vmul.f32 %v4521, %v4507
        %v4523 = vadd.f32 %v4522, %v4508
        %v4524 = vld [vmem:[%s15] sm:$0xff]
        %v4525 = vld [vmem:[%s15 + $0x8] sm:$0xff]
        %v4526 = vld [vmem:[%s15 + $0x10] sm:$0xff]
        %v4527 = vld [vmem:[%s15 + $0x18] sm:$0xff]
        %v4528 = vld [vmem:[%s15 + $0x20] sm:$0xff]
        %v4529 = vld [vmem:[%s15 + $0x28] sm:$0xff]
        %v4530 = vld [vmem:[%s15 + $0x30] sm:$0xff]
        %v4531 = vld [vmem:[%s15 + $0x38] sm:$0xff]
        %v4532 = vld [vmem:[%s15 + $0x40] sm:$0xff]
        %v4533 = vld [vmem:[%s15 + $0x48] sm:$0xff]
        %v4534 = vld [vmem:[%s15 + $0x50] sm:$0xff]
        %v4535 = vld [vmem:[%s15 + $0x58] sm:$0xff]
        %v4536 = vld [vmem:[%s15 + $0x60] sm:$0xff]
        %v4537 = vld [vmem:[%s15 + $0x68] sm:$0xff]
        %v4538 = vld [vmem:[%s15 + $0x70] sm:$0xff]
        %v4539 = vld [vmem:[%s15 + $0x78] sm:$0xff]
        %v4540 = vld [vmem:[%s15 + $0x80] sm:$0xff]
        %v4541 = vld [vmem:[%s15 + $0x88] sm:$0xff]
        %v4542 = vld [vmem:[%s15 + $0x90] sm:$0xff]
        %v4543 = vld [vmem:[%s15 + $0x98] sm:$0xff]
        %v4544 = vld [vmem:[%s15 + $0xa0] sm:$0xff]
        %v4545 = vld [vmem:[%s15 + $0xa8] sm:$0xff]
        %v4546 = vld [vmem:[%s15 + $0xb0] sm:$0xff]
        %v4547 = vld [vmem:[%s15 + $0xb8] sm:$0xff]
        %v4548 = vld [vmem:[%s15 + $0xc0] sm:$0xf]
        %v4549 = vld [vmem:[%s15 + $0xc8] sm:$0xf]
        %v4550 = vld [vmem:[%s17] ss:$2 sm:$0x3]
        %v4552 = vlaneseq
        %v4553 = vshrl.u32 %v4552, 7
        %v4554 = vsub.s32 0, %v4553
        %v4555 = vrot.slane %v4550, %v4554
        %v4556 = vlaneseq
        %v4557 = vshrl.u32 %v4556, 7
        %v4558 = vsub.s32 1, %v4557
        %v4559 = vrot.slane %v4550, %v4558
        %v4563 = vsel %vm3615, %v4523, 0
        %v4566 = vsel %vm3655, %v4548, 0
        %v4569 = vsel %vm3655, %v4549, 0
        %4571 = vmatprep.subr.mxu0 %v4525
        %4572 = vmatpush1.msra.mxu0 %v4524
        %4573 = vmatprep.subr.mxu0 %v4527
        %4574 = vmatpush1.msra.mxu0 %v4526
        %4575 = vmatprep.subr.mxu0 %v4529
        %4576 = vmatpush1.msra.mxu0 %v4528
        %4577 = vmatprep.subr.mxu0 %v4531
        %4578 = vmatpush1.msra.mxu0 %v4530
        %4579 = vmatprep.subr.mxu0 %v4533
        %4580 = vmatpush1.msra.mxu0 %v4532
        %4581 = vmatprep.subr.mxu0 %v4535
        %4582 = vmatpush1.msra.mxu0 %v4534
        %4583 = vmatprep.subr.mxu0 %v4537
        %4584 = vmatpush1.msra.mxu0 %v4536
        %4585 = vmatprep.subr.mxu0 %v4539
        %4586 = vmatpush1.msra.mxu0 %v4538
        %4587 = vmatprep.subr.mxu0 %v4541
        %4588 = vmatpush1.msra.mxu0 %v4540
        %4589 = vmatprep.subr.mxu0 %v4543
        %4590 = vmatpush1.msra.mxu0 %v4542
        %4591 = vmatprep.subr.mxu0 %v4545
        %4592 = vmatpush1.msra.mxu0 %v4544
        %4593 = vmatprep.subr.mxu0 %v4547
        %4594 = vmatpush1.msra.mxu0 %v4546
        %4595 = vmatprep.subr.mxu0 %v4569
        %4596 = vmatpush1.msra.mxu0 %v4566
        %4597 = vmatprep.subr.mxu0 0.0
        %4598 = vmatpush1.msra.mxu0 0.0
        %4599 = vmatprep.subr.mxu0 0.0
        %4600 = vmatpush1.msra.mxu0 0.0
        %4601 = vmatprep.subr.mxu0 0.0
        %4602 = vmatpush1.msra.mxu0 0.0
        %4603 = vmatprep.subr.mxu0 0.0
        %4604 = vmatpush1.msra.mxu0 0.0
        %4605 = vmatprep.subr.mxu0 0.0
        %4606 = vmatpush1.msra.mxu0 0.0
        %4607 = vmatprep.subr.mxu0 0.0
        %4608 = vmatpush1.msra.mxu0 0.0
        %4609 = vmatprep.subr.mxu0 0.0
        %4610 = vmatpush1.msra.mxu0 0.0
        %4611 = vmatprep.subr.mxu0 0.0
        %4612 = vmatpush1.msra.mxu0 0.0
        %4613 = vmatprep.subr.mxu0 0.0
        %4614 = vmatpush1.msra.mxu0 0.0
        %4615 = vmatprep.subr.mxu0 0.0
        %4616 = vmatpush1.msra.mxu0 0.0
        %4617 = vmatprep.subr.mxu0 0.0
        %4618 = vmatpush1.msra.mxu0 0.0
        %4619 = vmatprep.subr.mxu0 0.0
        %4620 = vmatpush1.msra.mxu0 0.0
        %4621 = vmatprep.subr.mxu0 0.0
        %4622 = vmatpush1.msra.mxu0 0.0
        %4623 = vmatprep.subr.mxu0 0.0
        %4624 = vmatpush1.msra.mxu0 0.0
        %4625 = vmatprep.subr.mxu0 0.0
        %4626 = vmatpush1.msra.mxu0 0.0
        %4627 = vmatprep.subr.mxu0 0.0
        %4628 = vmatpush1.msra.mxu0 0.0
        %4629 = vmatprep.subr.mxu0 0.0
        %4630 = vmatpush1.msra.mxu0 0.0
        %4631 = vmatprep.subr.mxu0 0.0
        %4632 = vmatpush1.msra.mxu0 0.0
        %4633 = vmatprep.subr.mxu0 0.0
        %4634 = vmatpush1.msra.mxu0 0.0
        %4635 = vmatprep.mubr.f32.mxu0 0.0
        %4636 = vmatmul.mubr.f32.gmra.mrb[0].mxu0 %v4563
        %v4637 = vpop.f32.mrb[0].mxu0
        %v4638 = vadd.f32 %v4555, %v4637
        %v4639 = vpop.f32.mrb[0].mxu0
        %v4640 = vadd.f32 %v4559, %v4639
        %4641 = vdwg.mxu0
        %v4642 = vmul.f32 %v4638, 0.5
        %v4643 = vmul.f32 %v4640, 0.5
        %v4644 = vmul.f32 %v4638, 0.70710677
        %v4645 = vmul.f32 %v4640, 0.70710677
        %v4646 = verf.f32.pop %v4644
        %v4647 = verf.f32.pop %v4645
        %v4648 = vadd.f32 %v4646, 1.0
        %v4649 = vadd.f32 %v4647, 1.0
        %v4650 = vmul.f32 %v4642, %v4648
        %v4651 = vmul.f32 %v4643, %v4649
        %v4652 = vld [vmem:[%s16] sm:$0xff]
        %v4653 = vld [vmem:[%s16 + $0x8] sm:$0xff]
        %v4654 = vld [vmem:[%s16 + $0x10] sm:$0xff]
        %v4655 = vld [vmem:[%s16 + $0x18] sm:$0xff]
        %v4656 = vld [vmem:[%s16 + $0x20] sm:$0xff]
        %v4657 = vld [vmem:[%s16 + $0x28] sm:$0xff]
        %v4658 = vld [vmem:[%s16 + $0x30] sm:$0xff]
        %v4659 = vld [vmem:[%s16 + $0x38] sm:$0xff]
        %v4660 = vld [vmem:[%s16 + $0x40] sm:$0xff]
        %v4661 = vld [vmem:[%s16 + $0x48] sm:$0xff]
        %v4662 = vld [vmem:[%s16 + $0x50] sm:$0xff]
        %v4663 = vld [vmem:[%s16 + $0x58] sm:$0xff]
        %v4664 = vld [vmem:[%s16 + $0x60] sm:$0xff]
        %v4665 = vld [vmem:[%s16 + $0x68] sm:$0xff]
        %v4666 = vld [vmem:[%s16 + $0x70] sm:$0xff]
        %v4667 = vld [vmem:[%s16 + $0x78] sm:$0xff]
        %v4668 = vld [vmem:[%s16 + $0x80] sm:$0xff]
        %v4669 = vld [vmem:[%s16 + $0x88] sm:$0xff]
        %v4670 = vld [vmem:[%s16 + $0x90] sm:$0xff]
        %v4671 = vld [vmem:[%s16 + $0x98] sm:$0xff]
        %v4672 = vld [vmem:[%s16 + $0xa0] sm:$0xff]
        %v4673 = vld [vmem:[%s16 + $0xa8] sm:$0xff]
        %v4674 = vld [vmem:[%s16 + $0xb0] sm:$0xff]
        %v4675 = vld [vmem:[%s16 + $0xb8] sm:$0xff]
        %v4676 = vld [vmem:[%s16 + $0xc0] sm:$0xff]
        %v4677 = vld [vmem:[%s16 + $0xc8] sm:$0xff]
        %v4678 = vld [vmem:[%s16 + $0xd0] sm:$0xff]
        %v4679 = vld [vmem:[%s16 + $0xd8] sm:$0xff]
        %v4680 = vld [vmem:[%s16 + $0xe0] sm:$0xff]
        %v4681 = vld [vmem:[%s16 + $0xe8] sm:$0xff]
        %v4682 = vld [vmem:[%s16 + $0xf0] sm:$0xff]
        %v4683 = vld [vmem:[%s16 + $0xf8] sm:$0xff]
        %v4684 = vld [vmem:[%s16 + $0x100] sm:$0xff]
        %v4685 = vld [vmem:[%s16 + $0x108] sm:$0xff]
        %v4686 = vld [vmem:[%s16 + $0x110] sm:$0xff]
        %v4687 = vld [vmem:[%s16 + $0x118] sm:$0xff]
        %v4688 = vld [vmem:[%s16 + $0x120] sm:$0xff]
        %v4689 = vld [vmem:[%s16 + $0x128] sm:$0xff]
        %v4690 = vld [vmem:[%s16 + $0x130] sm:$0xff]
        %v4691 = vld [vmem:[%s16 + $0x138] sm:$0xff]
        %v4692 = vld [vmem:[%s16 + $0x140] sm:$0xff]
        %v4693 = vld [vmem:[%s16 + $0x148] sm:$0xff]
        %v4694 = vld [vmem:[%s16 + $0x150] sm:$0xff]
        %v4695 = vld [vmem:[%s16 + $0x158] sm:$0xff]
        %v4696 = vld [vmem:[%s16 + $0x160] sm:$0xff]
        %v4697 = vld [vmem:[%s16 + $0x168] sm:$0xff]
        %v4698 = vld [vmem:[%s16 + $0x170] sm:$0xff]
        %v4699 = vld [vmem:[%s16 + $0x178] sm:$0xff]
        %v4700 = vld [vmem:[%s16 + $0x180] sm:$0xff]
        %v4701 = vld [vmem:[%s16 + $0x188] sm:$0xff]
        %v4702 = vld [vmem:[%s16 + $0x190] sm:$0xff]
        %v4703 = vld [vmem:[%s16 + $0x198] sm:$0xff]
        %v4704 = vld [vmem:[%s16 + $0x1a0] sm:$0xff]
        %v4705 = vld [vmem:[%s16 + $0x1a8] sm:$0xff]
        %v4706 = vld [vmem:[%s16 + $0x1b0] sm:$0xff]
        %v4707 = vld [vmem:[%s16 + $0x1b8] sm:$0xff]
        %v4708 = vld [vmem:[%s16 + $0x1c0] sm:$0xff]
        %v4709 = vld [vmem:[%s16 + $0x1c8] sm:$0xff]
        %v4710 = vld [vmem:[%s16 + $0x1d0] sm:$0xff]
        %v4711 = vld [vmem:[%s16 + $0x1d8] sm:$0xff]
        %v4712 = vld [vmem:[%s16 + $0x1e0] sm:$0xff]
        %v4713 = vld [vmem:[%s16 + $0x1e8] sm:$0xff]
        %v4714 = vld [vmem:[%s16 + $0x1f0] sm:$0xff]
        %v4715 = vld [vmem:[%s16 + $0x1f8] sm:$0xff]
        %s4716 = scalar_lea.vmem %s17, 1
        %v4717 = vld [vmem:[%s4716] ss:$2 sm:$0x3]
        %v4719 = vlaneseq
        %v4720 = vshrl.u32 %v4719, 7
        %v4721 = vsub.s32 0, %v4720
        %v4722 = vrot.slane %v4717, %v4721
        %v4723 = vlaneseq
        %v4724 = vshrl.u32 %v4723, 7
        %v4725 = vsub.s32 1, %v4724
        %v4726 = vrot.slane %v4717, %v4725
        %4729 = vmatprep.subr.mxu0 %v4653
        %4730 = vmatpush1.msra.mxu0 %v4652
        %4731 = vmatprep.subr.mxu0 %v4655
        %4732 = vmatpush1.msra.mxu0 %v4654
        %4733 = vmatprep.subr.mxu0 %v4657
        %4734 = vmatpush1.msra.mxu0 %v4656
        %4735 = vmatprep.subr.mxu0 %v4659
        %4736 = vmatpush1.msra.mxu0 %v4658
        %4737 = vmatprep.subr.mxu0 %v4661
        %4738 = vmatpush1.msra.mxu0 %v4660
        %4739 = vmatprep.subr.mxu0 %v4663
        %4740 = vmatpush1.msra.mxu0 %v4662
        %4741 = vmatprep.subr.mxu0 %v4665
        %4742 = vmatpush1.msra.mxu0 %v4664
        %4743 = vmatprep.subr.mxu0 %v4667
        %4744 = vmatpush1.msra.mxu0 %v4666
        %4745 = vmatprep.subr.mxu0 %v4669
        %4746 = vmatpush1.msra.mxu0 %v4668
        %4747 = vmatprep.subr.mxu0 %v4671
        %4748 = vmatpush1.msra.mxu0 %v4670
        %4749 = vmatprep.subr.mxu0 %v4673
        %4750 = vmatpush1.msra.mxu0 %v4672
        %4751 = vmatprep.subr.mxu0 %v4675
        %4752 = vmatpush1.msra.mxu0 %v4674
        %4753 = vmatprep.subr.mxu0 %v4677
        %4754 = vmatpush1.msra.mxu0 %v4676
        %4755 = vmatprep.subr.mxu0 %v4679
        %4756 = vmatpush1.msra.mxu0 %v4678
        %4757 = vmatprep.subr.mxu0 %v4681
        %4758 = vmatpush1.msra.mxu0 %v4680
        %4759 = vmatprep.subr.mxu0 %v4683
        %4760 = vmatpush1.msra.mxu0 %v4682
        %4761 = vmatprep.subr.mxu0 %v4685
        %4762 = vmatpush1.msra.mxu0 %v4684
        %4763 = vmatprep.subr.mxu0 %v4687
        %4764 = vmatpush1.msra.mxu0 %v4686
        %4765 = vmatprep.subr.mxu0 %v4689
        %4766 = vmatpush1.msra.mxu0 %v4688
        %4767 = vmatprep.subr.mxu0 %v4691
        %4768 = vmatpush1.msra.mxu0 %v4690
        %4769 = vmatprep.subr.mxu0 %v4693
        %4770 = vmatpush1.msra.mxu0 %v4692
        %4771 = vmatprep.subr.mxu0 %v4695
        %4772 = vmatpush1.msra.mxu0 %v4694
        %4773 = vmatprep.subr.mxu0 %v4697
        %4774 = vmatpush1.msra.mxu0 %v4696
        %4775 = vmatprep.subr.mxu0 %v4699
        %4776 = vmatpush1.msra.mxu0 %v4698
        %4777 = vmatprep.subr.mxu0 %v4701
        %4778 = vmatpush1.msra.mxu0 %v4700
        %4779 = vmatprep.subr.mxu0 %v4703
        %4780 = vmatpush1.msra.mxu0 %v4702
        %4781 = vmatprep.subr.mxu0 %v4705
        %4782 = vmatpush1.msra.mxu0 %v4704
        %4783 = vmatprep.subr.mxu0 %v4707
        %4784 = vmatpush1.msra.mxu0 %v4706
        %4785 = vmatprep.subr.mxu0 %v4709
        %4786 = vmatpush1.msra.mxu0 %v4708
        %4787 = vmatprep.subr.mxu0 %v4711
        %4788 = vmatpush1.msra.mxu0 %v4710
        %4789 = vmatprep.subr.mxu0 %v4713
        %4790 = vmatpush1.msra.mxu0 %v4712
        %4791 = vmatprep.subr.mxu0 %v4715
        %4792 = vmatpush1.msra.mxu0 %v4714
        %4793 = vmatprep.mubr.f32.mxu0 %v4651
        %4794 = vmatmul.mubr.f32.gmra.mrb[0].mxu0 %v4650
        %v4795 = vpop.f32.mrb[0].mxu0
        %v4796 = vadd.f32 %v4722, %v4795
        %v4797 = vpop.f32.mrb[0].mxu0
        %v4798 = vadd.f32 %v4726, %v4797
        %4799 = vdwg.mxu0
        %4800 = vst.msk [vmem:[%s593] sm:$0x1] %vm4485, %v4506
        %v4803 = vcombine.low %v4796, %v4798
        %v4805 = vunpack.c.l.s4 1966171168
        %v4806 = vunpack.c.0.s8 %v4805
        %v4807 = vlaneseq
        %v4808 = vshrl.u32 %v4807, 7
        %v4809 = vsub.s32 %v4806, %v4808
        %v4810 = vrot.slane %v4803, %v4809
        %v4812 = vunpack.c.l.s4 1966171168
        %v4813 = vunpack.c.0.s8 %v4812
        %v4814 = vlaneseq
        %v4815 = vshrl.u32 %v4814, 7
        %v4816 = vsub.s32 %v4813, %v4815
        %v4817 = vrot.slane %v4810, %v4816
        %vm4819 = vcmp.lt.s32.totalorder %v661, 180
        %vm4820 = vmand %vm662, %vm4819
        %4821 = vst.msk [vmem:[%s607] sm:$0x3] %vm4820, %v4817
        %s4822 = sand.u32 %s425, 1
        %s4823 = scalar_lea.sflag [#allocation6], %s4822
        %s4824 = sand.u32 %s425, 1
        %s4825 = scalar_lea.vmem [#allocation5], %s4824
        %p4826 = scmp.lt.s32.totalorder %s34, 1
        %s4827 = scalar_select %p4826, %s34, 1
        %s4828 = smul.addr %s4827, 2
        %s4829 = scalar_lea.vmem %s19, %s4828
        // Predicated region
        $region93: #{forward.1} parent=91 // pred_check
          %p4830 = pneg %p435
        $region94: #{forward.1} parent=91 // pred_check_branch
          %4832 = sbr.rel (%p4830) target = $region96
        $region95: #{forward.1} parent=91 // pred_region
          %s4834 = ssub.s32 16, 16
          %4835 = vsyncadd %s4823, %s4834
          %s4836 = smul.addr %s34, 16
          %s4837 = scalar_lea.hbm %s18, %s4836
          %s4839 = sshll.u32 %s4825, 4
          %s4840 = int_to_ptr.vmem [resolvable:$true] %s4839
          %4842 = dma.vmem_to_hbm [thread:$0]  %s4840, 16, %s4837, %s4823
        $region96: #{forward.1} parent=91 // pred_fallthru
          _
        // Predicated region
        $region97: #{forward.1} parent=91 // pred_check
          %p4843 = pneg %p461
        $region98: #{forward.1} parent=91 // pred_check_branch
          %4845 = sbr.rel (%p4843) target = $region100
        $region99: #{forward.1} parent=91 // pred_region
          _
        $region100: #{forward.1} parent=91 // pred_fallthru
          _
      $region92: #{forward.1} parent=5 // pred_fallthru
        _
      %p4846 = scmp.le.s32.totalorder 2, %s29
      // Predicated region
      $region101: #{forward.1} parent=5 // pred_check
        %p4847 = pneg %p4846
      $region102: #{forward.1} parent=5 // pred_check_branch
        %4849 = sbr.rel (%p4847) target = $region104
      $region103: #{forward.1} parent=5 // pred_region
        %s4850 = ssub.s32 %s29, 2
        // Predicated region
        $region105: #{forward.1} parent=103 // pred_check
          %p4851 = pneg %p441
        $region106: #{forward.1} parent=103 // pred_check_branch
          %4853 = sbr.rel (%p4851) target = $region108
        $region107: #{forward.1} parent=103 // pred_region
          %s4854 = sand.u32 %s426, 1
          %s4855 = scalar_lea.sflag [#allocation6], %s4854
          %s4856 = sand.u32 %s426, 1
          %s4857 = scalar_lea.vmem [#allocation5], %s4856
          %4858 = dma.done %s4855, 16
        $region108: #{forward.1} parent=103 // pred_fallthru
          _
        // Predicated region
        $region109: #{forward.1} parent=103 // pred_check
          %p4859 = pneg %p467
        $region110: #{forward.1} parent=103 // pred_check_branch
          %4861 = sbr.rel (%p4859) target = $region112
        $region111: #{forward.1} parent=103 // pred_region
          %p4862 = scmp.lt.s32.totalorder %s35, 1
          %s4863 = scalar_select %p4862, %s35, 1
          %s4864 = smul.addr %s4863, 2
          %s4865 = scalar_lea.vmem %s19, %s4864
        $region112: #{forward.1} parent=103 // pred_fallthru
          _
      $region104: #{forward.1} parent=5 // pred_fallthru
        _
    $region6: #{forward.1} parent=1 // loop_footer
      %s33 = sadd.s32 1, %s29
    $region7: #{forward.1} parent=1 // loop_footer_branch
      %28 = sbr.rel target = $region3
    $region8: #{forward.1} parent=1 // loop_exit
      _
    %4866 = vsyncpa [#allocation6], 1
    %s4867 = scalar_lea.sflag [#allocation6], 1
    %4868 = vsyncpa %s4867, 1

</llo_original>
